<compile_context>
chip_gen: v6e
topology: v6e:2x2x1
jax: 0.10.0
libtpu: 0.0.40
codegen_flags: <defaults>
</compile_context>

<pallas_src>
import jax
import jax.numpy as jnp
import numpy as np
from jax.experimental import pallas as pl
from jax.experimental.pallas import tpu as pltpu

MM_DTYPE = jnp.bfloat16          # MXU operand dtype (f32 accumulation everywhere)


# ----------------------------------------------------------------------------
# In-kernel helpers
# ----------------------------------------------------------------------------
def _elu(x):
    # F.elu with alpha=1
    return jnp.where(x > 0, x, jnp.exp(jnp.minimum(x, 0.0)) - 1.0)


def _pn(x):
    # concat_elu in [P | N] lane-block order (P = elu(x), N = elu(-x)).  The
    # weight matrices are built for this ordering, so the concat is a
    # vreg-aligned placement (128-lane pieces), not a per-pixel interleave.
    return jnp.concatenate([_elu(x), _elu(-x)], axis=-1)


def _shift_down(x):
    # out[0] = 0, out[h] = x[h-1]  (the kh=2 causal "top" zero padding)
    return jnp.concatenate([jnp.zeros((1, x.shape[1]), x.dtype), x[:-1, :]], axis=0)


def _causal_conv(ce, m_ref, i, b_ref):
    # ce: (H, 2*W*F) f32 concat_elu input; m_ref[i]: (2, 2*W*F, N) bf16 (one
    # matrix per vertical tap); b_ref[i]: (1, N) f32 bias row.
    y = jnp.dot(_shift_down(ce).astype(MM_DTYPE), m_ref[i, 0],
                preferred_element_type=jnp.float32)
    y = y + jnp.dot(ce.astype(MM_DTYPE), m_ref[i, 1],
                    preferred_element_type=jnp.float32)
    return y + b_ref[i]


def _gated_block(x, nin_lhs, ci_ref, nin_ref, co_ref, bi_ref, bn_ref, bo_ref, i, WF):
    # One gated_resnet block.  x: (H, W*F) f32; nin_lhs: (H, K_nin) f32.
    c1 = _causal_conv(_pn(x), ci_ref, i, bi_ref)                       # conv_input
    c1 = c1 + jnp.dot(nin_lhs.astype(MM_DTYPE), nin_ref[i],
                      preferred_element_type=jnp.float32) + bn_ref[i]  # nin_skip
    # TODO(synk): training-mode Dropout2d(0.5) and the conditional class-
    # embedding path (conditional=True / labels) are not implemented
    # (eval-mode forward only).
    c2 = _causal_conv(_pn(c1), co_ref, i, bo_ref)    # conv_out; cols = [gate_a | gate_b]
    return x + c2[:, :WF] * jax.nn.sigmoid(c2[:, WF:])


# ----------------------------------------------------------------------------
# Fused pallas_call for the whole PixelCNNLayer_down forward
# ----------------------------------------------------------------------------
def make_pixelcnn_down_call(B, H, W, F, nr):
    WF = W * F

    def kernel(u_ref, ul_ref, uls_ref, ulls_ref,
               u_ci, u_nin, u_co, u_bi, u_bn, u_bo,
               ul_ci, ul_nin, ul_co, ul_bi, ul_bn, ul_bo,
               u_out, ul_out):
        u = u_ref[0]            # (H, W*F)
        ul = ul_ref[0]
        for i in range(nr):     # static unroll over resnet blocks (nr is small)
            # u = u_stream[i](u, a=u_list.pop())
            a_u = uls_ref[i, 0]
            u = _gated_block(u, _pn(a_u), u_ci, u_nin, u_co, u_bi, u_bn, u_bo, i, WF)
            # ul = ul_stream[i](ul, a=cat((u, ul_list.pop()), channel))
            a_l = ulls_ref[i, 0]
            nin_lhs = jnp.concatenate(
                [_elu(u), _elu(a_l), _elu(-u), _elu(-a_l)], axis=-1)    # (H, 4*W*F)
            ul = _gated_block(ul, nin_lhs, ul_ci, ul_nin, ul_co,
                              ul_bi, ul_bn, ul_bo, i, WF)
        u_out[0] = u
        ul_out[0] = ul

    def data_spec():
        return pl.BlockSpec((1, H, WF), lambda b: (b, 0, 0))

    def list_spec():
        return pl.BlockSpec((nr, 1, H, WF), lambda b: (0, b, 0, 0))

    def full(shape):
        nd = len(shape)
        return pl.BlockSpec(shape, lambda b, _nd=nd: (0,) * _nd)

    in_specs = [
        data_spec(), data_spec(), list_spec(), list_spec(),
        full((nr, 2, 2 * WF, WF)),        # u-stream conv_input matrices
        full((nr, 2 * WF, WF)),           # u-stream nin_skip matrix
        full((nr, 2, 2 * WF, 2 * WF)),    # u-stream conv_out matrices
        full((nr, 1, WF)), full((nr, 1, WF)), full((nr, 1, 2 * WF)),
        full((nr, 2, 2 * WF, WF)),        # ul-stream conv_input matrices
        full((nr, 4 * WF, WF)),           # ul-stream nin_skip matrix
        full((nr, 2, 2 * WF, 2 * WF)),    # ul-stream conv_out matrices
        full((nr, 1, WF)), full((nr, 1, WF)), full((nr, 1, 2 * WF)),
    ]

    return pl.pallas_call(
        kernel,
        out_shape=(jax.ShapeDtypeStruct((B, H, WF), jnp.float32),
                   jax.ShapeDtypeStruct((B, H, WF), jnp.float32)),
        grid_spec=pltpu.PrefetchScalarGridSpec(
            num_scalar_prefetch=0,
            grid=(B,),
            in_specs=in_specs,
            out_specs=[data_spec(), data_spec()],
        ),
        compiler_params=pltpu.CompilerParams(dimension_semantics=("parallel",)),
    )


# ----------------------------------------------------------------------------
# Wrapper-side weight lowering (per-tap conv weights -> big lane-dense matrices)
# ----------------------------------------------------------------------------
def build_shifted_conv_mats(w_taps, kh, kw, pad_l, W, F, split_out):
    """w_taps: (kh*kw, 2F, Cout), input channels ordered [pos(F), neg(F)].

    Returns (kh, 2*W*F, W*Cout) f32: one matrix per vertical tap over the merged
    (sign, w_in, ci) axis; horizontal taps + L/R zero padding are baked in.
    If split_out (conv_out, Cout=2F), output columns are ordered
    [gate_a block (W*F) | gate_b block (W*F)] so the gate split is a free slice.
    """
    w_taps = np.asarray(w_taps, np.float32)
    cout = w_taps.shape[-1]
    M = np.zeros((kh, 2, W, F, W, cout), np.float32)   # [dh, s, w_in, ci, w_out, co]
    for dh in range(kh):
        for dw in range(kw):
            tap = w_taps[dh * kw + dw]                 # (2F, cout)
            for w_out in range(W):
                w_in = w_out + dw - pad_l
                if 0 <= w_in < W:
                    M[dh, 0, w_in, :, w_out, :] = tap[:F]
                    M[dh, 1, w_in, :, w_out, :] = tap[F:]
    if split_out:
        M = M.reshape(kh, 2, W, F, W, 2, F).transpose(0, 1, 2, 3, 5, 4, 6)
        return M.reshape(kh, 2 * W * F, 2 * W * F)
    return M.reshape(kh, 2 * W * F, W * cout)


def build_nin_mat(wn, W, F, nparts):
    """wn: (2*nparts*F, F) 1x1-conv weight; input channels [parts..., -parts...].

    Kernel LHS ordering is [elu(part_0) | ... | elu(-part_0) | ...] (each a
    lane-dense W*F block), so K = s*(nparts*W*F) + p*(W*F) + w*F + ci.
    """
    wn = np.asarray(wn, np.float32)
    M = np.zeros((2, nparts, W, F, W, F), np.float32)
    for s in range(2):
        for p in range(nparts):
            blk = wn[(s * nparts + p) * F:(s * nparts + p + 1) * F, :]
            for w in range(W):
                M[s, p, w, :, w, :] = blk
    return M.reshape(2 * nparts * W * F, W * F)


def prepare_weights(params, W, F):
    nr = len(params["u"])

    def bias_row(b):                       # (1,F) -> (1, W*F)
        return np.tile(np.asarray(b, np.float32).reshape(-1), W)[None, :]

    def bias_row_split(b):                 # (1,2F) -> (1, 2*W*F) in [gate_a | gate_b] order
        b = np.asarray(b, np.float32).reshape(-1)
        return np.concatenate([np.tile(b[:F], W), np.tile(b[F:], W)])[None, :]

    keys = ("u_ci", "u_nin", "u_co", "u_bi", "u_bn", "u_bo",
            "ul_ci", "ul_nin", "ul_co", "ul_bi", "ul_bn", "ul_bo")
    acc = {k: [] for k in keys}
    for i in range(nr):
        pu = params["u"][i]                # down_shifted_conv2d: 2x3, pad_l=1
        acc["u_ci"].append(build_shifted_conv_mats(pu["wi"], 2, 3, 1, W, F, False))
        acc["u_nin"].append(build_nin_mat(pu["wn"], W, F, 1))
        acc["u_co"].append(build_shifted_conv_mats(pu["wo"], 2, 3, 1, W, F, True))
        acc["u_bi"].append(bias_row(pu["bi"]))
        acc["u_bn"].append(bias_row(pu["bn"]))
        acc["u_bo"].append(bias_row_split(pu["bo"]))
        pv = params["ul"][i]               # down_right_shifted_conv2d: 2x2, pad_l=1
        acc["ul_ci"].append(build_shifted_conv_mats(pv["wi"], 2, 2, 1, W, F, False))
        acc["ul_nin"].append(build_nin_mat(pv["wn"], W, F, 2))
        acc["ul_co"].append(build_shifted_conv_mats(pv["wo"], 2, 2, 1, W, F, True))
        acc["ul_bi"].append(bias_row(pv["bi"]))
        acc["ul_bn"].append(bias_row(pv["bn"]))
        acc["ul_bo"].append(bias_row_split(pv["bo"]))

    def stack(name, dtype):
        return jnp.asarray(np.stack(acc[name], axis=0), dtype)

    return (stack("u_ci", MM_DTYPE), stack("u_nin", MM_DTYPE), stack("u_co", MM_DTYPE),
            stack("u_bi", jnp.float32), stack("u_bn", jnp.float32), stack("u_bo", jnp.float32),
            stack("ul_ci", MM_DTYPE), stack("ul_nin", MM_DTYPE), stack("ul_co", MM_DTYPE),
            stack("ul_bi", jnp.float32), stack("ul_bn", jnp.float32), stack("ul_bo", jnp.float32))


# ----------------------------------------------------------------------------
# PixelCNNLayer_down forward (wrapper: reshape to lane-dense slabs + one call)
# ----------------------------------------------------------------------------
def pixelcnn_layer_down(u, ul, u_list, ul_list, params):
    """u, ul: (B,H,W,F); u_list, ul_list: (nr,B,H,W,F), consumed from the end (.pop())."""
    B, H, W, F = u.shape
    nr = len(params["u"])
    WF = W * F
    wts = prepare_weights(params, W, F)
    call = make_pixelcnn_down_call(B, H, W, F, nr)
    u_out, ul_out = call(
        u.reshape(B, H, WF), ul.reshape(B, H, WF),
        u_list[::-1].reshape(nr, B, H, WF),       # .pop() order -> index order
        ul_list[::-1].reshape(nr, B, H, WF),
        *wts)
    return u_out.reshape(B, H, W, F), ul_out.reshape(B, H, W, F)


# ----------------------------------------------------------------------------
# Deterministic synthetic parameters (original per-tap layout)
# ----------------------------------------------------------------------------
def init_params(key, nr_resnet, F, scale=0.1):
    def nrm(k, shape):
        return scale * jax.random.normal(k, shape, jnp.float32)

    params = {"u": [], "ul": []}
    for i in range(nr_resnet):
        ks = jax.random.split(jax.random.fold_in(key, i), 12)
        params["u"].append({            # down_shifted_conv2d: 2x3 filter, skip=1
            "wi": nrm(ks[0], (6, 2 * F, F)),     "bi": nrm(ks[1], (1, F)),
            "wn": nrm(ks[2], (2 * F, F)),        "bn": nrm(ks[3], (1, F)),
            "wo": nrm(ks[4], (6, 2 * F, 2 * F)), "bo": nrm(ks[5], (1, 2 * F)),
        })
        params["ul"].append({           # down_right_shifted_conv2d: 2x2, skip=2
            "wi": nrm(ks[6], (4, 2 * F, F)),      "bi": nrm(ks[7], (1, F)),
            "wn": nrm(ks[8], (4 * F, F)),         "bn": nrm(ks[9], (1, F)),
            "wo": nrm(ks[10], (4, 2 * F, 2 * F)), "bo": nrm(ks[11], (1, 2 * F)),
        })
    return params


# ----------------------------------------------------------------------------
# Pure-JAX reference (same math, NHWC, bf16 matmul operands / f32 accumulation)
# ----------------------------------------------------------------------------
def _concat_elu(x):
    return _elu(jnp.concatenate([x, -x], axis=-1))


def _ref_conv(x, w_taps, bias, kh, kw, pad_l, pad_r):
    B, H, W, _ = x.shape
    xp = jnp.pad(x.astype(MM_DTYPE), ((0, 0), (kh - 1, 0), (pad_l, pad_r), (0, 0)))
    wb = w_taps.astype(MM_DTYPE)
    acc = jnp.zeros((B, H, W, w_taps.shape[-1]), jnp.float32) + bias.reshape(1, 1, 1, -1)
    for dh in range(kh):
        for dw in range(kw):
            acc = acc + jnp.einsum("bhwc,cd->bhwd",
                                   xp[:, dh:dh + H, dw:dw + W, :], wb[dh * kw + dw],
                                   preferred_element_type=jnp.float32)
    return acc


def _ref_gated(x, a, p, kh, kw, pad_l, pad_r, F):
    c1 = _ref_conv(_concat_elu(x), p["wi"], p["bi"][0], kh, kw, pad_l, pad_r)
    c1 = c1 + jnp.einsum("bhwc,cd->bhwd", _concat_elu(a).astype(MM_DTYPE),
                         p["wn"].astype(MM_DTYPE),
                         preferred_element_type=jnp.float32) + p["bn"][0].reshape(1, 1, 1, -1)
    c2 = _ref_conv(_concat_elu(c1), p["wo"], p["bo"][0], kh, kw, pad_l, pad_r)
    return x + c2[..., :F] * jax.nn.sigmoid(c2[..., F:])


def ref_forward(u, ul, u_list, ul_list, params, F):
    nr = len(params["u"])
    for i in range(nr):
        u = _ref_gated(u, u_list[nr - 1 - i], params["u"][i], 2, 3, 1, 1, F)
        a_ul = jnp.concatenate([u, ul_list[nr - 1 - i]], axis=-1)
        ul = _ref_gated(ul, a_ul, params["ul"][i], 2, 2, 1, 0, F)
    return u, ul


# ----------------------------------------------------------------------------
if __name__ == "__main__":
    B, H, W, F = 2, 16, 16, 8      # NHWC; PyTorch NCHW equivalent: (2, 8, 16, 16)
    nr_resnet = 2

    key = jax.random.PRNGKey(0)
    kp, ku, kul, kulist, kullist = jax.random.split(key, 5)
    params = init_params(kp, nr_resnet, F)

    u = jax.random.normal(ku, (B, H, W, F), jnp.float32)
    ul = jax.random.normal(kul, (B, H, W, F), jnp.float32)
    u_list = jax.random.normal(kulist, (nr_resnet, B, H, W, F), jnp.float32)
    ul_list = jax.random.normal(kullist, (nr_resnet, B, H, W, F), jnp.float32)

    u_out, ul_out = pixelcnn_layer_down(u, ul, u_list, ul_list, params)
    jax.block_until_ready((u_out, ul_out))

    u_ref, ul_ref = ref_forward(u, ul, u_list, ul_list, params, F)
    assert u_out.shape == (B, H, W, F) and ul_out.shape == (B, H, W, F)
    assert jnp.allclose(u_out, u_ref, atol=2e-3, rtol=2e-3), \
        float(jnp.max(jnp.abs(u_out - u_ref)))
    assert jnp.allclose(ul_out, ul_ref, atol=2e-3, rtol=2e-3), \
        float(jnp.max(jnp.abs(ul_out - ul_ref)))
    print("KERNEL_OK")
</pallas_src>

<mosaic_0001>
module attributes {stable_mosaic.version = 11 : i64} {
  func.func @kernel(%arg0: i32, %arg1: memref<1x16x128xf32, #tpu.memory_space<vmem>>, %arg2: memref<1x16x128xf32, #tpu.memory_space<vmem>>, %arg3: memref<2x1x16x128xf32, #tpu.memory_space<vmem>>, %arg4: memref<2x1x16x128xf32, #tpu.memory_space<vmem>>, %arg5: memref<2x2x256x128xbf16, #tpu.memory_space<vmem>>, %arg6: memref<2x256x128xbf16, #tpu.memory_space<vmem>>, %arg7: memref<2x2x256x256xbf16, #tpu.memory_space<vmem>>, %arg8: memref<2x1x128xf32, #tpu.memory_space<vmem>>, %arg9: memref<2x1x128xf32, #tpu.memory_space<vmem>>, %arg10: memref<2x1x256xf32, #tpu.memory_space<vmem>>, %arg11: memref<2x2x256x128xbf16, #tpu.memory_space<vmem>>, %arg12: memref<2x512x128xbf16, #tpu.memory_space<vmem>>, %arg13: memref<2x2x256x256xbf16, #tpu.memory_space<vmem>>, %arg14: memref<2x1x128xf32, #tpu.memory_space<vmem>>, %arg15: memref<2x1x128xf32, #tpu.memory_space<vmem>>, %arg16: memref<2x1x256xf32, #tpu.memory_space<vmem>>, %arg17: memref<1x16x128xf32, #tpu.memory_space<vmem>>, %arg18: memref<1x16x128xf32, #tpu.memory_space<vmem>>) attributes {dimension_semantics = [#tpu.dimension_semantics<parallel>], iteration_bounds = array<i64: 2>, scalar_prefetch = 0 : i64, scratch_operands = 0 : i64, tpu.core_type = #tpu.core_type<tc>, window_params = [{transform_indices = @transform_0, window_bounds = array<i64: 1, 16, 128>}, {transform_indices = @transform_1, window_bounds = array<i64: 1, 16, 128>}, {transform_indices = @transform_2, window_bounds = array<i64: 2, 1, 16, 128>}, {transform_indices = @transform_3, window_bounds = array<i64: 2, 1, 16, 128>}, {pipeline_mode = #tpu.pipeline_mode<synchronous>, transform_indices = @transform_4, window_bounds = array<i64: 2, 2, 256, 128>}, {pipeline_mode = #tpu.pipeline_mode<synchronous>, transform_indices = @transform_5, window_bounds = array<i64: 2, 256, 128>}, {pipeline_mode = #tpu.pipeline_mode<synchronous>, transform_indices = @transform_6, window_bounds = array<i64: 2, 2, 256, 256>}, {pipeline_mode = #tpu.pipeline_mode<synchronous>, transform_indices = @transform_7, window_bounds = array<i64: 2, 1, 128>}, {pipeline_mode = #tpu.pipeline_mode<synchronous>, transform_indices = @transform_8, window_bounds = array<i64: 2, 1, 128>}, {pipeline_mode = #tpu.pipeline_mode<synchronous>, transform_indices = @transform_9, window_bounds = array<i64: 2, 1, 256>}, {pipeline_mode = #tpu.pipeline_mode<synchronous>, transform_indices = @transform_10, window_bounds = array<i64: 2, 2, 256, 128>}, {pipeline_mode = #tpu.pipeline_mode<synchronous>, transform_indices = @transform_11, window_bounds = array<i64: 2, 512, 128>}, {pipeline_mode = #tpu.pipeline_mode<synchronous>, transform_indices = @transform_12, window_bounds = array<i64: 2, 2, 256, 256>}, {pipeline_mode = #tpu.pipeline_mode<synchronous>, transform_indices = @transform_13, window_bounds = array<i64: 2, 1, 128>}, {pipeline_mode = #tpu.pipeline_mode<synchronous>, transform_indices = @transform_14, window_bounds = array<i64: 2, 1, 128>}, {pipeline_mode = #tpu.pipeline_mode<synchronous>, transform_indices = @transform_15, window_bounds = array<i64: 2, 1, 256>}, {transform_indices = @transform_16, window_bounds = array<i64: 1, 16, 128>}, {transform_indices = @transform_17, window_bounds = array<i64: 1, 16, 128>}]} {
    %c0 = arith.constant 0 : index
    %c0_0 = arith.constant 0 : index
    %c0_1 = arith.constant 0 : index
    %0 = vector.load %arg1[%c0, %c0_0, %c0_1] : memref<1x16x128xf32, #tpu.memory_space<vmem>>, vector<1x16x128xf32>
    %1 = vector.shape_cast %0 : vector<1x16x128xf32> to vector<16x128xf32>
    %c0_2 = arith.constant 0 : index
    %c0_3 = arith.constant 0 : index
    %c0_4 = arith.constant 0 : index
    %2 = vector.load %arg2[%c0_2, %c0_3, %c0_4] : memref<1x16x128xf32, #tpu.memory_space<vmem>>, vector<1x16x128xf32>
    %3 = vector.shape_cast %2 : vector<1x16x128xf32> to vector<16x128xf32>
    %c0_5 = arith.constant 0 : index
    %c0_6 = arith.constant 0 : index
    %c0_7 = arith.constant 0 : index
    %c0_8 = arith.constant 0 : index
    %4 = vector.load %arg3[%c0_5, %c0_6, %c0_7, %c0_8] : memref<2x1x16x128xf32, #tpu.memory_space<vmem>>, vector<1x1x16x128xf32>
    %5 = vector.shape_cast %4 : vector<1x1x16x128xf32> to vector<16x128xf32>
    %cst = arith.constant 0.000000e+00 : f32
    %6 = vector.broadcast %cst : f32 to vector<16x128xf32>
    %7 = arith.cmpf ogt, %5, %6 : vector<16x128xf32>
    %cst_9 = arith.constant 0.000000e+00 : f32
    %8 = vector.broadcast %cst_9 : f32 to vector<16x128xf32>
    %9 = arith.minimumf %5, %8 : vector<16x128xf32>
    %10 = math.exp %9 : vector<16x128xf32>
    %cst_10 = arith.constant 1.000000e+00 : f32
    %11 = vector.broadcast %cst_10 : f32 to vector<16x128xf32>
    %12 = arith.subf %10, %11 : vector<16x128xf32>
    %13 = arith.select %7, %5, %12 : vector<16x128xi1>, vector<16x128xf32>
    %cst_11 = arith.constant 0.000000e+00 : f32
    %14 = vector.broadcast %cst_11 : f32 to vector<16x128xf32>
    %15 = arith.subf %14, %5 : vector<16x128xf32>
    %cst_12 = arith.constant 0.000000e+00 : f32
    %16 = vector.broadcast %cst_12 : f32 to vector<16x128xf32>
    %17 = arith.cmpf ogt, %15, %16 : vector<16x128xf32>
    %cst_13 = arith.constant 0.000000e+00 : f32
    %18 = vector.broadcast %cst_13 : f32 to vector<16x128xf32>
    %19 = arith.minimumf %15, %18 : vector<16x128xf32>
    %20 = math.exp %19 : vector<16x128xf32>
    %cst_14 = arith.constant 1.000000e+00 : f32
    %21 = vector.broadcast %cst_14 : f32 to vector<16x128xf32>
    %22 = arith.subf %20, %21 : vector<16x128xf32>
    %23 = arith.select %17, %15, %22 : vector<16x128xi1>, vector<16x128xf32>
    %24 = tpu.concatenate %13, %23 in 1 : vector<16x128xf32>, vector<16x128xf32> -> vector<16x256xf32>
    %cst_15 = arith.constant 0.000000e+00 : f32
    %25 = vector.broadcast %cst_15 : f32 to vector<16x128xf32>
    %26 = arith.cmpf ogt, %1, %25 : vector<16x128xf32>
    %cst_16 = arith.constant 0.000000e+00 : f32
    %27 = vector.broadcast %cst_16 : f32 to vector<16x128xf32>
    %28 = arith.minimumf %1, %27 : vector<16x128xf32>
    %29 = math.exp %28 : vector<16x128xf32>
    %cst_17 = arith.constant 1.000000e+00 : f32
    %30 = vector.broadcast %cst_17 : f32 to vector<16x128xf32>
    %31 = arith.subf %29, %30 : vector<16x128xf32>
    %32 = arith.select %26, %1, %31 : vector<16x128xi1>, vector<16x128xf32>
    %cst_18 = arith.constant 0.000000e+00 : f32
    %33 = vector.broadcast %cst_18 : f32 to vector<16x128xf32>
    %34 = arith.subf %33, %1 : vector<16x128xf32>
    %cst_19 = arith.constant 0.000000e+00 : f32
    %35 = vector.broadcast %cst_19 : f32 to vector<16x128xf32>
    %36 = arith.cmpf ogt, %34, %35 : vector<16x128xf32>
    %cst_20 = arith.constant 0.000000e+00 : f32
    %37 = vector.broadcast %cst_20 : f32 to vector<16x128xf32>
    %38 = arith.minimumf %34, %37 : vector<16x128xf32>
    %39 = math.exp %38 : vector<16x128xf32>
    %cst_21 = arith.constant 1.000000e+00 : f32
    %40 = vector.broadcast %cst_21 : f32 to vector<16x128xf32>
    %41 = arith.subf %39, %40 : vector<16x128xf32>
    %42 = arith.select %36, %34, %41 : vector<16x128xi1>, vector<16x128xf32>
    %43 = tpu.concatenate %32, %42 in 1 : vector<16x128xf32>, vector<16x128xf32> -> vector<16x256xf32>
    %cst_22 = arith.constant 0.000000e+00 : f32
    %44 = vector.broadcast %cst_22 : f32 to vector<1x256xf32>
    %45 = vector.extract_strided_slice %43 {offsets = [0, 0], sizes = [15, 256], strides = [1, 1]} : vector<16x256xf32> to vector<15x256xf32>
    %46 = tpu.concatenate %44, %45 in 0 : vector<1x256xf32>, vector<15x256xf32> -> vector<16x256xf32>
    %47 = arith.truncf %46 : vector<16x256xf32> to vector<16x256xbf16>
    %c0_23 = arith.constant 0 : index
    %c0_24 = arith.constant 0 : index
    %c0_25 = arith.constant 0 : index
    %c0_26 = arith.constant 0 : index
    %48 = vector.load %arg5[%c0_23, %c0_24, %c0_25, %c0_26] : memref<2x2x256x128xbf16, #tpu.memory_space<vmem>>, vector<1x1x256x128xbf16>
    %49 = vector.shape_cast %48 : vector<1x1x256x128xbf16> to vector<256x128xbf16>
    %cst_27 = arith.constant dense<0.000000e+00> : vector<16x128xf32>
    %50 = tpu.matmul %47, %49, %cst_27 {dimension_numbers = #tpu.dot_dimension_numbers<[1], [0], [0], [1], [0, 0, 1, 1], [], []>} : vector<16x256xbf16>, vector<256x128xbf16>, vector<16x128xf32> -> vector<16x128xf32>
    %51 = arith.truncf %43 : vector<16x256xf32> to vector<16x256xbf16>
    %c0_28 = arith.constant 0 : index
    %c1 = arith.constant 1 : index
    %c0_29 = arith.constant 0 : index
    %c0_30 = arith.constant 0 : index
    %52 = vector.load %arg5[%c0_28, %c1, %c0_29, %c0_30] : memref<2x2x256x128xbf16, #tpu.memory_space<vmem>>, vector<1x1x256x128xbf16>
    %53 = vector.shape_cast %52 : vector<1x1x256x128xbf16> to vector<256x128xbf16>
    %cst_31 = arith.constant dense<0.000000e+00> : vector<16x128xf32>
    %54 = tpu.matmul %51, %53, %cst_31 {dimension_numbers = #tpu.dot_dimension_numbers<[1], [0], [0], [1], [0, 0, 1, 1], [], []>} : vector<16x256xbf16>, vector<256x128xbf16>, vector<16x128xf32> -> vector<16x128xf32>
    %55 = arith.addf %50, %54 : vector<16x128xf32>
    %c0_32 = arith.constant 0 : index
    %c0_33 = arith.constant 0 : index
    %c0_34 = arith.constant 0 : index
    %56 = vector.load %arg8[%c0_32, %c0_33, %c0_34] : memref<2x1x128xf32, #tpu.memory_space<vmem>>, vector<1x1x128xf32>
    %57 = vector.shape_cast %56 : vector<1x1x128xf32> to vector<1x128xf32>
    %58 = vector.broadcast %57 : vector<1x128xf32> to vector<16x128xf32>
    %59 = arith.addf %55, %58 : vector<16x128xf32>
    %60 = arith.truncf %24 : vector<16x256xf32> to vector<16x256xbf16>
    %c0_35 = arith.constant 0 : index
    %c0_36 = arith.constant 0 : index
    %c0_37 = arith.constant 0 : index
    %61 = vector.load %arg6[%c0_35, %c0_36, %c0_37] : memref<2x256x128xbf16, #tpu.memory_space<vmem>>, vector<1x256x128xbf16>
    %62 = vector.shape_cast %61 : vector<1x256x128xbf16> to vector<256x128xbf16>
    %cst_38 = arith.constant dense<0.000000e+00> : vector<16x128xf32>
    %63 = tpu.matmul %60, %62, %cst_38 {dimension_numbers = #tpu.dot_dimension_numbers<[1], [0], [0], [1], [0, 0, 1, 1], [], []>} : vector<16x256xbf16>, vector<256x128xbf16>, vector<16x128xf32> -> vector<16x128xf32>
    %64 = arith.addf %59, %63 : vector<16x128xf32>
    %c0_39 = arith.constant 0 : index
    %c0_40 = arith.constant 0 : index
    %c0_41 = arith.constant 0 : index
    %65 = vector.load %arg9[%c0_39, %c0_40, %c0_41] : memref<2x1x128xf32, #tpu.memory_space<vmem>>, vector<1x1x128xf32>
    %66 = vector.shape_cast %65 : vector<1x1x128xf32> to vector<1x128xf32>
    %67 = vector.broadcast %66 : vector<1x128xf32> to vector<16x128xf32>
    %68 = arith.addf %64, %67 : vector<16x128xf32>
    %cst_42 = arith.constant 0.000000e+00 : f32
    %69 = vector.broadcast %cst_42 : f32 to vector<16x128xf32>
    %70 = arith.cmpf ogt, %68, %69 : vector<16x128xf32>
    %cst_43 = arith.constant 0.000000e+00 : f32
    %71 = vector.broadcast %cst_43 : f32 to vector<16x128xf32>
    %72 = arith.minimumf %68, %71 : vector<16x128xf32>
    %73 = math.exp %72 : vector<16x128xf32>
    %cst_44 = arith.constant 1.000000e+00 : f32
    %74 = vector.broadcast %cst_44 : f32 to vector<16x128xf32>
    %75 = arith.subf %73, %74 : vector<16x128xf32>
    %76 = arith.select %70, %68, %75 : vector<16x128xi1>, vector<16x128xf32>
    %cst_45 = arith.constant 0.000000e+00 : f32
    %77 = vector.broadcast %cst_45 : f32 to vector<16x128xf32>
    %78 = arith.subf %77, %68 : vector<16x128xf32>
    %cst_46 = arith.constant 0.000000e+00 : f32
    %79 = vector.broadcast %cst_46 : f32 to vector<16x128xf32>
    %80 = arith.cmpf ogt, %78, %79 : vector<16x128xf32>
    %cst_47 = arith.constant 0.000000e+00 : f32
    %81 = vector.broadcast %cst_47 : f32 to vector<16x128xf32>
    %82 = arith.minimumf %78, %81 : vector<16x128xf32>
    %83 = math.exp %82 : vector<16x128xf32>
    %cst_48 = arith.constant 1.000000e+00 : f32
    %84 = vector.broadcast %cst_48 : f32 to vector<16x128xf32>
    %85 = arith.subf %83, %84 : vector<16x128xf32>
    %86 = arith.select %80, %78, %85 : vector<16x128xi1>, vector<16x128xf32>
    %87 = tpu.concatenate %76, %86 in 1 : vector<16x128xf32>, vector<16x128xf32> -> vector<16x256xf32>
    %cst_49 = arith.constant 0.000000e+00 : f32
    %88 = vector.broadcast %cst_49 : f32 to vector<1x256xf32>
    %89 = vector.extract_strided_slice %87 {offsets = [0, 0], sizes = [15, 256], strides = [1, 1]} : vector<16x256xf32> to vector<15x256xf32>
    %90 = tpu.concatenate %88, %89 in 0 : vector<1x256xf32>, vector<15x256xf32> -> vector<16x256xf32>
    %91 = arith.truncf %90 : vector<16x256xf32> to vector<16x256xbf16>
    %c0_50 = arith.constant 0 : index
    %c0_51 = arith.constant 0 : index
    %c0_52 = arith.constant 0 : index
    %c0_53 = arith.constant 0 : index
    %92 = vector.load %arg7[%c0_50, %c0_51, %c0_52, %c0_53] : memref<2x2x256x256xbf16, #tpu.memory_space<vmem>>, vector<1x1x256x256xbf16>
    %93 = vector.shape_cast %92 : vector<1x1x256x256xbf16> to vector<256x256xbf16>
    %cst_54 = arith.constant dense<0.000000e+00> : vector<16x256xf32>
    %94 = tpu.matmul %91, %93, %cst_54 {dimension_numbers = #tpu.dot_dimension_numbers<[1], [0], [0], [1], [0, 0, 1, 1], [], []>} : vector<16x256xbf16>, vector<256x256xbf16>, vector<16x256xf32> -> vector<16x256xf32>
    %95 = arith.truncf %87 : vector<16x256xf32> to vector<16x256xbf16>
    %c0_55 = arith.constant 0 : index
    %c1_56 = arith.constant 1 : index
    %c0_57 = arith.constant 0 : index
    %c0_58 = arith.constant 0 : index
    %96 = vector.load %arg7[%c0_55, %c1_56, %c0_57, %c0_58] : memref<2x2x256x256xbf16, #tpu.memory_space<vmem>>, vector<1x1x256x256xbf16>
    %97 = vector.shape_cast %96 : vector<1x1x256x256xbf16> to vector<256x256xbf16>
    %cst_59 = arith.constant dense<0.000000e+00> : vector<16x256xf32>
    %98 = tpu.matmul %95, %97, %cst_59 {dimension_numbers = #tpu.dot_dimension_numbers<[1], [0], [0], [1], [0, 0, 1, 1], [], []>} : vector<16x256xbf16>, vector<256x256xbf16>, vector<16x256xf32> -> vector<16x256xf32>
    %99 = arith.addf %94, %98 : vector<16x256xf32>
    %c0_60 = arith.constant 0 : index
    %c0_61 = arith.constant 0 : index
    %c0_62 = arith.constant 0 : index
    %100 = vector.load %arg10[%c0_60, %c0_61, %c0_62] : memref<2x1x256xf32, #tpu.memory_space<vmem>>, vector<1x1x256xf32>
    %101 = vector.shape_cast %100 : vector<1x1x256xf32> to vector<1x256xf32>
    %102 = vector.broadcast %101 : vector<1x256xf32> to vector<16x256xf32>
    %103 = arith.addf %99, %102 : vector<16x256xf32>
    %104 = vector.extract_strided_slice %103 {offsets = [0, 0], sizes = [16, 128], strides = [1, 1]} : vector<16x256xf32> to vector<16x128xf32>
    %105 = vector.extract_strided_slice %103 {offsets = [0, 128], sizes = [16, 128], strides = [1, 1]} : vector<16x256xf32> to vector<16x128xf32>
    %106 = arith.negf %105 : vector<16x128xf32>
    %107 = math.exp %106 : vector<16x128xf32>
    %cst_63 = arith.constant 1.000000e+00 : f32
    %108 = vector.broadcast %cst_63 : f32 to vector<16x128xf32>
    %109 = arith.addf %108, %107 : vector<16x128xf32>
    %110 = arith.divf %108, %109 : vector<16x128xf32>
    %111 = arith.mulf %104, %110 : vector<16x128xf32>
    %112 = arith.addf %1, %111 : vector<16x128xf32>
    %c0_64 = arith.constant 0 : index
    %c0_65 = arith.constant 0 : index
    %c0_66 = arith.constant 0 : index
    %c0_67 = arith.constant 0 : index
    %113 = vector.load %arg4[%c0_64, %c0_65, %c0_66, %c0_67] : memref<2x1x16x128xf32, #tpu.memory_space<vmem>>, vector<1x1x16x128xf32>
    %114 = vector.shape_cast %113 : vector<1x1x16x128xf32> to vector<16x128xf32>
    %cst_68 = arith.constant 0.000000e+00 : f32
    %115 = vector.broadcast %cst_68 : f32 to vector<16x128xf32>
    %116 = arith.cmpf ogt, %112, %115 : vector<16x128xf32>
    %cst_69 = arith.constant 0.000000e+00 : f32
    %117 = vector.broadcast %cst_69 : f32 to vector<16x128xf32>
    %118 = arith.minimumf %112, %117 : vector<16x128xf32>
    %119 = math.exp %118 : vector<16x128xf32>
    %cst_70 = arith.constant 1.000000e+00 : f32
    %120 = vector.broadcast %cst_70 : f32 to vector<16x128xf32>
    %121 = arith.subf %119, %120 : vector<16x128xf32>
    %122 = arith.select %116, %112, %121 : vector<16x128xi1>, vector<16x128xf32>
    %cst_71 = arith.constant 0.000000e+00 : f32
    %123 = vector.broadcast %cst_71 : f32 to vector<16x128xf32>
    %124 = arith.cmpf ogt, %114, %123 : vector<16x128xf32>
    %cst_72 = arith.constant 0.000000e+00 : f32
    %125 = vector.broadcast %cst_72 : f32 to vector<16x128xf32>
    %126 = arith.minimumf %114, %125 : vector<16x128xf32>
    %127 = math.exp %126 : vector<16x128xf32>
    %cst_73 = arith.constant 1.000000e+00 : f32
    %128 = vector.broadcast %cst_73 : f32 to vector<16x128xf32>
    %129 = arith.subf %127, %128 : vector<16x128xf32>
    %130 = arith.select %124, %114, %129 : vector<16x128xi1>, vector<16x128xf32>
    %cst_74 = arith.constant 0.000000e+00 : f32
    %131 = vector.broadcast %cst_74 : f32 to vector<16x128xf32>
    %132 = arith.subf %131, %112 : vector<16x128xf32>
    %cst_75 = arith.constant 0.000000e+00 : f32
    %133 = vector.broadcast %cst_75 : f32 to vector<16x128xf32>
    %134 = arith.cmpf ogt, %132, %133 : vector<16x128xf32>
    %cst_76 = arith.constant 0.000000e+00 : f32
    %135 = vector.broadcast %cst_76 : f32 to vector<16x128xf32>
    %136 = arith.minimumf %132, %135 : vector<16x128xf32>
    %137 = math.exp %136 : vector<16x128xf32>
    %cst_77 = arith.constant 1.000000e+00 : f32
    %138 = vector.broadcast %cst_77 : f32 to vector<16x128xf32>
    %139 = arith.subf %137, %138 : vector<16x128xf32>
    %140 = arith.select %134, %132, %139 : vector<16x128xi1>, vector<16x128xf32>
    %cst_78 = arith.constant 0.000000e+00 : f32
    %141 = vector.broadcast %cst_78 : f32 to vector<16x128xf32>
    %142 = arith.subf %141, %114 : vector<16x128xf32>
    %cst_79 = arith.constant 0.000000e+00 : f32
    %143 = vector.broadcast %cst_79 : f32 to vector<16x128xf32>
    %144 = arith.cmpf ogt, %142, %143 : vector<16x128xf32>
    %cst_80 = arith.constant 0.000000e+00 : f32
    %145 = vector.broadcast %cst_80 : f32 to vector<16x128xf32>
    %146 = arith.minimumf %142, %145 : vector<16x128xf32>
    %147 = math.exp %146 : vector<16x128xf32>
    %cst_81 = arith.constant 1.000000e+00 : f32
    %148 = vector.broadcast %cst_81 : f32 to vector<16x128xf32>
    %149 = arith.subf %147, %148 : vector<16x128xf32>
    %150 = arith.select %144, %142, %149 : vector<16x128xi1>, vector<16x128xf32>
    %151 = tpu.concatenate %122, %130, %140, %150 in 1 : vector<16x128xf32>, vector<16x128xf32>, vector<16x128xf32>, vector<16x128xf32> -> vector<16x512xf32>
    %cst_82 = arith.constant 0.000000e+00 : f32
    %152 = vector.broadcast %cst_82 : f32 to vector<16x128xf32>
    %153 = arith.cmpf ogt, %3, %152 : vector<16x128xf32>
    %cst_83 = arith.constant 0.000000e+00 : f32
    %154 = vector.broadcast %cst_83 : f32 to vector<16x128xf32>
    %155 = arith.minimumf %3, %154 : vector<16x128xf32>
    %156 = math.exp %155 : vector<16x128xf32>
    %cst_84 = arith.constant 1.000000e+00 : f32
    %157 = vector.broadcast %cst_84 : f32 to vector<16x128xf32>
    %158 = arith.subf %156, %157 : vector<16x128xf32>
    %159 = arith.select %153, %3, %158 : vector<16x128xi1>, vector<16x128xf32>
    %cst_85 = arith.constant 0.000000e+00 : f32
    %160 = vector.broadcast %cst_85 : f32 to vector<16x128xf32>
    %161 = arith.subf %160, %3 : vector<16x128xf32>
    %cst_86 = arith.constant 0.000000e+00 : f32
    %162 = vector.broadcast %cst_86 : f32 to vector<16x128xf32>
    %163 = arith.cmpf ogt, %161, %162 : vector<16x128xf32>
    %cst_87 = arith.constant 0.000000e+00 : f32
    %164 = vector.broadcast %cst_87 : f32 to vector<16x128xf32>
    %165 = arith.minimumf %161, %164 : vector<16x128xf32>
    %166 = math.exp %165 : vector<16x128xf32>
    %cst_88 = arith.constant 1.000000e+00 : f32
    %167 = vector.broadcast %cst_88 : f32 to vector<16x128xf32>
    %168 = arith.subf %166, %167 : vector<16x128xf32>
    %169 = arith.select %163, %161, %168 : vector<16x128xi1>, vector<16x128xf32>
    %170 = tpu.concatenate %159, %169 in 1 : vector<16x128xf32>, vector<16x128xf32> -> vector<16x256xf32>
    %cst_89 = arith.constant 0.000000e+00 : f32
    %171 = vector.broadcast %cst_89 : f32 to vector<1x256xf32>
    %172 = vector.extract_strided_slice %170 {offsets = [0, 0], sizes = [15, 256], strides = [1, 1]} : vector<16x256xf32> to vector<15x256xf32>
    %173 = tpu.concatenate %171, %172 in 0 : vector<1x256xf32>, vector<15x256xf32> -> vector<16x256xf32>
    %174 = arith.truncf %173 : vector<16x256xf32> to vector<16x256xbf16>
    %c0_90 = arith.constant 0 : index
    %c0_91 = arith.constant 0 : index
    %c0_92 = arith.constant 0 : index
    %c0_93 = arith.constant 0 : index
    %175 = vector.load %arg11[%c0_90, %c0_91, %c0_92, %c0_93] : memref<2x2x256x128xbf16, #tpu.memory_space<vmem>>, vector<1x1x256x128xbf16>
    %176 = vector.shape_cast %175 : vector<1x1x256x128xbf16> to vector<256x128xbf16>
    %cst_94 = arith.constant dense<0.000000e+00> : vector<16x128xf32>
    %177 = tpu.matmul %174, %176, %cst_94 {dimension_numbers = #tpu.dot_dimension_numbers<[1], [0], [0], [1], [0, 0, 1, 1], [], []>} : vector<16x256xbf16>, vector<256x128xbf16>, vector<16x128xf32> -> vector<16x128xf32>
    %178 = arith.truncf %170 : vector<16x256xf32> to vector<16x256xbf16>
    %c0_95 = arith.constant 0 : index
    %c1_96 = arith.constant 1 : index
    %c0_97 = arith.constant 0 : index
    %c0_98 = arith.constant 0 : index
    %179 = vector.load %arg11[%c0_95, %c1_96, %c0_97, %c0_98] : memref<2x2x256x128xbf16, #tpu.memory_space<vmem>>, vector<1x1x256x128xbf16>
    %180 = vector.shape_cast %179 : vector<1x1x256x128xbf16> to vector<256x128xbf16>
    %cst_99 = arith.constant dense<0.000000e+00> : vector<16x128xf32>
    %181 = tpu.matmul %178, %180, %cst_99 {dimension_numbers = #tpu.dot_dimension_numbers<[1], [0], [0], [1], [0, 0, 1, 1], [], []>} : vector<16x256xbf16>, vector<256x128xbf16>, vector<16x128xf32> -> vector<16x128xf32>
    %182 = arith.addf %177, %181 : vector<16x128xf32>
    %c0_100 = arith.constant 0 : index
    %c0_101 = arith.constant 0 : index
    %c0_102 = arith.constant 0 : index
    %183 = vector.load %arg14[%c0_100, %c0_101, %c0_102] : memref<2x1x128xf32, #tpu.memory_space<vmem>>, vector<1x1x128xf32>
    %184 = vector.shape_cast %183 : vector<1x1x128xf32> to vector<1x128xf32>
    %185 = vector.broadcast %184 : vector<1x128xf32> to vector<16x128xf32>
    %186 = arith.addf %182, %185 : vector<16x128xf32>
    %187 = arith.truncf %151 : vector<16x512xf32> to vector<16x512xbf16>
    %c0_103 = arith.constant 0 : index
    %c0_104 = arith.constant 0 : index
    %c0_105 = arith.constant 0 : index
    %188 = vector.load %arg12[%c0_103, %c0_104, %c0_105] : memref<2x512x128xbf16, #tpu.memory_space<vmem>>, vector<1x512x128xbf16>
    %189 = vector.shape_cast %188 : vector<1x512x128xbf16> to vector<512x128xbf16>
    %cst_106 = arith.constant dense<0.000000e+00> : vector<16x128xf32>
    %190 = tpu.matmul %187, %189, %cst_106 {dimension_numbers = #tpu.dot_dimension_numbers<[1], [0], [0], [1], [0, 0, 1, 1], [], []>} : vector<16x512xbf16>, vector<512x128xbf16>, vector<16x128xf32> -> vector<16x128xf32>
    %191 = arith.addf %186, %190 : vector<16x128xf32>
    %c0_107 = arith.constant 0 : index
    %c0_108 = arith.constant 0 : index
    %c0_109 = arith.constant 0 : index
    %192 = vector.load %arg15[%c0_107, %c0_108, %c0_109] : memref<2x1x128xf32, #tpu.memory_space<vmem>>, vector<1x1x128xf32>
    %193 = vector.shape_cast %192 : vector<1x1x128xf32> to vector<1x128xf32>
    %194 = vector.broadcast %193 : vector<1x128xf32> to vector<16x128xf32>
    %195 = arith.addf %191, %194 : vector<16x128xf32>
    %cst_110 = arith.constant 0.000000e+00 : f32
    %196 = vector.broadcast %cst_110 : f32 to vector<16x128xf32>
    %197 = arith.cmpf ogt, %195, %196 : vector<16x128xf32>
    %cst_111 = arith.constant 0.000000e+00 : f32
    %198 = vector.broadcast %cst_111 : f32 to vector<16x128xf32>
    %199 = arith.minimumf %195, %198 : vector<16x128xf32>
    %200 = math.exp %199 : vector<16x128xf32>
    %cst_112 = arith.constant 1.000000e+00 : f32
    %201 = vector.broadcast %cst_112 : f32 to vector<16x128xf32>
    %202 = arith.subf %200, %201 : vector<16x128xf32>
    %203 = arith.select %197, %195, %202 : vector<16x128xi1>, vector<16x128xf32>
    %cst_113 = arith.constant 0.000000e+00 : f32
    %204 = vector.broadcast %cst_113 : f32 to vector<16x128xf32>
    %205 = arith.subf %204, %195 : vector<16x128xf32>
    %cst_114 = arith.constant 0.000000e+00 : f32
    %206 = vector.broadcast %cst_114 : f32 to vector<16x128xf32>
    %207 = arith.cmpf ogt, %205, %206 : vector<16x128xf32>
    %cst_115 = arith.constant 0.000000e+00 : f32
    %208 = vector.broadcast %cst_115 : f32 to vector<16x128xf32>
    %209 = arith.minimumf %205, %208 : vector<16x128xf32>
    %210 = math.exp %209 : vector<16x128xf32>
    %cst_116 = arith.constant 1.000000e+00 : f32
    %211 = vector.broadcast %cst_116 : f32 to vector<16x128xf32>
    %212 = arith.subf %210, %211 : vector<16x128xf32>
    %213 = arith.select %207, %205, %212 : vector<16x128xi1>, vector<16x128xf32>
    %214 = tpu.concatenate %203, %213 in 1 : vector<16x128xf32>, vector<16x128xf32> -> vector<16x256xf32>
    %cst_117 = arith.constant 0.000000e+00 : f32
    %215 = vector.broadcast %cst_117 : f32 to vector<1x256xf32>
    %216 = vector.extract_strided_slice %214 {offsets = [0, 0], sizes = [15, 256], strides = [1, 1]} : vector<16x256xf32> to vector<15x256xf32>
    %217 = tpu.concatenate %215, %216 in 0 : vector<1x256xf32>, vector<15x256xf32> -> vector<16x256xf32>
    %218 = arith.truncf %217 : vector<16x256xf32> to vector<16x256xbf16>
    %c0_118 = arith.constant 0 : index
    %c0_119 = arith.constant 0 : index
    %c0_120 = arith.constant 0 : index
    %c0_121 = arith.constant 0 : index
    %219 = vector.load %arg13[%c0_118, %c0_119, %c0_120, %c0_121] : memref<2x2x256x256xbf16, #tpu.memory_space<vmem>>, vector<1x1x256x256xbf16>
    %220 = vector.shape_cast %219 : vector<1x1x256x256xbf16> to vector<256x256xbf16>
    %cst_122 = arith.constant dense<0.000000e+00> : vector<16x256xf32>
    %221 = tpu.matmul %218, %220, %cst_122 {dimension_numbers = #tpu.dot_dimension_numbers<[1], [0], [0], [1], [0, 0, 1, 1], [], []>} : vector<16x256xbf16>, vector<256x256xbf16>, vector<16x256xf32> -> vector<16x256xf32>
    %222 = arith.truncf %214 : vector<16x256xf32> to vector<16x256xbf16>
    %c0_123 = arith.constant 0 : index
    %c1_124 = arith.constant 1 : index
    %c0_125 = arith.constant 0 : index
    %c0_126 = arith.constant 0 : index
    %223 = vector.load %arg13[%c0_123, %c1_124, %c0_125, %c0_126] : memref<2x2x256x256xbf16, #tpu.memory_space<vmem>>, vector<1x1x256x256xbf16>
    %224 = vector.shape_cast %223 : vector<1x1x256x256xbf16> to vector<256x256xbf16>
    %cst_127 = arith.constant dense<0.000000e+00> : vector<16x256xf32>
    %225 = tpu.matmul %222, %224, %cst_127 {dimension_numbers = #tpu.dot_dimension_numbers<[1], [0], [0], [1], [0, 0, 1, 1], [], []>} : vector<16x256xbf16>, vector<256x256xbf16>, vector<16x256xf32> -> vector<16x256xf32>
    %226 = arith.addf %221, %225 : vector<16x256xf32>
    %c0_128 = arith.constant 0 : index
    %c0_129 = arith.constant 0 : index
    %c0_130 = arith.constant 0 : index
    %227 = vector.load %arg16[%c0_128, %c0_129, %c0_130] : memref<2x1x256xf32, #tpu.memory_space<vmem>>, vector<1x1x256xf32>
    %228 = vector.shape_cast %227 : vector<1x1x256xf32> to vector<1x256xf32>
    %229 = vector.broadcast %228 : vector<1x256xf32> to vector<16x256xf32>
    %230 = arith.addf %226, %229 : vector<16x256xf32>
    %231 = vector.extract_strided_slice %230 {offsets = [0, 0], sizes = [16, 128], strides = [1, 1]} : vector<16x256xf32> to vector<16x128xf32>
    %232 = vector.extract_strided_slice %230 {offsets = [0, 128], sizes = [16, 128], strides = [1, 1]} : vector<16x256xf32> to vector<16x128xf32>
    %233 = arith.negf %232 : vector<16x128xf32>
    %234 = math.exp %233 : vector<16x128xf32>
    %cst_131 = arith.constant 1.000000e+00 : f32
    %235 = vector.broadcast %cst_131 : f32 to vector<16x128xf32>
    %236 = arith.addf %235, %234 : vector<16x128xf32>
    %237 = arith.divf %235, %236 : vector<16x128xf32>
    %238 = arith.mulf %231, %237 : vector<16x128xf32>
    %239 = arith.addf %3, %238 : vector<16x128xf32>
    %c1_132 = arith.constant 1 : index
    %c0_133 = arith.constant 0 : index
    %c0_134 = arith.constant 0 : index
    %c0_135 = arith.constant 0 : index
    %240 = vector.load %arg3[%c1_132, %c0_133, %c0_134, %c0_135] : memref<2x1x16x128xf32, #tpu.memory_space<vmem>>, vector<1x1x16x128xf32>
    %241 = vector.shape_cast %240 : vector<1x1x16x128xf32> to vector<16x128xf32>
    %cst_136 = arith.constant 0.000000e+00 : f32
    %242 = vector.broadcast %cst_136 : f32 to vector<16x128xf32>
    %243 = arith.cmpf ogt, %241, %242 : vector<16x128xf32>
    %cst_137 = arith.constant 0.000000e+00 : f32
    %244 = vector.broadcast %cst_137 : f32 to vector<16x128xf32>
    %245 = arith.minimumf %241, %244 : vector<16x128xf32>
    %246 = math.exp %245 : vector<16x128xf32>
    %cst_138 = arith.constant 1.000000e+00 : f32
    %247 = vector.broadcast %cst_138 : f32 to vector<16x128xf32>
    %248 = arith.subf %246, %247 : vector<16x128xf32>
    %249 = arith.select %243, %241, %248 : vector<16x128xi1>, vector<16x128xf32>
    %cst_139 = arith.constant 0.000000e+00 : f32
    %250 = vector.broadcast %cst_139 : f32 to vector<16x128xf32>
    %251 = arith.subf %250, %241 : vector<16x128xf32>
    %cst_140 = arith.constant 0.000000e+00 : f32
    %252 = vector.broadcast %cst_140 : f32 to vector<16x128xf32>
    %253 = arith.cmpf ogt, %251, %252 : vector<16x128xf32>
    %cst_141 = arith.constant 0.000000e+00 : f32
    %254 = vector.broadcast %cst_141 : f32 to vector<16x128xf32>
    %255 = arith.minimumf %251, %254 : vector<16x128xf32>
    %256 = math.exp %255 : vector<16x128xf32>
    %cst_142 = arith.constant 1.000000e+00 : f32
    %257 = vector.broadcast %cst_142 : f32 to vector<16x128xf32>
    %258 = arith.subf %256, %257 : vector<16x128xf32>
    %259 = arith.select %253, %251, %258 : vector<16x128xi1>, vector<16x128xf32>
    %260 = tpu.concatenate %249, %259 in 1 : vector<16x128xf32>, vector<16x128xf32> -> vector<16x256xf32>
    %cst_143 = arith.constant 0.000000e+00 : f32
    %261 = vector.broadcast %cst_143 : f32 to vector<16x128xf32>
    %262 = arith.cmpf ogt, %112, %261 : vector<16x128xf32>
    %cst_144 = arith.constant 0.000000e+00 : f32
    %263 = vector.broadcast %cst_144 : f32 to vector<16x128xf32>
    %264 = arith.minimumf %112, %263 : vector<16x128xf32>
    %265 = math.exp %264 : vector<16x128xf32>
    %cst_145 = arith.constant 1.000000e+00 : f32
    %266 = vector.broadcast %cst_145 : f32 to vector<16x128xf32>
    %267 = arith.subf %265, %266 : vector<16x128xf32>
    %268 = arith.select %262, %112, %267 : vector<16x128xi1>, vector<16x128xf32>
    %cst_146 = arith.constant 0.000000e+00 : f32
    %269 = vector.broadcast %cst_146 : f32 to vector<16x128xf32>
    %270 = arith.subf %269, %112 : vector<16x128xf32>
    %cst_147 = arith.constant 0.000000e+00 : f32
    %271 = vector.broadcast %cst_147 : f32 to vector<16x128xf32>
    %272 = arith.cmpf ogt, %270, %271 : vector<16x128xf32>
    %cst_148 = arith.constant 0.000000e+00 : f32
    %273 = vector.broadcast %cst_148 : f32 to vector<16x128xf32>
    %274 = arith.minimumf %270, %273 : vector<16x128xf32>
    %275 = math.exp %274 : vector<16x128xf32>
    %cst_149 = arith.constant 1.000000e+00 : f32
    %276 = vector.broadcast %cst_149 : f32 to vector<16x128xf32>
    %277 = arith.subf %275, %276 : vector<16x128xf32>
    %278 = arith.select %272, %270, %277 : vector<16x128xi1>, vector<16x128xf32>
    %279 = tpu.concatenate %268, %278 in 1 : vector<16x128xf32>, vector<16x128xf32> -> vector<16x256xf32>
    %cst_150 = arith.constant 0.000000e+00 : f32
    %280 = vector.broadcast %cst_150 : f32 to vector<1x256xf32>
    %281 = vector.extract_strided_slice %279 {offsets = [0, 0], sizes = [15, 256], strides = [1, 1]} : vector<16x256xf32> to vector<15x256xf32>
    %282 = tpu.concatenate %280, %281 in 0 : vector<1x256xf32>, vector<15x256xf32> -> vector<16x256xf32>
    %283 = arith.truncf %282 : vector<16x256xf32> to vector<16x256xbf16>
    %c1_151 = arith.constant 1 : index
    %c0_152 = arith.constant 0 : index
    %c0_153 = arith.constant 0 : index
    %c0_154 = arith.constant 0 : index
    %284 = vector.load %arg5[%c1_151, %c0_152, %c0_153, %c0_154] : memref<2x2x256x128xbf16, #tpu.memory_space<vmem>>, vector<1x1x256x128xbf16>
    %285 = vector.shape_cast %284 : vector<1x1x256x128xbf16> to vector<256x128xbf16>
    %cst_155 = arith.constant dense<0.000000e+00> : vector<16x128xf32>
    %286 = tpu.matmul %283, %285, %cst_155 {dimension_numbers = #tpu.dot_dimension_numbers<[1], [0], [0], [1], [0, 0, 1, 1], [], []>} : vector<16x256xbf16>, vector<256x128xbf16>, vector<16x128xf32> -> vector<16x128xf32>
    %287 = arith.truncf %279 : vector<16x256xf32> to vector<16x256xbf16>
    %c1_156 = arith.constant 1 : index
    %c1_157 = arith.constant 1 : index
    %c0_158 = arith.constant 0 : index
    %c0_159 = arith.constant 0 : index
    %288 = vector.load %arg5[%c1_156, %c1_157, %c0_158, %c0_159] : memref<2x2x256x128xbf16, #tpu.memory_space<vmem>>, vector<1x1x256x128xbf16>
    %289 = vector.shape_cast %288 : vector<1x1x256x128xbf16> to vector<256x128xbf16>
    %cst_160 = arith.constant dense<0.000000e+00> : vector<16x128xf32>
    %290 = tpu.matmul %287, %289, %cst_160 {dimension_numbers = #tpu.dot_dimension_numbers<[1], [0], [0], [1], [0, 0, 1, 1], [], []>} : vector<16x256xbf16>, vector<256x128xbf16>, vector<16x128xf32> -> vector<16x128xf32>
    %291 = arith.addf %286, %290 : vector<16x128xf32>
    %c1_161 = arith.constant 1 : index
    %c0_162 = arith.constant 0 : index
    %c0_163 = arith.constant 0 : index
    %292 = vector.load %arg8[%c1_161, %c0_162, %c0_163] : memref<2x1x128xf32, #tpu.memory_space<vmem>>, vector<1x1x128xf32>
    %293 = vector.shape_cast %292 : vector<1x1x128xf32> to vector<1x128xf32>
    %294 = vector.broadcast %293 : vector<1x128xf32> to vector<16x128xf32>
    %295 = arith.addf %291, %294 : vector<16x128xf32>
    %296 = arith.truncf %260 : vector<16x256xf32> to vector<16x256xbf16>
    %c1_164 = arith.constant 1 : index
    %c0_165 = arith.constant 0 : index
    %c0_166 = arith.constant 0 : index
    %297 = vector.load %arg6[%c1_164, %c0_165, %c0_166] : memref<2x256x128xbf16, #tpu.memory_space<vmem>>, vector<1x256x128xbf16>
    %298 = vector.shape_cast %297 : vector<1x256x128xbf16> to vector<256x128xbf16>
    %cst_167 = arith.constant dense<0.000000e+00> : vector<16x128xf32>
    %299 = tpu.matmul %296, %298, %cst_167 {dimension_numbers = #tpu.dot_dimension_numbers<[1], [0], [0], [1], [0, 0, 1, 1], [], []>} : vector<16x256xbf16>, vector<256x128xbf16>, vector<16x128xf32> -> vector<16x128xf32>
    %300 = arith.addf %295, %299 : vector<16x128xf32>
    %c1_168 = arith.constant 1 : index
    %c0_169 = arith.constant 0 : index
    %c0_170 = arith.constant 0 : index
    %301 = vector.load %arg9[%c1_168, %c0_169, %c0_170] : memref<2x1x128xf32, #tpu.memory_space<vmem>>, vector<1x1x128xf32>
    %302 = vector.shape_cast %301 : vector<1x1x128xf32> to vector<1x128xf32>
    %303 = vector.broadcast %302 : vector<1x128xf32> to vector<16x128xf32>
    %304 = arith.addf %300, %303 : vector<16x128xf32>
    %cst_171 = arith.constant 0.000000e+00 : f32
    %305 = vector.broadcast %cst_171 : f32 to vector<16x128xf32>
    %306 = arith.cmpf ogt, %304, %305 : vector<16x128xf32>
    %cst_172 = arith.constant 0.000000e+00 : f32
    %307 = vector.broadcast %cst_172 : f32 to vector<16x128xf32>
    %308 = arith.minimumf %304, %307 : vector<16x128xf32>
    %309 = math.exp %308 : vector<16x128xf32>
    %cst_173 = arith.constant 1.000000e+00 : f32
    %310 = vector.broadcast %cst_173 : f32 to vector<16x128xf32>
    %311 = arith.subf %309, %310 : vector<16x128xf32>
    %312 = arith.select %306, %304, %311 : vector<16x128xi1>, vector<16x128xf32>
    %cst_174 = arith.constant 0.000000e+00 : f32
    %313 = vector.broadcast %cst_174 : f32 to vector<16x128xf32>
    %314 = arith.subf %313, %304 : vector<16x128xf32>
    %cst_175 = arith.constant 0.000000e+00 : f32
    %315 = vector.broadcast %cst_175 : f32 to vector<16x128xf32>
    %316 = arith.cmpf ogt, %314, %315 : vector<16x128xf32>
    %cst_176 = arith.constant 0.000000e+00 : f32
    %317 = vector.broadcast %cst_176 : f32 to vector<16x128xf32>
    %318 = arith.minimumf %314, %317 : vector<16x128xf32>
    %319 = math.exp %318 : vector<16x128xf32>
    %cst_177 = arith.constant 1.000000e+00 : f32
    %320 = vector.broadcast %cst_177 : f32 to vector<16x128xf32>
    %321 = arith.subf %319, %320 : vector<16x128xf32>
    %322 = arith.select %316, %314, %321 : vector<16x128xi1>, vector<16x128xf32>
    %323 = tpu.concatenate %312, %322 in 1 : vector<16x128xf32>, vector<16x128xf32> -> vector<16x256xf32>
    %cst_178 = arith.constant 0.000000e+00 : f32
    %324 = vector.broadcast %cst_178 : f32 to vector<1x256xf32>
    %325 = vector.extract_strided_slice %323 {offsets = [0, 0], sizes = [15, 256], strides = [1, 1]} : vector<16x256xf32> to vector<15x256xf32>
    %326 = tpu.concatenate %324, %325 in 0 : vector<1x256xf32>, vector<15x256xf32> -> vector<16x256xf32>
    %327 = arith.truncf %326 : vector<16x256xf32> to vector<16x256xbf16>
    %c1_179 = arith.constant 1 : index
    %c0_180 = arith.constant 0 : index
    %c0_181 = arith.constant 0 : index
    %c0_182 = arith.constant 0 : index
    %328 = vector.load %arg7[%c1_179, %c0_180, %c0_181, %c0_182] : memref<2x2x256x256xbf16, #tpu.memory_space<vmem>>, vector<1x1x256x256xbf16>
    %329 = vector.shape_cast %328 : vector<1x1x256x256xbf16> to vector<256x256xbf16>
    %cst_183 = arith.constant dense<0.000000e+00> : vector<16x256xf32>
    %330 = tpu.matmul %327, %329, %cst_183 {dimension_numbers = #tpu.dot_dimension_numbers<[1], [0], [0], [1], [0, 0, 1, 1], [], []>} : vector<16x256xbf16>, vector<256x256xbf16>, vector<16x256xf32> -> vector<16x256xf32>
    %331 = arith.truncf %323 : vector<16x256xf32> to vector<16x256xbf16>
    %c1_184 = arith.constant 1 : index
    %c1_185 = arith.constant 1 : index
    %c0_186 = arith.constant 0 : index
    %c0_187 = arith.constant 0 : index
    %332 = vector.load %arg7[%c1_184, %c1_185, %c0_186, %c0_187] : memref<2x2x256x256xbf16, #tpu.memory_space<vmem>>, vector<1x1x256x256xbf16>
    %333 = vector.shape_cast %332 : vector<1x1x256x256xbf16> to vector<256x256xbf16>
    %cst_188 = arith.constant dense<0.000000e+00> : vector<16x256xf32>
    %334 = tpu.matmul %331, %333, %cst_188 {dimension_numbers = #tpu.dot_dimension_numbers<[1], [0], [0], [1], [0, 0, 1, 1], [], []>} : vector<16x256xbf16>, vector<256x256xbf16>, vector<16x256xf32> -> vector<16x256xf32>
    %335 = arith.addf %330, %334 : vector<16x256xf32>
    %c1_189 = arith.constant 1 : index
    %c0_190 = arith.constant 0 : index
    %c0_191 = arith.constant 0 : index
    %336 = vector.load %arg10[%c1_189, %c0_190, %c0_191] : memref<2x1x256xf32, #tpu.memory_space<vmem>>, vector<1x1x256xf32>
    %337 = vector.shape_cast %336 : vector<1x1x256xf32> to vector<1x256xf32>
    %338 = vector.broadcast %337 : vector<1x256xf32> to vector<16x256xf32>
    %339 = arith.addf %335, %338 : vector<16x256xf32>
    %340 = vector.extract_strided_slice %339 {offsets = [0, 0], sizes = [16, 128], strides = [1, 1]} : vector<16x256xf32> to vector<16x128xf32>
    %341 = vector.extract_strided_slice %339 {offsets = [0, 128], sizes = [16, 128], strides = [1, 1]} : vector<16x256xf32> to vector<16x128xf32>
    %342 = arith.negf %341 : vector<16x128xf32>
    %343 = math.exp %342 : vector<16x128xf32>
    %cst_192 = arith.constant 1.000000e+00 : f32
    %344 = vector.broadcast %cst_192 : f32 to vector<16x128xf32>
    %345 = arith.addf %344, %343 : vector<16x128xf32>
    %346 = arith.divf %344, %345 : vector<16x128xf32>
    %347 = arith.mulf %340, %346 : vector<16x128xf32>
    %348 = arith.addf %112, %347 : vector<16x128xf32>
    %c1_193 = arith.constant 1 : index
    %c0_194 = arith.constant 0 : index
    %c0_195 = arith.constant 0 : index
    %c0_196 = arith.constant 0 : index
    %349 = vector.load %arg4[%c1_193, %c0_194, %c0_195, %c0_196] : memref<2x1x16x128xf32, #tpu.memory_space<vmem>>, vector<1x1x16x128xf32>
    %350 = vector.shape_cast %349 : vector<1x1x16x128xf32> to vector<16x128xf32>
    %cst_197 = arith.constant 0.000000e+00 : f32
    %351 = vector.broadcast %cst_197 : f32 to vector<16x128xf32>
    %352 = arith.cmpf ogt, %348, %351 : vector<16x128xf32>
    %cst_198 = arith.constant 0.000000e+00 : f32
    %353 = vector.broadcast %cst_198 : f32 to vector<16x128xf32>
    %354 = arith.minimumf %348, %353 : vector<16x128xf32>
    %355 = math.exp %354 : vector<16x128xf32>
    %cst_199 = arith.constant 1.000000e+00 : f32
    %356 = vector.broadcast %cst_199 : f32 to vector<16x128xf32>
    %357 = arith.subf %355, %356 : vector<16x128xf32>
    %358 = arith.select %352, %348, %357 : vector<16x128xi1>, vector<16x128xf32>
    %cst_200 = arith.constant 0.000000e+00 : f32
    %359 = vector.broadcast %cst_200 : f32 to vector<16x128xf32>
    %360 = arith.cmpf ogt, %350, %359 : vector<16x128xf32>
    %cst_201 = arith.constant 0.000000e+00 : f32
    %361 = vector.broadcast %cst_201 : f32 to vector<16x128xf32>
    %362 = arith.minimumf %350, %361 : vector<16x128xf32>
    %363 = math.exp %362 : vector<16x128xf32>
    %cst_202 = arith.constant 1.000000e+00 : f32
    %364 = vector.broadcast %cst_202 : f32 to vector<16x128xf32>
    %365 = arith.subf %363, %364 : vector<16x128xf32>
    %366 = arith.select %360, %350, %365 : vector<16x128xi1>, vector<16x128xf32>
    %cst_203 = arith.constant 0.000000e+00 : f32
    %367 = vector.broadcast %cst_203 : f32 to vector<16x128xf32>
    %368 = arith.subf %367, %348 : vector<16x128xf32>
    %cst_204 = arith.constant 0.000000e+00 : f32
    %369 = vector.broadcast %cst_204 : f32 to vector<16x128xf32>
    %370 = arith.cmpf ogt, %368, %369 : vector<16x128xf32>
    %cst_205 = arith.constant 0.000000e+00 : f32
    %371 = vector.broadcast %cst_205 : f32 to vector<16x128xf32>
    %372 = arith.minimumf %368, %371 : vector<16x128xf32>
    %373 = math.exp %372 : vector<16x128xf32>
    %cst_206 = arith.constant 1.000000e+00 : f32
    %374 = vector.broadcast %cst_206 : f32 to vector<16x128xf32>
    %375 = arith.subf %373, %374 : vector<16x128xf32>
    %376 = arith.select %370, %368, %375 : vector<16x128xi1>, vector<16x128xf32>
    %cst_207 = arith.constant 0.000000e+00 : f32
    %377 = vector.broadcast %cst_207 : f32 to vector<16x128xf32>
    %378 = arith.subf %377, %350 : vector<16x128xf32>
    %cst_208 = arith.constant 0.000000e+00 : f32
    %379 = vector.broadcast %cst_208 : f32 to vector<16x128xf32>
    %380 = arith.cmpf ogt, %378, %379 : vector<16x128xf32>
    %cst_209 = arith.constant 0.000000e+00 : f32
    %381 = vector.broadcast %cst_209 : f32 to vector<16x128xf32>
    %382 = arith.minimumf %378, %381 : vector<16x128xf32>
    %383 = math.exp %382 : vector<16x128xf32>
    %cst_210 = arith.constant 1.000000e+00 : f32
    %384 = vector.broadcast %cst_210 : f32 to vector<16x128xf32>
    %385 = arith.subf %383, %384 : vector<16x128xf32>
    %386 = arith.select %380, %378, %385 : vector<16x128xi1>, vector<16x128xf32>
    %387 = tpu.concatenate %358, %366, %376, %386 in 1 : vector<16x128xf32>, vector<16x128xf32>, vector<16x128xf32>, vector<16x128xf32> -> vector<16x512xf32>
    %cst_211 = arith.constant 0.000000e+00 : f32
    %388 = vector.broadcast %cst_211 : f32 to vector<16x128xf32>
    %389 = arith.cmpf ogt, %239, %388 : vector<16x128xf32>
    %cst_212 = arith.constant 0.000000e+00 : f32
    %390 = vector.broadcast %cst_212 : f32 to vector<16x128xf32>
    %391 = arith.minimumf %239, %390 : vector<16x128xf32>
    %392 = math.exp %391 : vector<16x128xf32>
    %cst_213 = arith.constant 1.000000e+00 : f32
    %393 = vector.broadcast %cst_213 : f32 to vector<16x128xf32>
    %394 = arith.subf %392, %393 : vector<16x128xf32>
    %395 = arith.select %389, %239, %394 : vector<16x128xi1>, vector<16x128xf32>
    %cst_214 = arith.constant 0.000000e+00 : f32
    %396 = vector.broadcast %cst_214 : f32 to vector<16x128xf32>
    %397 = arith.subf %396, %239 : vector<16x128xf32>
    %cst_215 = arith.constant 0.000000e+00 : f32
    %398 = vector.broadcast %cst_215 : f32 to vector<16x128xf32>
    %399 = arith.cmpf ogt, %397, %398 : vector<16x128xf32>
    %cst_216 = arith.constant 0.000000e+00 : f32
    %400 = vector.broadcast %cst_216 : f32 to vector<16x128xf32>
    %401 = arith.minimumf %397, %400 : vector<16x128xf32>
    %402 = math.exp %401 : vector<16x128xf32>
    %cst_217 = arith.constant 1.000000e+00 : f32
    %403 = vector.broadcast %cst_217 : f32 to vector<16x128xf32>
    %404 = arith.subf %402, %403 : vector<16x128xf32>
    %405 = arith.select %399, %397, %404 : vector<16x128xi1>, vector<16x128xf32>
    %406 = tpu.concatenate %395, %405 in 1 : vector<16x128xf32>, vector<16x128xf32> -> vector<16x256xf32>
    %cst_218 = arith.constant 0.000000e+00 : f32
    %407 = vector.broadcast %cst_218 : f32 to vector<1x256xf32>
    %408 = vector.extract_strided_slice %406 {offsets = [0, 0], sizes = [15, 256], strides = [1, 1]} : vector<16x256xf32> to vector<15x256xf32>
    %409 = tpu.concatenate %407, %408 in 0 : vector<1x256xf32>, vector<15x256xf32> -> vector<16x256xf32>
    %410 = arith.truncf %409 : vector<16x256xf32> to vector<16x256xbf16>
    %c1_219 = arith.constant 1 : index
    %c0_220 = arith.constant 0 : index
    %c0_221 = arith.constant 0 : index
    %c0_222 = arith.constant 0 : index
    %411 = vector.load %arg11[%c1_219, %c0_220, %c0_221, %c0_222] : memref<2x2x256x128xbf16, #tpu.memory_space<vmem>>, vector<1x1x256x128xbf16>
    %412 = vector.shape_cast %411 : vector<1x1x256x128xbf16> to vector<256x128xbf16>
    %cst_223 = arith.constant dense<0.000000e+00> : vector<16x128xf32>
    %413 = tpu.matmul %410, %412, %cst_223 {dimension_numbers = #tpu.dot_dimension_numbers<[1], [0], [0], [1], [0, 0, 1, 1], [], []>} : vector<16x256xbf16>, vector<256x128xbf16>, vector<16x128xf32> -> vector<16x128xf32>
    %414 = arith.truncf %406 : vector<16x256xf32> to vector<16x256xbf16>
    %c1_224 = arith.constant 1 : index
    %c1_225 = arith.constant 1 : index
    %c0_226 = arith.constant 0 : index
    %c0_227 = arith.constant 0 : index
    %415 = vector.load %arg11[%c1_224, %c1_225, %c0_226, %c0_227] : memref<2x2x256x128xbf16, #tpu.memory_space<vmem>>, vector<1x1x256x128xbf16>
    %416 = vector.shape_cast %415 : vector<1x1x256x128xbf16> to vector<256x128xbf16>
    %cst_228 = arith.constant dense<0.000000e+00> : vector<16x128xf32>
    %417 = tpu.matmul %414, %416, %cst_228 {dimension_numbers = #tpu.dot_dimension_numbers<[1], [0], [0], [1], [0, 0, 1, 1], [], []>} : vector<16x256xbf16>, vector<256x128xbf16>, vector<16x128xf32> -> vector<16x128xf32>
    %418 = arith.addf %413, %417 : vector<16x128xf32>
    %c1_229 = arith.constant 1 : index
    %c0_230 = arith.constant 0 : index
    %c0_231 = arith.constant 0 : index
    %419 = vector.load %arg14[%c1_229, %c0_230, %c0_231] : memref<2x1x128xf32, #tpu.memory_space<vmem>>, vector<1x1x128xf32>
    %420 = vector.shape_cast %419 : vector<1x1x128xf32> to vector<1x128xf32>
    %421 = vector.broadcast %420 : vector<1x128xf32> to vector<16x128xf32>
    %422 = arith.addf %418, %421 : vector<16x128xf32>
    %423 = arith.truncf %387 : vector<16x512xf32> to vector<16x512xbf16>
    %c1_232 = arith.constant 1 : index
    %c0_233 = arith.constant 0 : index
    %c0_234 = arith.constant 0 : index
    %424 = vector.load %arg12[%c1_232, %c0_233, %c0_234] : memref<2x512x128xbf16, #tpu.memory_space<vmem>>, vector<1x512x128xbf16>
    %425 = vector.shape_cast %424 : vector<1x512x128xbf16> to vector<512x128xbf16>
    %cst_235 = arith.constant dense<0.000000e+00> : vector<16x128xf32>
    %426 = tpu.matmul %423, %425, %cst_235 {dimension_numbers = #tpu.dot_dimension_numbers<[1], [0], [0], [1], [0, 0, 1, 1], [], []>} : vector<16x512xbf16>, vector<512x128xbf16>, vector<16x128xf32> -> vector<16x128xf32>
    %427 = arith.addf %422, %426 : vector<16x128xf32>
    %c1_236 = arith.constant 1 : index
    %c0_237 = arith.constant 0 : index
    %c0_238 = arith.constant 0 : index
    %428 = vector.load %arg15[%c1_236, %c0_237, %c0_238] : memref<2x1x128xf32, #tpu.memory_space<vmem>>, vector<1x1x128xf32>
    %429 = vector.shape_cast %428 : vector<1x1x128xf32> to vector<1x128xf32>
    %430 = vector.broadcast %429 : vector<1x128xf32> to vector<16x128xf32>
    %431 = arith.addf %427, %430 : vector<16x128xf32>
    %cst_239 = arith.constant 0.000000e+00 : f32
    %432 = vector.broadcast %cst_239 : f32 to vector<16x128xf32>
    %433 = arith.cmpf ogt, %431, %432 : vector<16x128xf32>
    %cst_240 = arith.constant 0.000000e+00 : f32
    %434 = vector.broadcast %cst_240 : f32 to vector<16x128xf32>
    %435 = arith.minimumf %431, %434 : vector<16x128xf32>
    %436 = math.exp %435 : vector<16x128xf32>
    %cst_241 = arith.constant 1.000000e+00 : f32
    %437 = vector.broadcast %cst_241 : f32 to vector<16x128xf32>
    %438 = arith.subf %436, %437 : vector<16x128xf32>
    %439 = arith.select %433, %431, %438 : vector<16x128xi1>, vector<16x128xf32>
    %cst_242 = arith.constant 0.000000e+00 : f32
    %440 = vector.broadcast %cst_242 : f32 to vector<16x128xf32>
    %441 = arith.subf %440, %431 : vector<16x128xf32>
    %cst_243 = arith.constant 0.000000e+00 : f32
    %442 = vector.broadcast %cst_243 : f32 to vector<16x128xf32>
    %443 = arith.cmpf ogt, %441, %442 : vector<16x128xf32>
    %cst_244 = arith.constant 0.000000e+00 : f32
    %444 = vector.broadcast %cst_244 : f32 to vector<16x128xf32>
    %445 = arith.minimumf %441, %444 : vector<16x128xf32>
    %446 = math.exp %445 : vector<16x128xf32>
    %cst_245 = arith.constant 1.000000e+00 : f32
    %447 = vector.broadcast %cst_245 : f32 to vector<16x128xf32>
    %448 = arith.subf %446, %447 : vector<16x128xf32>
    %449 = arith.select %443, %441, %448 : vector<16x128xi1>, vector<16x128xf32>
    %450 = tpu.concatenate %439, %449 in 1 : vector<16x128xf32>, vector<16x128xf32> -> vector<16x256xf32>
    %cst_246 = arith.constant 0.000000e+00 : f32
    %451 = vector.broadcast %cst_246 : f32 to vector<1x256xf32>
    %452 = vector.extract_strided_slice %450 {offsets = [0, 0], sizes = [15, 256], strides = [1, 1]} : vector<16x256xf32> to vector<15x256xf32>
    %453 = tpu.concatenate %451, %452 in 0 : vector<1x256xf32>, vector<15x256xf32> -> vector<16x256xf32>
    %454 = arith.truncf %453 : vector<16x256xf32> to vector<16x256xbf16>
    %c1_247 = arith.constant 1 : index
    %c0_248 = arith.constant 0 : index
    %c0_249 = arith.constant 0 : index
    %c0_250 = arith.constant 0 : index
    %455 = vector.load %arg13[%c1_247, %c0_248, %c0_249, %c0_250] : memref<2x2x256x256xbf16, #tpu.memory_space<vmem>>, vector<1x1x256x256xbf16>
    %456 = vector.shape_cast %455 : vector<1x1x256x256xbf16> to vector<256x256xbf16>
    %cst_251 = arith.constant dense<0.000000e+00> : vector<16x256xf32>
    %457 = tpu.matmul %454, %456, %cst_251 {dimension_numbers = #tpu.dot_dimension_numbers<[1], [0], [0], [1], [0, 0, 1, 1], [], []>} : vector<16x256xbf16>, vector<256x256xbf16>, vector<16x256xf32> -> vector<16x256xf32>
    %458 = arith.truncf %450 : vector<16x256xf32> to vector<16x256xbf16>
    %c1_252 = arith.constant 1 : index
    %c1_253 = arith.constant 1 : index
    %c0_254 = arith.constant 0 : index
    %c0_255 = arith.constant 0 : index
    %459 = vector.load %arg13[%c1_252, %c1_253, %c0_254, %c0_255] : memref<2x2x256x256xbf16, #tpu.memory_space<vmem>>, vector<1x1x256x256xbf16>
    %460 = vector.shape_cast %459 : vector<1x1x256x256xbf16> to vector<256x256xbf16>
    %cst_256 = arith.constant dense<0.000000e+00> : vector<16x256xf32>
    %461 = tpu.matmul %458, %460, %cst_256 {dimension_numbers = #tpu.dot_dimension_numbers<[1], [0], [0], [1], [0, 0, 1, 1], [], []>} : vector<16x256xbf16>, vector<256x256xbf16>, vector<16x256xf32> -> vector<16x256xf32>
    %462 = arith.addf %457, %461 : vector<16x256xf32>
    %c1_257 = arith.constant 1 : index
    %c0_258 = arith.constant 0 : index
    %c0_259 = arith.constant 0 : index
    %463 = vector.load %arg16[%c1_257, %c0_258, %c0_259] : memref<2x1x256xf32, #tpu.memory_space<vmem>>, vector<1x1x256xf32>
    %464 = vector.shape_cast %463 : vector<1x1x256xf32> to vector<1x256xf32>
    %465 = vector.broadcast %464 : vector<1x256xf32> to vector<16x256xf32>
    %466 = arith.addf %462, %465 : vector<16x256xf32>
    %467 = vector.extract_strided_slice %466 {offsets = [0, 0], sizes = [16, 128], strides = [1, 1]} : vector<16x256xf32> to vector<16x128xf32>
    %468 = vector.extract_strided_slice %466 {offsets = [0, 128], sizes = [16, 128], strides = [1, 1]} : vector<16x256xf32> to vector<16x128xf32>
    %469 = arith.negf %468 : vector<16x128xf32>
    %470 = math.exp %469 : vector<16x128xf32>
    %cst_260 = arith.constant 1.000000e+00 : f32
    %471 = vector.broadcast %cst_260 : f32 to vector<16x128xf32>
    %472 = arith.addf %471, %470 : vector<16x128xf32>
    %473 = arith.divf %471, %472 : vector<16x128xf32>
    %474 = arith.mulf %467, %473 : vector<16x128xf32>
    %475 = arith.addf %239, %474 : vector<16x128xf32>
    %c0_261 = arith.constant 0 : index
    %c0_262 = arith.constant 0 : index
    %c0_263 = arith.constant 0 : index
    %476 = vector.load %arg17[%c0_261, %c0_262, %c0_263] : memref<1x16x128xf32, #tpu.memory_space<vmem>>, vector<1x16x128xf32>
    %477 = vector.shape_cast %476 : vector<1x16x128xf32> to vector<16x128xf32>
    %478 = vector.shape_cast %348 : vector<16x128xf32> to vector<1x16x128xf32>
    tpu.vector_store %arg17[%c0_261, %c0_262, %c0_263], %478 {strides = array<i32>} : memref<1x16x128xf32, #tpu.memory_space<vmem>>, vector<1x16x128xf32>,
    %c0_264 = arith.constant 0 : index
    %c0_265 = arith.constant 0 : index
    %c0_266 = arith.constant 0 : index
    %479 = vector.load %arg18[%c0_264, %c0_265, %c0_266] : memref<1x16x128xf32, #tpu.memory_space<vmem>>, vector<1x16x128xf32>
    %480 = vector.shape_cast %479 : vector<1x16x128xf32> to vector<16x128xf32>
    %481 = vector.shape_cast %475 : vector<16x128xf32> to vector<1x16x128xf32>
    tpu.vector_store %arg18[%c0_264, %c0_265, %c0_266], %481 {strides = array<i32>} : memref<1x16x128xf32, #tpu.memory_space<vmem>>, vector<1x16x128xf32>,
    return
  }
  func.func @transform_0(%arg0: i32) -> (i32, i32, i32) {
    %c0_i32 = arith.constant 0 : i32
    %c0_i32_0 = arith.constant 0 : i32
    %c0_i32_1 = arith.constant 0 : i32
    return %arg0, %c0_i32, %c0_i32_0 : i32, i32, i32
  }
  func.func @transform_1(%arg0: i32) -> (i32, i32, i32) {
    %c0_i32 = arith.constant 0 : i32
    %c0_i32_0 = arith.constant 0 : i32
    %c0_i32_1 = arith.constant 0 : i32
    return %arg0, %c0_i32, %c0_i32_0 : i32, i32, i32
  }
  func.func @transform_2(%arg0: i32) -> (i32, i32, i32, i32) {
    %c0_i32 = arith.constant 0 : i32
    %c0_i32_0 = arith.constant 0 : i32
    %c0_i32_1 = arith.constant 0 : i32
    %c0_i32_2 = arith.constant 0 : i32
    return %c0_i32, %arg0, %c0_i32_0, %c0_i32_1 : i32, i32, i32, i32
  }
  func.func @transform_3(%arg0: i32) -> (i32, i32, i32, i32) {
    %c0_i32 = arith.constant 0 : i32
    %c0_i32_0 = arith.constant 0 : i32
    %c0_i32_1 = arith.constant 0 : i32
    %c0_i32_2 = arith.constant 0 : i32
    return %c0_i32, %arg0, %c0_i32_0, %c0_i32_1 : i32, i32, i32, i32
  }
  func.func @transform_4(%arg0: i32) -> (i32, i32, i32, i32) {
    %c0_i32 = arith.constant 0 : i32
    %c0_i32_0 = arith.constant 0 : i32
    %c0_i32_1 = arith.constant 0 : i32
    %c0_i32_2 = arith.constant 0 : i32
    %c0_i32_3 = arith.constant 0 : i32
    return %c0_i32, %c0_i32_0, %c0_i32_1, %c0_i32_2 : i32, i32, i32, i32
  }
  func.func @transform_5(%arg0: i32) -> (i32, i32, i32) {
    %c0_i32 = arith.constant 0 : i32
    %c0_i32_0 = arith.constant 0 : i32
    %c0_i32_1 = arith.constant 0 : i32
    %c0_i32_2 = arith.constant 0 : i32
    return %c0_i32, %c0_i32_0, %c0_i32_1 : i32, i32, i32
  }
  func.func @transform_6(%arg0: i32) -> (i32, i32, i32, i32) {
    %c0_i32 = arith.constant 0 : i32
    %c0_i32_0 = arith.constant 0 : i32
    %c0_i32_1 = arith.constant 0 : i32
    %c0_i32_2 = arith.constant 0 : i32
    %c0_i32_3 = arith.constant 0 : i32
    return %c0_i32, %c0_i32_0, %c0_i32_1, %c0_i32_2 : i32, i32, i32, i32
  }
  func.func @transform_7(%arg0: i32) -> (i32, i32, i32) {
    %c0_i32 = arith.constant 0 : i32
    %c0_i32_0 = arith.constant 0 : i32
    %c0_i32_1 = arith.constant 0 : i32
    %c0_i32_2 = arith.constant 0 : i32
    return %c0_i32, %c0_i32_0, %c0_i32_1 : i32, i32, i32
  }
  func.func @transform_8(%arg0: i32) -> (i32, i32, i32) {
    %c0_i32 = arith.constant 0 : i32
    %c0_i32_0 = arith.constant 0 : i32
    %c0_i32_1 = arith.constant 0 : i32
    %c0_i32_2 = arith.constant 0 : i32
    return %c0_i32, %c0_i32_0, %c0_i32_1 : i32, i32, i32
  }
  func.func @transform_9(%arg0: i32) -> (i32, i32, i32) {
    %c0_i32 = arith.constant 0 : i32
    %c0_i32_0 = arith.constant 0 : i32
    %c0_i32_1 = arith.constant 0 : i32
    %c0_i32_2 = arith.constant 0 : i32
    return %c0_i32, %c0_i32_0, %c0_i32_1 : i32, i32, i32
  }
  func.func @transform_10(%arg0: i32) -> (i32, i32, i32, i32) {
    %c0_i32 = arith.constant 0 : i32
    %c0_i32_0 = arith.constant 0 : i32
    %c0_i32_1 = arith.constant 0 : i32
    %c0_i32_2 = arith.constant 0 : i32
    %c0_i32_3 = arith.constant 0 : i32
    return %c0_i32, %c0_i32_0, %c0_i32_1, %c0_i32_2 : i32, i32, i32, i32
  }
  func.func @transform_11(%arg0: i32) -> (i32, i32, i32) {
    %c0_i32 = arith.constant 0 : i32
    %c0_i32_0 = arith.constant 0 : i32
    %c0_i32_1 = arith.constant 0 : i32
    %c0_i32_2 = arith.constant 0 : i32
    return %c0_i32, %c0_i32_0, %c0_i32_1 : i32, i32, i32
  }
  func.func @transform_12(%arg0: i32) -> (i32, i32, i32, i32) {
    %c0_i32 = arith.constant 0 : i32
    %c0_i32_0 = arith.constant 0 : i32
    %c0_i32_1 = arith.constant 0 : i32
    %c0_i32_2 = arith.constant 0 : i32
    %c0_i32_3 = arith.constant 0 : i32
    return %c0_i32, %c0_i32_0, %c0_i32_1, %c0_i32_2 : i32, i32, i32, i32
  }
  func.func @transform_13(%arg0: i32) -> (i32, i32, i32) {
    %c0_i32 = arith.constant 0 : i32
    %c0_i32_0 = arith.constant 0 : i32
    %c0_i32_1 = arith.constant 0 : i32
    %c0_i32_2 = arith.constant 0 : i32
    return %c0_i32, %c0_i32_0, %c0_i32_1 : i32, i32, i32
  }
  func.func @transform_14(%arg0: i32) -> (i32, i32, i32) {
    %c0_i32 = arith.constant 0 : i32
    %c0_i32_0 = arith.constant 0 : i32
    %c0_i32_1 = arith.constant 0 : i32
    %c0_i32_2 = arith.constant 0 : i32
    return %c0_i32, %c0_i32_0, %c0_i32_1 : i32, i32, i32
  }
  func.func @transform_15(%arg0: i32) -> (i32, i32, i32) {
    %c0_i32 = arith.constant 0 : i32
    %c0_i32_0 = arith.constant 0 : i32
    %c0_i32_1 = arith.constant 0 : i32
    %c0_i32_2 = arith.constant 0 : i32
    return %c0_i32, %c0_i32_0, %c0_i32_1 : i32, i32, i32
  }
  func.func @transform_16(%arg0: i32) -> (i32, i32, i32) {
    %c0_i32 = arith.constant 0 : i32
    %c0_i32_0 = arith.constant 0 : i32
    %c0_i32_1 = arith.constant 0 : i32
    return %arg0, %c0_i32, %c0_i32_0 : i32, i32, i32
  }
  func.func @transform_17(%arg0: i32) -> (i32, i32, i32) {
    %c0_i32 = arith.constant 0 : i32
    %c0_i32_0 = arith.constant 0 : i32
    %c0_i32_1 = arith.constant 0 : i32
    return %arg0, %c0_i32, %c0_i32_0 : i32, i32, i32
  }
}

</mosaic_0001>

<llo_original>
// kernel: tpu_custom_call.1
$region0: #{tpu_custom_call.1}
  #allocation0 [shape = 'u32[]', space=smem, size = 0x4, offset = 0x4, fixed_abs, tag = 'smem constant byte address 0x4 - core index']
  #allocation1 [shape = 'u32[144,128]{1,0:T(1,128)}', space=vmem, size = 0x12000, scoped, tag = 'internal scratch']
  #allocation22 [shape = 's32[]', space=sflag, size = 0x4, offset = 0, fixed_abs, tag = 'sflag constant byte address 0x0 - dummy sync flag']
  #allocation24 [shape = 's32[]', space=sflag, size = 0x4, offset = 0, fixed_abs, tag = 'sflag constant byte address 0x0 - dummy sync flag']
  %s0 = inlined_call_operand.hbm [shape: f32[2,16,128], index: 0, kind: input, shape index: {}]
  %s1 = inlined_call_operand.hbm [shape: f32[2,16,128], index: 1, kind: input, shape index: {}]
  %s2 = inlined_call_operand.hbm [shape: f32[2,2,16,128], index: 2, kind: input, shape index: {}]
  %s3 = inlined_call_operand.hbm [shape: f32[2,2,16,128], index: 3, kind: input, shape index: {}]
  %s4 = inlined_call_operand.hbm [shape: bf16[2,2,256,128], index: 4, kind: input, shape index: {}]
  %s5 = inlined_call_operand.hbm [shape: bf16[2,256,128], index: 5, kind: input, shape index: {}]
  %s6 = inlined_call_operand.hbm [shape: bf16[2,2,256,256], index: 6, kind: input, shape index: {}]
  %s7 = inlined_call_operand.vmem [shape: f32[2,1,128], index: 7, kind: input, shape index: {}]
  %s8 = inlined_call_operand.vmem [shape: f32[2,1,128], index: 8, kind: input, shape index: {}]
  %s9 = inlined_call_operand.vmem [shape: f32[2,1,256], index: 9, kind: input, shape index: {}]
  %s10 = inlined_call_operand.hbm [shape: bf16[2,2,256,128], index: 10, kind: input, shape index: {}]
  %s11 = inlined_call_operand.hbm [shape: bf16[2,512,128], index: 11, kind: input, shape index: {}]
  %s12 = inlined_call_operand.hbm [shape: bf16[2,2,256,256], index: 12, kind: input, shape index: {}]
  %s13 = inlined_call_operand.vmem [shape: f32[2,1,128], index: 13, kind: input, shape index: {}]
  %s14 = inlined_call_operand.vmem [shape: f32[2,1,128], index: 14, kind: input, shape index: {}]
  %s15 = inlined_call_operand.vmem [shape: f32[2,1,256], index: 15, kind: input, shape index: {}]
  %s16 = inlined_call_operand.hbm [shape: f32[2,16,128], index: 16, kind: output, shape index: {0}]
  %s17 = inlined_call_operand.hbm [shape: f32[2,16,128], index: 17, kind: output, shape index: {1}]
  %18 = xla_tuple %s16, %s17
  %s19 = sld [smem:[#allocation0]]
  $region145: #{tpu_custom_call.1} parent=0
    _
  %s21 = ssub.s32 1, %s19
  %s22 = scalar_select 0, %s21, %s19
  $region1: #{tpu_custom_call.1} parent=0
    #allocation2 [shape = 'u8[16384]{0}', space=vmem, size = 0x4000, scoped, tag = 'input window, operand 0']
    #allocation3 [shape = 's32[2]{0}', space=sflag, size = 0x8, scoped, tag = 'scoped memory for tpu_custom_call.1']
    #allocation4 [shape = 's32[2]{0}', space=sflag, size = 0x8, scoped, tag = 'scoped memory for tpu_custom_call.1']
    #allocation5 [shape = 'u8[16384]{0}', space=vmem, size = 0x4000, scoped, tag = 'input window, operand 1']
    #allocation6 [shape = 's32[2]{0}', space=sflag, size = 0x8, scoped, tag = 'scoped memory for tpu_custom_call.1']
    #allocation7 [shape = 'u8[32768]{0}', space=vmem, size = 0x8000, scoped, tag = 'input window, operand 2']
    #allocation8 [shape = 'u8[32768]{0}', space=vmem, size = 0x8000, scoped, tag = 'input window, operand 3']
    #allocation9 [shape = 's32[2]{0}', space=sflag, size = 0x8, scoped, tag = 'scoped memory for tpu_custom_call.1']
    #allocation10 [shape = 'u8[262144]{0}', space=vmem, size = 0x40000, scoped, tag = 'input window, operand 4, single buffered']
    #allocation11 [shape = 'u8[131072]{0}', space=vmem, size = 0x20000, scoped, tag = 'input window, operand 5, single buffered']
    #allocation12 [shape = 's32[1]{0}', space=sflag, size = 0x4, scoped, tag = 'scoped memory for tpu_custom_call.1']
    #allocation13 [shape = 'u8[524288]{0}', space=vmem, size = 0x80000, scoped, tag = 'input window, operand 6, single buffered']
    #allocation14 [shape = 'u8[262144]{0}', space=vmem, size = 0x40000, scoped, tag = 'input window, operand 10, single buffered']
    #allocation15 [shape = 's32[1]{0}', space=sflag, size = 0x4, scoped, tag = 'scoped memory for tpu_custom_call.1']
    #allocation16 [shape = 'u8[262144]{0}', space=vmem, size = 0x40000, scoped, tag = 'input window, operand 11, single buffered']
    #allocation17 [shape = 'u8[524288]{0}', space=vmem, size = 0x80000, scoped, tag = 'input window, operand 12, single buffered']
    #allocation18 [shape = 's32[1]{0}', space=sflag, size = 0x4, scoped, tag = 'scoped memory for tpu_custom_call.1']
    #allocation19 [shape = 'u8[16384]{0}', space=vmem, size = 0x4000, scoped, tag = 'output window, operand 0']
    #allocation20 [shape = 'u8[16384]{0}', space=vmem, size = 0x4000, scoped, tag = 'output window, operand 1']
    #allocation21 [shape = 's32[2]{0}', space=sflag, size = 0x8, scoped, tag = 'scoped memory for tpu_custom_call.1']
    %23 = vsyncpa [#allocation3], 0
    %s24 = scalar_lea.sflag [#allocation3], 1
    %25 = vsyncpa %s24, 0
    %26 = vsyncpa [#allocation6], 0
    %s27 = scalar_lea.sflag [#allocation6], 1
    %28 = vsyncpa %s27, 0
    %29 = vsyncpa [#allocation9], 0
    %s30 = scalar_lea.sflag [#allocation9], 1
    %31 = vsyncpa %s30, 0
    %32 = vsyncpa [#allocation12], 0
    %33 = vsyncpa [#allocation15], 0
    %34 = vsyncpa [#allocation18], 0
    %35 = vsyncpa [#allocation4], 0
    %s36 = scalar_lea.sflag [#allocation4], 1
    %37 = vsyncpa %s36, 0
    %38 = vsyncpa [#allocation21], 0
    %s39 = scalar_lea.sflag [#allocation21], 1
    %40 = vsyncpa %s39, 0
    loop: start=0, step=1, limit=4
    $region2: #{tpu_custom_call.1} parent=1 // loop_pre_header
      _
    $region3: #{tpu_custom_call.1} parent=1 // loop_header
      %s42 = sphi 0, %s46
      %p43 = scmp.ge.s32.totalorder %s42, 4
      %s52 = sphi 0, %s54
      %s55 = sphi 0, %s52
      %s56 = sphi 0, %s55
      %s72 = sphi 0, %s56
      %s78 = sphi 0, %s80
      %s81 = sphi 0, %s78
      %s82 = sphi 0, %s81
      %s98 = sphi 0, %s82
      %s104 = sphi 0, %s106
      %s107 = sphi 0, %s104
      %s108 = sphi 0, %s107
      %s124 = sphi 0, %s108
      %s130 = sphi 0, %s132
      %s133 = sphi 0, %s130
      %s134 = sphi 0, %s133
      %s150 = sphi 0, %s134
      %s154 = sphi 0, %s154
      %s156 = sphi 0, %s154
      %s157 = sphi 0, %s156
      %s171 = sphi 0, %s157
      %s175 = sphi 0, %s175
      %s177 = sphi 0, %s175
      %s178 = sphi 0, %s177
      %s192 = sphi 0, %s178
      %s196 = sphi 0, %s196
      %s198 = sphi 0, %s196
      %s199 = sphi 0, %s198
      %s213 = sphi 0, %s199
      %s217 = sphi 0, %s217
      %s219 = sphi 0, %s217
      %s220 = sphi 0, %s219
      %s234 = sphi 0, %s220
      %s238 = sphi 0, %s238
      %s240 = sphi 0, %s238
      %s241 = sphi 0, %s240
      %s255 = sphi 0, %s241
      %s259 = sphi 0, %s259
      %s261 = sphi 0, %s259
      %s262 = sphi 0, %s261
      %s276 = sphi 0, %s262
      %s280 = sphi 0, %s280
      %s282 = sphi 0, %s280
      %s283 = sphi 0, %s282
      %s297 = sphi 0, %s283
      %s301 = sphi 0, %s301
      %s303 = sphi 0, %s301
      %s304 = sphi 0, %s303
      %s318 = sphi 0, %s304
      %s322 = sphi 0, %s322
      %s324 = sphi 0, %s322
      %s325 = sphi 0, %s324
      %s339 = sphi 0, %s325
      %s343 = sphi 0, %s343
      %s345 = sphi 0, %s343
      %s346 = sphi 0, %s345
      %s360 = sphi 0, %s346
      %s364 = sphi 0, %s364
      %s366 = sphi 0, %s364
      %s367 = sphi 0, %s366
      %s381 = sphi 0, %s367
      %s385 = sphi 0, %s385
      %s387 = sphi 0, %s385
      %s388 = sphi 0, %s387
      %s402 = sphi 0, %s388
      %s408 = sphi 0, %s410
      %s411 = sphi 0, %s408
      %s412 = sphi 0, %s411
      %s428 = sphi 0, %s412
      %s434 = sphi 0, %s436
      %s437 = sphi 0, %s434
      %s438 = sphi 0, %s437
      %s454 = sphi 0, %s438
    $region4: #{tpu_custom_call.1} parent=1 // loop_header_branch
      %45 = sbr.rel (%p43) target = $region8
    $region5: #{tpu_custom_call.1} parent=1 // loop_body
      %s47 = ssub.s32 %s42, 1
      %s48 = ssub.s32 %s42, 2
      %s49 = sadd.s32 %s42, 1
      %s50 = ssub.s32 %s42, %s49
      %p51 = scmp.eq.s32.totalorder %s50, 0
      %s53 = sadd.s32 %s52, 1
      %s54 = scalar_select %p51, %s52, %s53
      %p57 = pneg %p51
      %p58 = scmp.eq.s32.totalorder %s42, 1
      %p59 = por %p57, %p58
      %p60 = scmp.ne.s32.totalorder %s52, %s55
      %p61 = scmp.eq.s32.totalorder %s42, 0
      %p62 = por %p60, %p61
      %p63 = scmp.ne.s32.totalorder %s52, %s55
      %p64 = scmp.eq.s32.totalorder %s47, 1
      %p65 = por %p63, %p64
      %p66 = scmp.ne.s32.totalorder %s55, %s56
      %p67 = scmp.eq.s32.totalorder %s47, 0
      %p68 = por %p66, %p67
      %p69 = scmp.ne.s32.totalorder %s55, %s56
      %p70 = scmp.eq.s32.totalorder %s48, 1
      %p71 = por %p69, %p70
      %p73 = scmp.ne.s32.totalorder %s56, %s72
      %p74 = scmp.eq.s32.totalorder %s48, 0
      %p75 = por %p73, %p74
      %s76 = ssub.s32 %s42, %s49
      %p77 = scmp.eq.s32.totalorder %s76, 0
      %s79 = sadd.s32 %s78, 1
      %s80 = scalar_select %p77, %s78, %s79
      %p83 = pneg %p77
      %p84 = scmp.eq.s32.totalorder %s42, 1
      %p85 = por %p83, %p84
      %p86 = scmp.ne.s32.totalorder %s78, %s81
      %p87 = scmp.eq.s32.totalorder %s42, 0
      %p88 = por %p86, %p87
      %p89 = scmp.ne.s32.totalorder %s78, %s81
      %p90 = scmp.eq.s32.totalorder %s47, 1
      %p91 = por %p89, %p90
      %p92 = scmp.ne.s32.totalorder %s81, %s82
      %p93 = scmp.eq.s32.totalorder %s47, 0
      %p94 = por %p92, %p93
      %p95 = scmp.ne.s32.totalorder %s81, %s82
      %p96 = scmp.eq.s32.totalorder %s48, 1
      %p97 = por %p95, %p96
      %p99 = scmp.ne.s32.totalorder %s82, %s98
      %p100 = scmp.eq.s32.totalorder %s48, 0
      %p101 = por %p99, %p100
      %s102 = ssub.s32 %s42, %s49
      %p103 = scmp.eq.s32.totalorder %s102, 0
      %s105 = sadd.s32 %s104, 1
      %s106 = scalar_select %p103, %s104, %s105
      %p109 = pneg %p103
      %p110 = scmp.eq.s32.totalorder %s42, 1
      %p111 = por %p109, %p110
      %p112 = scmp.ne.s32.totalorder %s104, %s107
      %p113 = scmp.eq.s32.totalorder %s42, 0
      %p114 = por %p112, %p113
      %p115 = scmp.ne.s32.totalorder %s104, %s107
      %p116 = scmp.eq.s32.totalorder %s47, 1
      %p117 = por %p115, %p116
      %p118 = scmp.ne.s32.totalorder %s107, %s108
      %p119 = scmp.eq.s32.totalorder %s47, 0
      %p120 = por %p118, %p119
      %p121 = scmp.ne.s32.totalorder %s107, %s108
      %p122 = scmp.eq.s32.totalorder %s48, 1
      %p123 = por %p121, %p122
      %p125 = scmp.ne.s32.totalorder %s108, %s124
      %p126 = scmp.eq.s32.totalorder %s48, 0
      %p127 = por %p125, %p126
      %s128 = ssub.s32 %s42, %s49
      %p129 = scmp.eq.s32.totalorder %s128, 0
      %s131 = sadd.s32 %s130, 1
      %s132 = scalar_select %p129, %s130, %s131
      %p135 = pneg %p129
      %p136 = scmp.eq.s32.totalorder %s42, 1
      %p137 = por %p135, %p136
      %p138 = scmp.ne.s32.totalorder %s130, %s133
      %p139 = scmp.eq.s32.totalorder %s42, 0
      %p140 = por %p138, %p139
      %p141 = scmp.ne.s32.totalorder %s130, %s133
      %p142 = scmp.eq.s32.totalorder %s47, 1
      %p143 = por %p141, %p142
      %p144 = scmp.ne.s32.totalorder %s133, %s134
      %p145 = scmp.eq.s32.totalorder %s47, 0
      %p146 = por %p144, %p145
      %p147 = scmp.ne.s32.totalorder %s133, %s134
      %p148 = scmp.eq.s32.totalorder %s48, 1
      %p149 = por %p147, %p148
      %p151 = scmp.ne.s32.totalorder %s134, %s150
      %p152 = scmp.eq.s32.totalorder %s48, 0
      %p153 = por %p151, %p152
      %s155 = sadd.s32 %s154, 1
      %p158 = scmp.eq.s32.totalorder %s42, 1
      %p159 = scmp.ne.s32.totalorder %s154, %s156
      %p160 = scmp.eq.s32.totalorder %s42, 0
      %p161 = por %p159, %p160
      %p162 = scmp.ne.s32.totalorder %s154, %s156
      %p163 = scmp.eq.s32.totalorder %s47, 1
      %p164 = por %p162, %p163
      %p165 = scmp.ne.s32.totalorder %s156, %s157
      %p166 = scmp.eq.s32.totalorder %s47, 0
      %p167 = por %p165, %p166
      %p168 = scmp.ne.s32.totalorder %s156, %s157
      %p169 = scmp.eq.s32.totalorder %s48, 1
      %p170 = por %p168, %p169
      %p172 = scmp.ne.s32.totalorder %s157, %s171
      %p173 = scmp.eq.s32.totalorder %s48, 0
      %p174 = por %p172, %p173
      %s176 = sadd.s32 %s175, 1
      %p179 = scmp.eq.s32.totalorder %s42, 1
      %p180 = scmp.ne.s32.totalorder %s175, %s177
      %p181 = scmp.eq.s32.totalorder %s42, 0
      %p182 = por %p180, %p181
      %p183 = scmp.ne.s32.totalorder %s175, %s177
      %p184 = scmp.eq.s32.totalorder %s47, 1
      %p185 = por %p183, %p184
      %p186 = scmp.ne.s32.totalorder %s177, %s178
      %p187 = scmp.eq.s32.totalorder %s47, 0
      %p188 = por %p186, %p187
      %p189 = scmp.ne.s32.totalorder %s177, %s178
      %p190 = scmp.eq.s32.totalorder %s48, 1
      %p191 = por %p189, %p190
      %p193 = scmp.ne.s32.totalorder %s178, %s192
      %p194 = scmp.eq.s32.totalorder %s48, 0
      %p195 = por %p193, %p194
      %s197 = sadd.s32 %s196, 1
      %p200 = scmp.eq.s32.totalorder %s42, 1
      %p201 = scmp.ne.s32.totalorder %s196, %s198
      %p202 = scmp.eq.s32.totalorder %s42, 0
      %p203 = por %p201, %p202
      %p204 = scmp.ne.s32.totalorder %s196, %s198
      %p205 = scmp.eq.s32.totalorder %s47, 1
      %p206 = por %p204, %p205
      %p207 = scmp.ne.s32.totalorder %s198, %s199
      %p208 = scmp.eq.s32.totalorder %s47, 0
      %p209 = por %p207, %p208
      %p210 = scmp.ne.s32.totalorder %s198, %s199
      %p211 = scmp.eq.s32.totalorder %s48, 1
      %p212 = por %p210, %p211
      %p214 = scmp.ne.s32.totalorder %s199, %s213
      %p215 = scmp.eq.s32.totalorder %s48, 0
      %p216 = por %p214, %p215
      %s218 = sadd.s32 %s217, 1
      %p221 = scmp.eq.s32.totalorder %s42, 1
      %p222 = scmp.ne.s32.totalorder %s217, %s219
      %p223 = scmp.eq.s32.totalorder %s42, 0
      %p224 = por %p222, %p223
      %p225 = scmp.ne.s32.totalorder %s217, %s219
      %p226 = scmp.eq.s32.totalorder %s47, 1
      %p227 = por %p225, %p226
      %p228 = scmp.ne.s32.totalorder %s219, %s220
      %p229 = scmp.eq.s32.totalorder %s47, 0
      %p230 = por %p228, %p229
      %p231 = scmp.ne.s32.totalorder %s219, %s220
      %p232 = scmp.eq.s32.totalorder %s48, 1
      %p233 = por %p231, %p232
      %p235 = scmp.ne.s32.totalorder %s220, %s234
      %p236 = scmp.eq.s32.totalorder %s48, 0
      %p237 = por %p235, %p236
      %s239 = sadd.s32 %s238, 1
      %p242 = scmp.eq.s32.totalorder %s42, 1
      %p243 = scmp.ne.s32.totalorder %s238, %s240
      %p244 = scmp.eq.s32.totalorder %s42, 0
      %p245 = por %p243, %p244
      %p246 = scmp.ne.s32.totalorder %s238, %s240
      %p247 = scmp.eq.s32.totalorder %s47, 1
      %p248 = por %p246, %p247
      %p249 = scmp.ne.s32.totalorder %s240, %s241
      %p250 = scmp.eq.s32.totalorder %s47, 0
      %p251 = por %p249, %p250
      %p252 = scmp.ne.s32.totalorder %s240, %s241
      %p253 = scmp.eq.s32.totalorder %s48, 1
      %p254 = por %p252, %p253
      %p256 = scmp.ne.s32.totalorder %s241, %s255
      %p257 = scmp.eq.s32.totalorder %s48, 0
      %p258 = por %p256, %p257
      %s260 = sadd.s32 %s259, 1
      %p263 = scmp.eq.s32.totalorder %s42, 1
      %p264 = scmp.ne.s32.totalorder %s259, %s261
      %p265 = scmp.eq.s32.totalorder %s42, 0
      %p266 = por %p264, %p265
      %p267 = scmp.ne.s32.totalorder %s259, %s261
      %p268 = scmp.eq.s32.totalorder %s47, 1
      %p269 = por %p267, %p268
      %p270 = scmp.ne.s32.totalorder %s261, %s262
      %p271 = scmp.eq.s32.totalorder %s47, 0
      %p272 = por %p270, %p271
      %p273 = scmp.ne.s32.totalorder %s261, %s262
      %p274 = scmp.eq.s32.totalorder %s48, 1
      %p275 = por %p273, %p274
      %p277 = scmp.ne.s32.totalorder %s262, %s276
      %p278 = scmp.eq.s32.totalorder %s48, 0
      %p279 = por %p277, %p278
      %s281 = sadd.s32 %s280, 1
      %p284 = scmp.eq.s32.totalorder %s42, 1
      %p285 = scmp.ne.s32.totalorder %s280, %s282
      %p286 = scmp.eq.s32.totalorder %s42, 0
      %p287 = por %p285, %p286
      %p288 = scmp.ne.s32.totalorder %s280, %s282
      %p289 = scmp.eq.s32.totalorder %s47, 1
      %p290 = por %p288, %p289
      %p291 = scmp.ne.s32.totalorder %s282, %s283
      %p292 = scmp.eq.s32.totalorder %s47, 0
      %p293 = por %p291, %p292
      %p294 = scmp.ne.s32.totalorder %s282, %s283
      %p295 = scmp.eq.s32.totalorder %s48, 1
      %p296 = por %p294, %p295
      %p298 = scmp.ne.s32.totalorder %s283, %s297
      %p299 = scmp.eq.s32.totalorder %s48, 0
      %p300 = por %p298, %p299
      %s302 = sadd.s32 %s301, 1
      %p305 = scmp.eq.s32.totalorder %s42, 1
      %p306 = scmp.ne.s32.totalorder %s301, %s303
      %p307 = scmp.eq.s32.totalorder %s42, 0
      %p308 = por %p306, %p307
      %p309 = scmp.ne.s32.totalorder %s301, %s303
      %p310 = scmp.eq.s32.totalorder %s47, 1
      %p311 = por %p309, %p310
      %p312 = scmp.ne.s32.totalorder %s303, %s304
      %p313 = scmp.eq.s32.totalorder %s47, 0
      %p314 = por %p312, %p313
      %p315 = scmp.ne.s32.totalorder %s303, %s304
      %p316 = scmp.eq.s32.totalorder %s48, 1
      %p317 = por %p315, %p316
      %p319 = scmp.ne.s32.totalorder %s304, %s318
      %p320 = scmp.eq.s32.totalorder %s48, 0
      %p321 = por %p319, %p320
      %s323 = sadd.s32 %s322, 1
      %p326 = scmp.eq.s32.totalorder %s42, 1
      %p327 = scmp.ne.s32.totalorder %s322, %s324
      %p328 = scmp.eq.s32.totalorder %s42, 0
      %p329 = por %p327, %p328
      %p330 = scmp.ne.s32.totalorder %s322, %s324
      %p331 = scmp.eq.s32.totalorder %s47, 1
      %p332 = por %p330, %p331
      %p333 = scmp.ne.s32.totalorder %s324, %s325
      %p334 = scmp.eq.s32.totalorder %s47, 0
      %p335 = por %p333, %p334
      %p336 = scmp.ne.s32.totalorder %s324, %s325
      %p337 = scmp.eq.s32.totalorder %s48, 1
      %p338 = por %p336, %p337
      %p340 = scmp.ne.s32.totalorder %s325, %s339
      %p341 = scmp.eq.s32.totalorder %s48, 0
      %p342 = por %p340, %p341
      %s344 = sadd.s32 %s343, 1
      %p347 = scmp.eq.s32.totalorder %s42, 1
      %p348 = scmp.ne.s32.totalorder %s343, %s345
      %p349 = scmp.eq.s32.totalorder %s42, 0
      %p350 = por %p348, %p349
      %p351 = scmp.ne.s32.totalorder %s343, %s345
      %p352 = scmp.eq.s32.totalorder %s47, 1
      %p353 = por %p351, %p352
      %p354 = scmp.ne.s32.totalorder %s345, %s346
      %p355 = scmp.eq.s32.totalorder %s47, 0
      %p356 = por %p354, %p355
      %p357 = scmp.ne.s32.totalorder %s345, %s346
      %p358 = scmp.eq.s32.totalorder %s48, 1
      %p359 = por %p357, %p358
      %p361 = scmp.ne.s32.totalorder %s346, %s360
      %p362 = scmp.eq.s32.totalorder %s48, 0
      %p363 = por %p361, %p362
      %s365 = sadd.s32 %s364, 1
      %p368 = scmp.eq.s32.totalorder %s42, 1
      %p369 = scmp.ne.s32.totalorder %s364, %s366
      %p370 = scmp.eq.s32.totalorder %s42, 0
      %p371 = por %p369, %p370
      %p372 = scmp.ne.s32.totalorder %s364, %s366
      %p373 = scmp.eq.s32.totalorder %s47, 1
      %p374 = por %p372, %p373
      %p375 = scmp.ne.s32.totalorder %s366, %s367
      %p376 = scmp.eq.s32.totalorder %s47, 0
      %p377 = por %p375, %p376
      %p378 = scmp.ne.s32.totalorder %s366, %s367
      %p379 = scmp.eq.s32.totalorder %s48, 1
      %p380 = por %p378, %p379
      %p382 = scmp.ne.s32.totalorder %s367, %s381
      %p383 = scmp.eq.s32.totalorder %s48, 0
      %p384 = por %p382, %p383
      %s386 = sadd.s32 %s385, 1
      %p389 = scmp.eq.s32.totalorder %s42, 1
      %p390 = scmp.ne.s32.totalorder %s385, %s387
      %p391 = scmp.eq.s32.totalorder %s42, 0
      %p392 = por %p390, %p391
      %p393 = scmp.ne.s32.totalorder %s385, %s387
      %p394 = scmp.eq.s32.totalorder %s47, 1
      %p395 = por %p393, %p394
      %p396 = scmp.ne.s32.totalorder %s387, %s388
      %p397 = scmp.eq.s32.totalorder %s47, 0
      %p398 = por %p396, %p397
      %p399 = scmp.ne.s32.totalorder %s387, %s388
      %p400 = scmp.eq.s32.totalorder %s48, 1
      %p401 = por %p399, %p400
      %p403 = scmp.ne.s32.totalorder %s388, %s402
      %p404 = scmp.eq.s32.totalorder %s48, 0
      %p405 = por %p403, %p404
      %s406 = ssub.s32 %s42, %s49
      %p407 = scmp.eq.s32.totalorder %s406, 0
      %s409 = sadd.s32 %s408, 1
      %s410 = scalar_select %p407, %s408, %s409
      %p413 = pneg %p407
      %p414 = scmp.eq.s32.totalorder %s42, 1
      %p415 = por %p413, %p414
      %p416 = scmp.ne.s32.totalorder %s408, %s411
      %p417 = scmp.eq.s32.totalorder %s42, 0
      %p418 = por %p416, %p417
      %p419 = scmp.ne.s32.totalorder %s408, %s411
      %p420 = scmp.eq.s32.totalorder %s47, 1
      %p421 = por %p419, %p420
      %p422 = scmp.ne.s32.totalorder %s411, %s412
      %p423 = scmp.eq.s32.totalorder %s47, 0
      %p424 = por %p422, %p423
      %p425 = scmp.ne.s32.totalorder %s411, %s412
      %p426 = scmp.eq.s32.totalorder %s48, 1
      %p427 = por %p425, %p426
      %p429 = scmp.ne.s32.totalorder %s412, %s428
      %p430 = scmp.eq.s32.totalorder %s48, 0
      %p431 = por %p429, %p430
      %s432 = ssub.s32 %s42, %s49
      %p433 = scmp.eq.s32.totalorder %s432, 0
      %s435 = sadd.s32 %s434, 1
      %s436 = scalar_select %p433, %s434, %s435
      %p439 = pneg %p433
      %p440 = scmp.eq.s32.totalorder %s42, 1
      %p441 = por %p439, %p440
      %p442 = scmp.ne.s32.totalorder %s434, %s437
      %p443 = scmp.eq.s32.totalorder %s42, 0
      %p444 = por %p442, %p443
      %p445 = scmp.ne.s32.totalorder %s434, %s437
      %p446 = scmp.eq.s32.totalorder %s47, 1
      %p447 = por %p445, %p446
      %p448 = scmp.ne.s32.totalorder %s437, %s438
      %p449 = scmp.eq.s32.totalorder %s47, 0
      %p450 = por %p448, %p449
      %p451 = scmp.ne.s32.totalorder %s437, %s438
      %p452 = scmp.eq.s32.totalorder %s48, 1
      %p453 = por %p451, %p452
      %p455 = scmp.ne.s32.totalorder %s438, %s454
      %p456 = scmp.eq.s32.totalorder %s48, 0
      %p457 = por %p455, %p456
      %p458 = scmp.le.s32.totalorder 1, %s42
      %p459 = scmp.lt.s32.totalorder %s42, 3
      %p460 = pnand %p458, %p459
      %p461 = pneg %p460
      // Predicated region
      $region9: #{tpu_custom_call.1} parent=5 // pred_check
        _
      $region10: #{tpu_custom_call.1} parent=5 // pred_check_branch
        %463 = sbr.rel (%p460) target = $region12
      $region11: #{tpu_custom_call.1} parent=5 // pred_region
        %s464 = ssub.s32 %s42, 1
        // Predicated region
        $region13: #{tpu_custom_call.1} parent=11 // pred_check
          %p465 = pneg %p167
        $region14: #{tpu_custom_call.1} parent=11 // pred_check_branch
          %467 = sbr.rel (%p465) target = $region16
        $region15: #{tpu_custom_call.1} parent=11 // pred_region
          %s469 = ssub.s32 8192, 8192
          %470 = vsyncadd [#allocation9], %s469
          %s471 = sshll.u32 [#allocation10], 4
          %s472 = int_to_ptr.vmem [resolvable:$true] %s471
          %477 = dma.hbm_to_vmem [thread:$0]  %s4, 8192, %s472, [#allocation9], 64, 64, 4
        $region16: #{tpu_custom_call.1} parent=11 // pred_fallthru
          _
        // Predicated region
        $region17: #{tpu_custom_call.1} parent=11 // pred_check
          %p478 = pneg %p188
        $region18: #{tpu_custom_call.1} parent=11 // pred_check_branch
          %480 = sbr.rel (%p478) target = $region20
        $region19: #{tpu_custom_call.1} parent=11 // pred_region
          %s482 = ssub.s32 4096, 4096
          %483 = vsyncadd [#allocation12], %s482
          %s484 = sshll.u32 [#allocation11], 4
          %s485 = int_to_ptr.vmem [resolvable:$true] %s484
          %490 = dma.hbm_to_vmem [thread:$0]  %s5, 4096, %s485, [#allocation12], 64, 64, 4
        $region20: #{tpu_custom_call.1} parent=11 // pred_fallthru
          _
        // Predicated region
        $region21: #{tpu_custom_call.1} parent=11 // pred_check
          %p491 = pneg %p209
        $region22: #{tpu_custom_call.1} parent=11 // pred_check_branch
          %493 = sbr.rel (%p491) target = $region24
        $region23: #{tpu_custom_call.1} parent=11 // pred_region
          %s495 = ssub.s32 16384, 16384
          %496 = vsyncadd [#allocation12], %s495
          %s497 = sshll.u32 [#allocation13], 4
          %s498 = int_to_ptr.vmem [resolvable:$true] %s497
          %503 = dma.hbm_to_vmem [thread:$0]  %s6, 16384, %s498, [#allocation12], 128, 128, 8
        $region24: #{tpu_custom_call.1} parent=11 // pred_fallthru
          _
        // Predicated region
        $region25: #{tpu_custom_call.1} parent=11 // pred_check
          %p504 = pneg %p230
        $region26: #{tpu_custom_call.1} parent=11 // pred_check_branch
          %506 = sbr.rel (%p504) target = $region28
        $region27: #{tpu_custom_call.1} parent=11 // pred_region
          _
        $region28: #{tpu_custom_call.1} parent=11 // pred_fallthru
          _
        // Predicated region
        $region29: #{tpu_custom_call.1} parent=11 // pred_check
          %p507 = pneg %p251
        $region30: #{tpu_custom_call.1} parent=11 // pred_check_branch
          %509 = sbr.rel (%p507) target = $region32
        $region31: #{tpu_custom_call.1} parent=11 // pred_region
          _
        $region32: #{tpu_custom_call.1} parent=11 // pred_fallthru
          _
        // Predicated region
        $region33: #{tpu_custom_call.1} parent=11 // pred_check
          %p510 = pneg %p272
        $region34: #{tpu_custom_call.1} parent=11 // pred_check_branch
          %512 = sbr.rel (%p510) target = $region36
        $region35: #{tpu_custom_call.1} parent=11 // pred_region
          _
        $region36: #{tpu_custom_call.1} parent=11 // pred_fallthru
          _
        // Predicated region
        $region37: #{tpu_custom_call.1} parent=11 // pred_check
          %p513 = pneg %p293
        $region38: #{tpu_custom_call.1} parent=11 // pred_check_branch
          %515 = sbr.rel (%p513) target = $region40
        $region39: #{tpu_custom_call.1} parent=11 // pred_region
          %s517 = ssub.s32 8192, 8192
          %518 = vsyncadd [#allocation15], %s517
          %s519 = sshll.u32 [#allocation14], 4
          %s520 = int_to_ptr.vmem [resolvable:$true] %s519
          %525 = dma.hbm_to_vmem [thread:$0]  %s10, 8192, %s520, [#allocation15], 64, 64, 4
        $region40: #{tpu_custom_call.1} parent=11 // pred_fallthru
          _
        // Predicated region
        $region41: #{tpu_custom_call.1} parent=11 // pred_check
          %p526 = pneg %p314
        $region42: #{tpu_custom_call.1} parent=11 // pred_check_branch
          %528 = sbr.rel (%p526) target = $region44
        $region43: #{tpu_custom_call.1} parent=11 // pred_region
          %s530 = ssub.s32 8192, 8192
          %531 = vsyncadd [#allocation15], %s530
          %s532 = sshll.u32 [#allocation16], 4
          %s533 = int_to_ptr.vmem [resolvable:$true] %s532
          %538 = dma.hbm_to_vmem [thread:$0]  %s11, 8192, %s533, [#allocation15], 64, 64, 4
        $region44: #{tpu_custom_call.1} parent=11 // pred_fallthru
          _
        // Predicated region
        $region45: #{tpu_custom_call.1} parent=11 // pred_check
          %p539 = pneg %p335
        $region46: #{tpu_custom_call.1} parent=11 // pred_check_branch
          %541 = sbr.rel (%p539) target = $region48
        $region47: #{tpu_custom_call.1} parent=11 // pred_region
          %s543 = ssub.s32 16384, 16384
          %544 = vsyncadd [#allocation18], %s543
          %s545 = sshll.u32 [#allocation17], 4
          %s546 = int_to_ptr.vmem [resolvable:$true] %s545
          %551 = dma.hbm_to_vmem [thread:$0]  %s12, 16384, %s546, [#allocation18], 128, 128, 8
        $region48: #{tpu_custom_call.1} parent=11 // pred_fallthru
          _
        // Predicated region
        $region49: #{tpu_custom_call.1} parent=11 // pred_check
          %p552 = pneg %p356
        $region50: #{tpu_custom_call.1} parent=11 // pred_check_branch
          %554 = sbr.rel (%p552) target = $region52
        $region51: #{tpu_custom_call.1} parent=11 // pred_region
          _
        $region52: #{tpu_custom_call.1} parent=11 // pred_fallthru
          _
        // Predicated region
        $region53: #{tpu_custom_call.1} parent=11 // pred_check
          %p555 = pneg %p377
        $region54: #{tpu_custom_call.1} parent=11 // pred_check_branch
          %557 = sbr.rel (%p555) target = $region56
        $region55: #{tpu_custom_call.1} parent=11 // pred_region
          _
        $region56: #{tpu_custom_call.1} parent=11 // pred_fallthru
          _
        // Predicated region
        $region57: #{tpu_custom_call.1} parent=11 // pred_check
          %p558 = pneg %p398
        $region58: #{tpu_custom_call.1} parent=11 // pred_check_branch
          %560 = sbr.rel (%p558) target = $region60
        $region59: #{tpu_custom_call.1} parent=11 // pred_region
          _
        $region60: #{tpu_custom_call.1} parent=11 // pred_fallthru
          _
      $region12: #{tpu_custom_call.1} parent=5 // pred_fallthru
        _
      %p561 = scmp.lt.s32.totalorder %s42, 2
      // Predicated region
      $region61: #{tpu_custom_call.1} parent=5 // pred_check
        %p562 = pneg %p561
      $region62: #{tpu_custom_call.1} parent=5 // pred_check_branch
        %564 = sbr.rel (%p562) target = $region64
      $region63: #{tpu_custom_call.1} parent=5 // pred_region
        // Predicated region
        $region65: #{tpu_custom_call.1} parent=63 // pred_check
          %p565 = pneg %p62
        $region66: #{tpu_custom_call.1} parent=63 // pred_check_branch
          %567 = sbr.rel (%p565) target = $region68
        $region67: #{tpu_custom_call.1} parent=63 // pred_region
          %s568 = sand.u32 %s52, 1
          %s569 = scalar_lea.sflag [#allocation3], %s568
          %s570 = sand.u32 %s52, 1
          %s571 = smul.addr %s570, 16
          %s572 = scalar_lea.vmem [#allocation2], %s571
          %s574 = ssub.s32 256, 256
          %575 = vsyncadd %s569, %s574
          %s576 = smul.addr %s42, 2
          %s577 = smul.addr %s576, 128
          %s578 = scalar_lea.hbm %s0, %s577
          %s579 = sshll.u32 %s572, 4
          %s580 = int_to_ptr.vmem [resolvable:$true] %s579
          %585 = dma.hbm_to_vmem [thread:$0]  %s578, 256, %s580, %s569, 128, 128, 8
        $region68: #{tpu_custom_call.1} parent=63 // pred_fallthru
          _
        // Predicated region
        $region69: #{tpu_custom_call.1} parent=63 // pred_check
          %p586 = pneg %p88
        $region70: #{tpu_custom_call.1} parent=63 // pred_check_branch
          %588 = sbr.rel (%p586) target = $region72
        $region71: #{tpu_custom_call.1} parent=63 // pred_region
          %s589 = sand.u32 %s42, 1
          %s590 = scalar_lea.sflag [#allocation6], %s589
          %s591 = sand.u32 %s78, 1
          %s592 = smul.addr %s591, 16
          %s593 = scalar_lea.vmem [#allocation5], %s592
          %s595 = ssub.s32 256, 256
          %596 = vsyncadd %s590, %s595
          %s597 = smul.addr %s42, 2
          %s598 = smul.addr %s597, 128
          %s599 = scalar_lea.hbm %s1, %s598
          %s600 = sshll.u32 %s593, 4
          %s601 = int_to_ptr.vmem [resolvable:$true] %s600
          %606 = dma.hbm_to_vmem [thread:$0]  %s599, 256, %s601, %s590, 128, 128, 8
        $region72: #{tpu_custom_call.1} parent=63 // pred_fallthru
          _
        // Predicated region
        $region73: #{tpu_custom_call.1} parent=63 // pred_check
          %p607 = pneg %p114
        $region74: #{tpu_custom_call.1} parent=63 // pred_check_branch
          %609 = sbr.rel (%p607) target = $region76
        $region75: #{tpu_custom_call.1} parent=63 // pred_region
          #allocation23 [shape = 'u32[6]{0}', space=smem, size = 0x18, scoped, tag = 'DMA stride descriptor']
          %s610 = sand.u32 %s42, 1
          %s611 = scalar_lea.sflag [#allocation6], %s610
          %s612 = sand.u32 %s104, 1
          %s613 = smul.addr %s612, 32
          %s614 = scalar_lea.vmem [#allocation7], %s613
          %s616 = ssub.s32 512, 512
          %617 = vsyncadd %s611, %s616
          %s618 = smul.addr %s42, 2
          %s619 = smul.addr %s618, 128
          %s620 = scalar_lea.hbm %s2, %s619
          %s622 = sshll.u32 1, 14
          %s623 = sxor.u32 4294967295, %s622
          %s625 = sld [smem:[#allocation0]]
          %s626 = sadd.s32 2, %s625
          %s628 = sshll.u32 7, 26
          %s629 = sxor.u32 4294967295, %s628
          %s630 = sand.u32 0, %s629
          %s631 = sshll.u32 %s626, 26
          %s632 = sor.u32 %s630, %s631
          %s633 = sshll.u32 %s614, 4
          %s634 = int_to_ptr.vmem [resolvable:$true] %s633
          %640 = sst [smem:[#allocation23]] 512
          %s641 = scalar_lea.smem [#allocation23], 1
          %642 = sst [smem:[%s641]] 256
          %s643 = scalar_lea.smem [#allocation23], 2
          %644 = sst [smem:[%s643]] 2
          %s645 = scalar_lea.smem [#allocation23], 3
          %646 = sst [smem:[%s645]] 128
          %s647 = scalar_lea.smem [#allocation23], 4
          %648 = sst [smem:[%s647]] 128
          %s649 = scalar_lea.smem [#allocation23], 5
          %650 = sst [smem:[%s649]] 8
          %652 = dma.general %s620, 512, %s634, %s611, 131072, [#allocation23], %s632, 0
        $region76: #{tpu_custom_call.1} parent=63 // pred_fallthru
          _
        // Predicated region
        $region77: #{tpu_custom_call.1} parent=63 // pred_check
          %p653 = pneg %p140
        $region78: #{tpu_custom_call.1} parent=63 // pred_check_branch
          %655 = sbr.rel (%p653) target = $region80
        $region79: #{tpu_custom_call.1} parent=63 // pred_region
          #allocation25 [shape = 'u32[6]{0}', space=smem, size = 0x18, scoped, tag = 'DMA stride descriptor']
          %s656 = sand.u32 %s42, 1
          %s657 = scalar_lea.sflag [#allocation9], %s656
          %s658 = sand.u32 %s130, 1
          %s659 = smul.addr %s658, 32
          %s660 = scalar_lea.vmem [#allocation8], %s659
          %s662 = ssub.s32 512, 512
          %663 = vsyncadd %s657, %s662
          %s664 = smul.addr %s42, 2
          %s665 = smul.addr %s664, 128
          %s666 = scalar_lea.hbm %s3, %s665
          %s668 = sshll.u32 1, 14
          %s669 = sxor.u32 4294967295, %s668
          %s671 = sld [smem:[#allocation0]]
          %s672 = sadd.s32 2, %s671
          %s674 = sshll.u32 7, 26
          %s675 = sxor.u32 4294967295, %s674
          %s676 = sand.u32 0, %s675
          %s677 = sshll.u32 %s672, 26
          %s678 = sor.u32 %s676, %s677
          %s679 = sshll.u32 %s660, 4
          %s680 = int_to_ptr.vmem [resolvable:$true] %s679
          %686 = sst [smem:[#allocation25]] 512
          %s687 = scalar_lea.smem [#allocation25], 1
          %688 = sst [smem:[%s687]] 256
          %s689 = scalar_lea.smem [#allocation25], 2
          %690 = sst [smem:[%s689]] 2
          %s691 = scalar_lea.smem [#allocation25], 3
          %692 = sst [smem:[%s691]] 128
          %s693 = scalar_lea.smem [#allocation25], 4
          %694 = sst [smem:[%s693]] 128
          %s695 = scalar_lea.smem [#allocation25], 5
          %696 = sst [smem:[%s695]] 8
          %698 = dma.general %s666, 512, %s680, %s657, 131072, [#allocation25], %s678, 0
        $region80: #{tpu_custom_call.1} parent=63 // pred_fallthru
          _
      $region64: #{tpu_custom_call.1} parent=5 // pred_fallthru
        _
      %p699 = scmp.le.s32.totalorder 1, %s42
      %p700 = scmp.lt.s32.totalorder %s42, 3
      %p701 = pnand %p699, %p700
      %p702 = pneg %p701
      // Predicated region
      $region81: #{tpu_custom_call.1} parent=5 // pred_check
        _
      $region82: #{tpu_custom_call.1} parent=5 // pred_check_branch
        %704 = sbr.rel (%p701) target = $region84
      $region83: #{tpu_custom_call.1} parent=5 // pred_region
        %s705 = ssub.s32 %s42, 1
        %s706 = sand.u32 %s55, 1
        %s707 = scalar_lea.sflag [#allocation3], %s706
        %s708 = sand.u32 %s55, 1
        %s709 = smul.addr %s708, 16
        %s710 = scalar_lea.vmem [#allocation2], %s709
        // Predicated region
        $region85: #{tpu_custom_call.1} parent=83 // pred_check
          %p711 = pneg %p68
        $region86: #{tpu_custom_call.1} parent=83 // pred_check_branch
          %713 = sbr.rel (%p711) target = $region88
        $region87: #{tpu_custom_call.1} parent=83 // pred_region
          %714 = dma.done %s707, 256
        $region88: #{tpu_custom_call.1} parent=83 // pred_fallthru
          _
        %s715 = sand.u32 %s47, 1
        %s716 = scalar_lea.sflag [#allocation6], %s715
        %s717 = sand.u32 %s81, 1
        %s718 = smul.addr %s717, 16
        %s719 = scalar_lea.vmem [#allocation5], %s718
        // Predicated region
        $region89: #{tpu_custom_call.1} parent=83 // pred_check
          %p720 = pneg %p94
        $region90: #{tpu_custom_call.1} parent=83 // pred_check_branch
          %722 = sbr.rel (%p720) target = $region92
        $region91: #{tpu_custom_call.1} parent=83 // pred_region
          %723 = dma.done %s716, 256
        $region92: #{tpu_custom_call.1} parent=83 // pred_fallthru
          _
        %s724 = sand.u32 %s47, 1
        %s725 = scalar_lea.sflag [#allocation6], %s724
        %s726 = sand.u32 %s107, 1
        %s727 = smul.addr %s726, 32
        %s728 = scalar_lea.vmem [#allocation7], %s727
        // Predicated region
        $region93: #{tpu_custom_call.1} parent=83 // pred_check
          %p729 = pneg %p120
        $region94: #{tpu_custom_call.1} parent=83 // pred_check_branch
          %731 = sbr.rel (%p729) target = $region96
        $region95: #{tpu_custom_call.1} parent=83 // pred_region
          %732 = dma.done %s725, 512
        $region96: #{tpu_custom_call.1} parent=83 // pred_fallthru
          _
        %s733 = sand.u32 %s47, 1
        %s734 = scalar_lea.sflag [#allocation9], %s733
        %s735 = sand.u32 %s133, 1
        %s736 = smul.addr %s735, 32
        %s737 = scalar_lea.vmem [#allocation8], %s736
        // Predicated region
        $region97: #{tpu_custom_call.1} parent=83 // pred_check
          %p738 = pneg %p146
        $region98: #{tpu_custom_call.1} parent=83 // pred_check_branch
          %740 = sbr.rel (%p738) target = $region100
        $region99: #{tpu_custom_call.1} parent=83 // pred_region
          %741 = dma.done %s734, 512
        $region100: #{tpu_custom_call.1} parent=83 // pred_fallthru
          _
        // Predicated region
        $region101: #{tpu_custom_call.1} parent=83 // pred_check
          %p742 = pneg %p167
        $region102: #{tpu_custom_call.1} parent=83 // pred_check_branch
          %744 = sbr.rel (%p742) target = $region104
        $region103: #{tpu_custom_call.1} parent=83 // pred_region
          %745 = dma.done [#allocation9], 8192
        $region104: #{tpu_custom_call.1} parent=83 // pred_fallthru
          _
        // Predicated region
        $region105: #{tpu_custom_call.1} parent=83 // pred_check
          %p746 = pneg %p188
        $region106: #{tpu_custom_call.1} parent=83 // pred_check_branch
          %748 = sbr.rel (%p746) target = $region108
        $region107: #{tpu_custom_call.1} parent=83 // pred_region
          %749 = dma.done [#allocation12], 4096
        $region108: #{tpu_custom_call.1} parent=83 // pred_fallthru
          _
        // Predicated region
        $region109: #{tpu_custom_call.1} parent=83 // pred_check
          %p750 = pneg %p209
        $region110: #{tpu_custom_call.1} parent=83 // pred_check_branch
          %752 = sbr.rel (%p750) target = $region112
        $region111: #{tpu_custom_call.1} parent=83 // pred_region
          %753 = dma.done [#allocation12], 16384
        $region112: #{tpu_custom_call.1} parent=83 // pred_fallthru
          _
        // Predicated region
        $region113: #{tpu_custom_call.1} parent=83 // pred_check
          %p754 = pneg %p293
        $region114: #{tpu_custom_call.1} parent=83 // pred_check_branch
          %756 = sbr.rel (%p754) target = $region116
        $region115: #{tpu_custom_call.1} parent=83 // pred_region
          %757 = dma.done [#allocation15], 8192
        $region116: #{tpu_custom_call.1} parent=83 // pred_fallthru
          _
        // Predicated region
        $region117: #{tpu_custom_call.1} parent=83 // pred_check
          %p758 = pneg %p314
        $region118: #{tpu_custom_call.1} parent=83 // pred_check_branch
          %760 = sbr.rel (%p758) target = $region120
        $region119: #{tpu_custom_call.1} parent=83 // pred_region
          %761 = dma.done [#allocation15], 8192
        $region120: #{tpu_custom_call.1} parent=83 // pred_fallthru
          _
        // Predicated region
        $region121: #{tpu_custom_call.1} parent=83 // pred_check
          %p762 = pneg %p335
        $region122: #{tpu_custom_call.1} parent=83 // pred_check_branch
          %764 = sbr.rel (%p762) target = $region124
        $region123: #{tpu_custom_call.1} parent=83 // pred_region
          %765 = dma.done [#allocation18], 16384
        $region124: #{tpu_custom_call.1} parent=83 // pred_fallthru
          _
        %s766 = sand.u32 %s55, 1
        %s767 = scalar_lea.sflag [#allocation3], %s766
        %s768 = sand.u32 %s55, 1
        %s769 = smul.addr %s768, 16
        %s770 = scalar_lea.vmem [#allocation2], %s769
        %p771 = pneg %p68
        %p772 = pneg %p65
        %s773 = sand.u32 %s47, 1
        %s774 = scalar_lea.sflag [#allocation6], %s773
        %s775 = sand.u32 %s81, 1
        %s776 = smul.addr %s775, 16
        %s777 = scalar_lea.vmem [#allocation5], %s776
        %p778 = pneg %p94
        %p779 = pneg %p91
        %s780 = sand.u32 %s47, 1
        %s781 = scalar_lea.sflag [#allocation6], %s780
        %s782 = sand.u32 %s107, 1
        %s783 = smul.addr %s782, 32
        %s784 = scalar_lea.vmem [#allocation7], %s783
        %p785 = pneg %p120
        %p786 = pneg %p117
        %s787 = sand.u32 %s47, 1
        %s788 = scalar_lea.sflag [#allocation9], %s787
        %s789 = sand.u32 %s133, 1
        %s790 = smul.addr %s789, 32
        %s791 = scalar_lea.vmem [#allocation8], %s790
        %p792 = pneg %p146
        %p793 = pneg %p143
        %p794 = pneg %p167
        %p795 = pneg %p164
        %p796 = pneg %p188
        %p797 = pneg %p185
        %p798 = pneg %p209
        %p799 = pneg %p206
        %p800 = pneg %p230
        %p801 = pneg %p227
        %p802 = pneg %p251
        %p803 = pneg %p248
        %p804 = pneg %p272
        %p805 = pneg %p269
        %p806 = pneg %p293
        %p807 = pneg %p290
        %p808 = pneg %p314
        %p809 = pneg %p311
        %p810 = pneg %p335
        %p811 = pneg %p332
        %p812 = pneg %p356
        %p813 = pneg %p353
        %p814 = pneg %p377
        %p815 = pneg %p374
        %p816 = pneg %p398
        %p817 = pneg %p395
        %p818 = pneg %p424
        %p819 = pneg %p421
        %s820 = sand.u32 %s411, 1
        %s821 = scalar_lea.sflag [#allocation4], %s820
        %s822 = sand.u32 %s411, 1
        %s823 = smul.addr %s822, 16
        %s824 = scalar_lea.vmem [#allocation19], %s823
        %p825 = pneg %p450
        %p826 = pneg %p447
        %s827 = sand.u32 %s437, 1
        %s828 = scalar_lea.sflag [#allocation21], %s827
        %s829 = sand.u32 %s437, 1
        %s830 = smul.addr %s829, 16
        %s831 = scalar_lea.vmem [#allocation20], %s830
        %v833 = vld [vmem:[%s710] sm:$0xff]
        %v834 = vld [vmem:[%s710 + $0x8] sm:$0xff]
        %v835 = vld [vmem:[%s719] sm:$0xff]
        %v836 = vld [vmem:[%s719 + $0x8] sm:$0xff]
        %v837 = vld [vmem:[%s728] sm:$0xff]
        %v838 = vld [vmem:[%s728 + $0x8] sm:$0xff]
        %vm839 = vcmp.gt.f32.partialorder %v837, 0.0
        %vm840 = vcmp.gt.f32.partialorder %v838, 0.0
        %v841 = vmin.f32 %v837, 0.0
        %v842 = vmin.f32 %v838, 0.0
        %v843 = vmul.f32 %v841, 1.442695
        %v844 = vpow.pop %v843
        %v845 = vmul.f32 %v842, 1.442695
        %v846 = vpow.pop %v845
        %v847 = vsub.f32 %v844, 1.0
        %v848 = vsub.f32 %v846, 1.0
        %v849 = vsel %vm839, %v837, %v847
        %v850 = vsel %vm840, %v838, %v848
        %v851 = vsub.f32 0.0, %v837
        %v852 = vsub.f32 0.0, %v838
        %vm853 = vcmp.gt.f32.partialorder %v851, 0.0
        %vm854 = vcmp.gt.f32.partialorder %v852, 0.0
        %v855 = vmin.f32 %v851, 0.0
        %v856 = vmin.f32 %v852, 0.0
        %v857 = vmul.f32 %v855, 1.442695
        %v858 = vpow.pop %v857
        %v859 = vmul.f32 %v856, 1.442695
        %v860 = vpow.pop %v859
        %v861 = vsub.f32 %v858, 1.0
        %v862 = vsub.f32 %v860, 1.0
        %v863 = vsel %vm853, %v851, %v861
        %v864 = vsel %vm854, %v852, %v862
        %vm865 = vcmp.gt.f32.partialorder %v833, 0.0
        %vm866 = vcmp.gt.f32.partialorder %v834, 0.0
        %v867 = vmin.f32 %v833, 0.0
        %v868 = vmin.f32 %v834, 0.0
        %v869 = vmul.f32 %v867, 1.442695
        %v870 = vpow.pop %v869
        %v871 = vmul.f32 %v868, 1.442695
        %v872 = vpow.pop %v871
        %v873 = vsub.f32 %v870, 1.0
        %v874 = vsub.f32 %v872, 1.0
        %v875 = vsel %vm865, %v833, %v873
        %v876 = vsel %vm866, %v834, %v874
        %v877 = vsub.f32 0.0, %v833
        %v878 = vsub.f32 0.0, %v834
        %vm879 = vcmp.gt.f32.partialorder %v877, 0.0
        %vm880 = vcmp.gt.f32.partialorder %v878, 0.0
        %v881 = vmin.f32 %v877, 0.0
        %v882 = vmin.f32 %v878, 0.0
        %v883 = vmul.f32 %v881, 1.442695
        %v884 = vpow.pop %v883
        %v885 = vmul.f32 %v882, 1.442695
        %v886 = vpow.pop %v885
        %v887 = vsub.f32 %v884, 1.0
        %v888 = vsub.f32 %v886, 1.0
        %v889 = vsel %vm879, %v877, %v887
        %v890 = vsel %vm880, %v878, %v888
        %vm895 = vcmask 1040384
        %v896 = vrot.slane %v875, 7
        %v897 = vrot.slane %v889, 7
        %v898 = vrot.slane %v876, 7
        %v899 = vsel %vm895, %v896, %v898
        %v900 = vrot.slane %v890, 7
        %v901 = vsel %vm895, %v897, %v900
        %v906 = vsel %vm895, 0.0, %v896
        %v907 = vsel %vm895, 0.0, %v897
        %v908 = vpack.c.bf16 %v899, %v906
        %v909 = vpack.c.bf16 %v901, %v907
        %v910 = vld [vmem:[#allocation10] sm:$0xf]
        %v911 = vld [vmem:[#allocation10 + $0x4] sm:$0xf]
        %v912 = vld [vmem:[#allocation10 + $0x8] sm:$0xf]
        %v913 = vld [vmem:[#allocation10 + $0xc] sm:$0xf]
        %v914 = vld [vmem:[#allocation10 + $0x10] sm:$0xf]
        %v915 = vld [vmem:[#allocation10 + $0x14] sm:$0xf]
        %v916 = vld [vmem:[#allocation10 + $0x18] sm:$0xf]
        %v917 = vld [vmem:[#allocation10 + $0x1c] sm:$0xf]
        %v918 = vld [vmem:[#allocation10 + $0x20] sm:$0xf]
        %v919 = vld [vmem:[#allocation10 + $0x24] sm:$0xf]
        %v920 = vld [vmem:[#allocation10 + $0x28] sm:$0xf]
        %v921 = vld [vmem:[#allocation10 + $0x2c] sm:$0xf]
        %v922 = vld [vmem:[#allocation10 + $0x30] sm:$0xf]
        %v923 = vld [vmem:[#allocation10 + $0x34] sm:$0xf]
        %v924 = vld [vmem:[#allocation10 + $0x38] sm:$0xf]
        %v925 = vld [vmem:[#allocation10 + $0x3c] sm:$0xf]
        %v926 = vld [vmem:[#allocation10 + $0x40] sm:$0xf]
        %v927 = vld [vmem:[#allocation10 + $0x44] sm:$0xf]
        %v928 = vld [vmem:[#allocation10 + $0x48] sm:$0xf]
        %v929 = vld [vmem:[#allocation10 + $0x4c] sm:$0xf]
        %v930 = vld [vmem:[#allocation10 + $0x50] sm:$0xf]
        %v931 = vld [vmem:[#allocation10 + $0x54] sm:$0xf]
        %v932 = vld [vmem:[#allocation10 + $0x58] sm:$0xf]
        %v933 = vld [vmem:[#allocation10 + $0x5c] sm:$0xf]
        %v934 = vld [vmem:[#allocation10 + $0x60] sm:$0xf]
        %v935 = vld [vmem:[#allocation10 + $0x64] sm:$0xf]
        %v936 = vld [vmem:[#allocation10 + $0x68] sm:$0xf]
        %v937 = vld [vmem:[#allocation10 + $0x6c] sm:$0xf]
        %v938 = vld [vmem:[#allocation10 + $0x70] sm:$0xf]
        %v939 = vld [vmem:[#allocation10 + $0x74] sm:$0xf]
        %v940 = vld [vmem:[#allocation10 + $0x78] sm:$0xf]
        %v941 = vld [vmem:[#allocation10 + $0x7c] sm:$0xf]
        %v942 = vpack.c.bf16 %v876, %v875
        %v943 = vpack.c.bf16 %v890, %v889
        %s944 = scalar_lea.vmem [#allocation10], 128
        %v945 = vld [vmem:[%s944] sm:$0xf]
        %v946 = vld [vmem:[%s944 + $0x4] sm:$0xf]
        %v947 = vld [vmem:[%s944 + $0x8] sm:$0xf]
        %v948 = vld [vmem:[%s944 + $0xc] sm:$0xf]
        %v949 = vld [vmem:[%s944 + $0x10] sm:$0xf]
        %v950 = vld [vmem:[%s944 + $0x14] sm:$0xf]
        %v951 = vld [vmem:[%s944 + $0x18] sm:$0xf]
        %v952 = vld [vmem:[%s944 + $0x1c] sm:$0xf]
        %v953 = vld [vmem:[%s944 + $0x20] sm:$0xf]
        %v954 = vld [vmem:[%s944 + $0x24] sm:$0xf]
        %v955 = vld [vmem:[%s944 + $0x28] sm:$0xf]
        %v956 = vld [vmem:[%s944 + $0x2c] sm:$0xf]
        %v957 = vld [vmem:[%s944 + $0x30] sm:$0xf]
        %v958 = vld [vmem:[%s944 + $0x34] sm:$0xf]
        %v959 = vld [vmem:[%s944 + $0x38] sm:$0xf]
        %v960 = vld [vmem:[%s944 + $0x3c] sm:$0xf]
        %v961 = vld [vmem:[%s944 + $0x40] sm:$0xf]
        %v962 = vld [vmem:[%s944 + $0x44] sm:$0xf]
        %v963 = vld [vmem:[%s944 + $0x48] sm:$0xf]
        %v964 = vld [vmem:[%s944 + $0x4c] sm:$0xf]
        %v965 = vld [vmem:[%s944 + $0x50] sm:$0xf]
        %v966 = vld [vmem:[%s944 + $0x54] sm:$0xf]
        %v967 = vld [vmem:[%s944 + $0x58] sm:$0xf]
        %v968 = vld [vmem:[%s944 + $0x5c] sm:$0xf]
        %v969 = vld [vmem:[%s944 + $0x60] sm:$0xf]
        %v970 = vld [vmem:[%s944 + $0x64] sm:$0xf]
        %v971 = vld [vmem:[%s944 + $0x68] sm:$0xf]
        %v972 = vld [vmem:[%s944 + $0x6c] sm:$0xf]
        %v973 = vld [vmem:[%s944 + $0x70] sm:$0xf]
        %v974 = vld [vmem:[%s944 + $0x74] sm:$0xf]
        %v975 = vld [vmem:[%s944 + $0x78] sm:$0xf]
        %v976 = vld [vmem:[%s944 + $0x7c] sm:$0xf]
        %v1009 = vunpack.c.l.b16 %v945
        %v1010 = vunpack.c.l.b16 %v946
        %v1011 = vunpack.c.l.b16 %v947
        %v1012 = vunpack.c.l.b16 %v948
        %v1013 = vunpack.c.l.b16 %v949
        %v1014 = vunpack.c.l.b16 %v950
        %v1015 = vunpack.c.l.b16 %v951
        %v1016 = vunpack.c.l.b16 %v952
        %v1017 = vunpack.c.l.b16 %v953
        %v1018 = vunpack.c.l.b16 %v954
        %v1019 = vunpack.c.l.b16 %v955
        %v1020 = vunpack.c.l.b16 %v956
        %v1021 = vunpack.c.l.b16 %v957
        %v1022 = vunpack.c.l.b16 %v958
        %v1023 = vunpack.c.l.b16 %v959
        %v1024 = vunpack.c.l.b16 %v960
        %v1025 = vunpack.c.l.b16 %v961
        %v1026 = vunpack.c.l.b16 %v962
        %v1027 = vunpack.c.l.b16 %v963
        %v1028 = vunpack.c.l.b16 %v964
        %v1029 = vunpack.c.l.b16 %v965
        %v1030 = vunpack.c.l.b16 %v966
        %v1031 = vunpack.c.l.b16 %v967
        %v1032 = vunpack.c.l.b16 %v968
        %v1033 = vunpack.c.l.b16 %v969
        %v1034 = vunpack.c.l.b16 %v970
        %v1035 = vunpack.c.l.b16 %v971
        %v1036 = vunpack.c.l.b16 %v972
        %v1037 = vunpack.c.l.b16 %v973
        %v1038 = vunpack.c.l.b16 %v974
        %v1039 = vunpack.c.l.b16 %v975
        %v1040 = vunpack.c.l.b16 %v976
        %v1041 = vpack.c.b16 %v1010, %v1009
        %v1042 = vpack.c.b16 %v1012, %v1011
        %v1043 = vpack.c.b16 %v1014, %v1013
        %v1044 = vpack.c.b16 %v1016, %v1015
        %v1045 = vpack.c.b16 %v1018, %v1017
        %v1046 = vpack.c.b16 %v1020, %v1019
        %v1047 = vpack.c.b16 %v1022, %v1021
        %v1048 = vpack.c.b16 %v1024, %v1023
        %v1049 = vpack.c.b16 %v1026, %v1025
        %v1050 = vpack.c.b16 %v1028, %v1027
        %v1051 = vpack.c.b16 %v1030, %v1029
        %v1052 = vpack.c.b16 %v1032, %v1031
        %v1053 = vpack.c.b16 %v1034, %v1033
        %v1054 = vpack.c.b16 %v1036, %v1035
        %v1055 = vpack.c.b16 %v1038, %v1037
        %v1056 = vpack.c.b16 %v1040, %v1039
        %1073 = vmatprep.subr.bf16.mxu0 0
        %1074 = vmatpush1.bf16.msra.mxu0 %v1048
        %1075 = vmatprep.subr.bf16.mxu0 0
        %1076 = vmatpush1.bf16.msra.mxu0 %v1047
        %1077 = vmatprep.subr.bf16.mxu0 0
        %1078 = vmatpush1.bf16.msra.mxu0 %v1046
        %1079 = vmatprep.subr.bf16.mxu0 0
        %1080 = vmatpush1.bf16.msra.mxu0 %v1045
        %1081 = vmatprep.subr.bf16.mxu0 0
        %1082 = vmatpush1.bf16.msra.mxu0 %v1044
        %1083 = vmatprep.subr.bf16.mxu0 0
        %1084 = vmatpush1.bf16.msra.mxu0 %v1043
        %1085 = vmatprep.subr.bf16.mxu0 0
        %1086 = vmatpush1.bf16.msra.mxu0 %v1042
        %1087 = vmatprep.subr.bf16.mxu0 0
        %1088 = vmatpush1.bf16.msra.mxu0 %v1041
        %1089 = vmatprep.subr.bf16.mxu0 0
        %1090 = vmatpush2.bf16.msra.mxu0 %v1056
        %1091 = vmatprep.subr.bf16.mxu0 0
        %1092 = vmatpush2.bf16.msra.mxu0 %v1055
        %1093 = vmatprep.subr.bf16.mxu0 0
        %1094 = vmatpush2.bf16.msra.mxu0 %v1054
        %1095 = vmatprep.subr.bf16.mxu0 0
        %1096 = vmatpush2.bf16.msra.mxu0 %v1053
        %1097 = vmatprep.subr.bf16.mxu0 0
        %1098 = vmatpush2.bf16.msra.mxu0 %v1052
        %1099 = vmatprep.subr.bf16.mxu0 0
        %1100 = vmatpush2.bf16.msra.mxu0 %v1051
        %1101 = vmatprep.subr.bf16.mxu0 0
        %1102 = vmatpush2.bf16.msra.mxu0 %v1050
        %1103 = vmatprep.subr.bf16.mxu0 0
        %1104 = vmatpush2.bf16.msra.mxu0 %v1049
        %1105 = vmatprep.mubr.bf16.mxu0 %v943
        %1106 = vmatmul.mubr.bf16.gmra.mxu0 %v942
        %v1107 = vpop.f32.mrf.mxu0
        %v1108 = vadd.f32 0.0, %v1107
        %v1109 = vpop.f32.mrf.mxu0
        %v1110 = vpop.f32.mrf.mxu0
        %v1111 = vadd.f32 0.0, %v1110
        %v1112 = vpop.f32.mrf.mxu0
        %1113 = vdwg.mxu0
        %v1146 = vunpack.c.l.b16 %v910
        %v1147 = vunpack.c.l.b16 %v911
        %v1148 = vunpack.c.l.b16 %v912
        %v1149 = vunpack.c.l.b16 %v913
        %v1150 = vunpack.c.l.b16 %v914
        %v1151 = vunpack.c.l.b16 %v915
        %v1152 = vunpack.c.l.b16 %v916
        %v1153 = vunpack.c.l.b16 %v917
        %v1154 = vunpack.c.l.b16 %v918
        %v1155 = vunpack.c.l.b16 %v919
        %v1156 = vunpack.c.l.b16 %v920
        %v1157 = vunpack.c.l.b16 %v921
        %v1158 = vunpack.c.l.b16 %v922
        %v1159 = vunpack.c.l.b16 %v923
        %v1160 = vunpack.c.l.b16 %v924
        %v1161 = vunpack.c.l.b16 %v925
        %v1162 = vunpack.c.l.b16 %v926
        %v1163 = vunpack.c.l.b16 %v927
        %v1164 = vunpack.c.l.b16 %v928
        %v1165 = vunpack.c.l.b16 %v929
        %v1166 = vunpack.c.l.b16 %v930
        %v1167 = vunpack.c.l.b16 %v931
        %v1168 = vunpack.c.l.b16 %v932
        %v1169 = vunpack.c.l.b16 %v933
        %v1170 = vunpack.c.l.b16 %v934
        %v1171 = vunpack.c.l.b16 %v935
        %v1172 = vunpack.c.l.b16 %v936
        %v1173 = vunpack.c.l.b16 %v937
        %v1174 = vunpack.c.l.b16 %v938
        %v1175 = vunpack.c.l.b16 %v939
        %v1176 = vunpack.c.l.b16 %v940
        %v1177 = vunpack.c.l.b16 %v941
        %v1178 = vpack.c.b16 %v1147, %v1146
        %v1179 = vpack.c.b16 %v1149, %v1148
        %v1180 = vpack.c.b16 %v1151, %v1150
        %v1181 = vpack.c.b16 %v1153, %v1152
        %v1182 = vpack.c.b16 %v1155, %v1154
        %v1183 = vpack.c.b16 %v1157, %v1156
        %v1184 = vpack.c.b16 %v1159, %v1158
        %v1185 = vpack.c.b16 %v1161, %v1160
        %v1186 = vpack.c.b16 %v1163, %v1162
        %v1187 = vpack.c.b16 %v1165, %v1164
        %v1188 = vpack.c.b16 %v1167, %v1166
        %v1189 = vpack.c.b16 %v1169, %v1168
        %v1190 = vpack.c.b16 %v1171, %v1170
        %v1191 = vpack.c.b16 %v1173, %v1172
        %v1192 = vpack.c.b16 %v1175, %v1174
        %v1193 = vpack.c.b16 %v1177, %v1176
        %1210 = vmatprep.subr.bf16.mxu0 0
        %1211 = vmatpush1.bf16.msra.mxu0 %v1185
        %1212 = vmatprep.subr.bf16.mxu0 0
        %1213 = vmatpush1.bf16.msra.mxu0 %v1184
        %1214 = vmatprep.subr.bf16.mxu0 0
        %1215 = vmatpush1.bf16.msra.mxu0 %v1183
        %1216 = vmatprep.subr.bf16.mxu0 0
        %1217 = vmatpush1.bf16.msra.mxu0 %v1182
        %1218 = vmatprep.subr.bf16.mxu0 0
        %1219 = vmatpush1.bf16.msra.mxu0 %v1181
        %1220 = vmatprep.subr.bf16.mxu0 0
        %1221 = vmatpush1.bf16.msra.mxu0 %v1180
        %1222 = vmatprep.subr.bf16.mxu0 0
        %1223 = vmatpush1.bf16.msra.mxu0 %v1179
        %1224 = vmatprep.subr.bf16.mxu0 0
        %1225 = vmatpush1.bf16.msra.mxu0 %v1178
        %1226 = vmatprep.subr.bf16.mxu0 0
        %1227 = vmatpush2.bf16.msra.mxu0 %v1193
        %1228 = vmatprep.subr.bf16.mxu0 0
        %1229 = vmatpush2.bf16.msra.mxu0 %v1192
        %1230 = vmatprep.subr.bf16.mxu0 0
        %1231 = vmatpush2.bf16.msra.mxu0 %v1191
        %1232 = vmatprep.subr.bf16.mxu0 0
        %1233 = vmatpush2.bf16.msra.mxu0 %v1190
        %1234 = vmatprep.subr.bf16.mxu0 0
        %1235 = vmatpush2.bf16.msra.mxu0 %v1189
        %1236 = vmatprep.subr.bf16.mxu0 0
        %1237 = vmatpush2.bf16.msra.mxu0 %v1188
        %1238 = vmatprep.subr.bf16.mxu0 0
        %1239 = vmatpush2.bf16.msra.mxu0 %v1187
        %1240 = vmatprep.subr.bf16.mxu0 0
        %1241 = vmatpush2.bf16.msra.mxu0 %v1186
        %1242 = vmatprep.mubr.bf16.mxu0 %v909
        %1243 = vmatmul.mubr.bf16.gmra.mxu0 %v908
        %v1244 = vpop.f32.mrf.mxu0
        %v1245 = vadd.f32 %v1108, %v1244
        %v1246 = vpop.f32.mrf.mxu0
        %v1247 = vpop.f32.mrf.mxu0
        %v1248 = vadd.f32 %v1111, %v1247
        %v1249 = vpop.f32.mrf.mxu0
        %1250 = vdwg.mxu0
        %v1251 = vld [vmem:[%s7] sm:$0x1]
        %v1253 = vlaneseq
        %v1254 = vshrl.u32 %v1253, 7
        %v1255 = vsub.s32 0, %v1254
        %v1256 = vrot.slane %v1251, %v1255
        %v1258 = vadd.f32 %v1245, %v1256
        %v1259 = vadd.f32 %v1248, %v1256
        %v1260 = vpack.c.bf16 %v850, %v849
        %v1261 = vpack.c.bf16 %v864, %v863
        %v1262 = vld [vmem:[#allocation11] sm:$0xf]
        %v1263 = vld [vmem:[#allocation11 + $0x4] sm:$0xf]
        %v1264 = vld [vmem:[#allocation11 + $0x8] sm:$0xf]
        %v1265 = vld [vmem:[#allocation11 + $0xc] sm:$0xf]
        %v1266 = vld [vmem:[#allocation11 + $0x10] sm:$0xf]
        %v1267 = vld [vmem:[#allocation11 + $0x14] sm:$0xf]
        %v1268 = vld [vmem:[#allocation11 + $0x18] sm:$0xf]
        %v1269 = vld [vmem:[#allocation11 + $0x1c] sm:$0xf]
        %v1270 = vld [vmem:[#allocation11 + $0x20] sm:$0xf]
        %v1271 = vld [vmem:[#allocation11 + $0x24] sm:$0xf]
        %v1272 = vld [vmem:[#allocation11 + $0x28] sm:$0xf]
        %v1273 = vld [vmem:[#allocation11 + $0x2c] sm:$0xf]
        %v1274 = vld [vmem:[#allocation11 + $0x30] sm:$0xf]
        %v1275 = vld [vmem:[#allocation11 + $0x34] sm:$0xf]
        %v1276 = vld [vmem:[#allocation11 + $0x38] sm:$0xf]
        %v1277 = vld [vmem:[#allocation11 + $0x3c] sm:$0xf]
        %v1278 = vld [vmem:[#allocation11 + $0x40] sm:$0xf]
        %v1279 = vld [vmem:[#allocation11 + $0x44] sm:$0xf]
        %v1280 = vld [vmem:[#allocation11 + $0x48] sm:$0xf]
        %v1281 = vld [vmem:[#allocation11 + $0x4c] sm:$0xf]
        %v1282 = vld [vmem:[#allocation11 + $0x50] sm:$0xf]
        %v1283 = vld [vmem:[#allocation11 + $0x54] sm:$0xf]
        %v1284 = vld [vmem:[#allocation11 + $0x58] sm:$0xf]
        %v1285 = vld [vmem:[#allocation11 + $0x5c] sm:$0xf]
        %v1286 = vld [vmem:[#allocation11 + $0x60] sm:$0xf]
        %v1287 = vld [vmem:[#allocation11 + $0x64] sm:$0xf]
        %v1288 = vld [vmem:[#allocation11 + $0x68] sm:$0xf]
        %v1289 = vld [vmem:[#allocation11 + $0x6c] sm:$0xf]
        %v1290 = vld [vmem:[#allocation11 + $0x70] sm:$0xf]
        %v1291 = vld [vmem:[#allocation11 + $0x74] sm:$0xf]
        %v1292 = vld [vmem:[#allocation11 + $0x78] sm:$0xf]
        %v1293 = vld [vmem:[#allocation11 + $0x7c] sm:$0xf]
        %v1326 = vunpack.c.l.b16 %v1262
        %v1327 = vunpack.c.l.b16 %v1263
        %v1328 = vunpack.c.l.b16 %v1264
        %v1329 = vunpack.c.l.b16 %v1265
        %v1330 = vunpack.c.l.b16 %v1266
        %v1331 = vunpack.c.l.b16 %v1267
        %v1332 = vunpack.c.l.b16 %v1268
        %v1333 = vunpack.c.l.b16 %v1269
        %v1334 = vunpack.c.l.b16 %v1270
        %v1335 = vunpack.c.l.b16 %v1271
        %v1336 = vunpack.c.l.b16 %v1272
        %v1337 = vunpack.c.l.b16 %v1273
        %v1338 = vunpack.c.l.b16 %v1274
        %v1339 = vunpack.c.l.b16 %v1275
        %v1340 = vunpack.c.l.b16 %v1276
        %v1341 = vunpack.c.l.b16 %v1277
        %v1342 = vunpack.c.l.b16 %v1278
        %v1343 = vunpack.c.l.b16 %v1279
        %v1344 = vunpack.c.l.b16 %v1280
        %v1345 = vunpack.c.l.b16 %v1281
        %v1346 = vunpack.c.l.b16 %v1282
        %v1347 = vunpack.c.l.b16 %v1283
        %v1348 = vunpack.c.l.b16 %v1284
        %v1349 = vunpack.c.l.b16 %v1285
        %v1350 = vunpack.c.l.b16 %v1286
        %v1351 = vunpack.c.l.b16 %v1287
        %v1352 = vunpack.c.l.b16 %v1288
        %v1353 = vunpack.c.l.b16 %v1289
        %v1354 = vunpack.c.l.b16 %v1290
        %v1355 = vunpack.c.l.b16 %v1291
        %v1356 = vunpack.c.l.b16 %v1292
        %v1357 = vunpack.c.l.b16 %v1293
        %v1358 = vpack.c.b16 %v1327, %v1326
        %v1359 = vpack.c.b16 %v1329, %v1328
        %v1360 = vpack.c.b16 %v1331, %v1330
        %v1361 = vpack.c.b16 %v1333, %v1332
        %v1362 = vpack.c.b16 %v1335, %v1334
        %v1363 = vpack.c.b16 %v1337, %v1336
        %v1364 = vpack.c.b16 %v1339, %v1338
        %v1365 = vpack.c.b16 %v1341, %v1340
        %v1366 = vpack.c.b16 %v1343, %v1342
        %v1367 = vpack.c.b16 %v1345, %v1344
        %v1368 = vpack.c.b16 %v1347, %v1346
        %v1369 = vpack.c.b16 %v1349, %v1348
        %v1370 = vpack.c.b16 %v1351, %v1350
        %v1371 = vpack.c.b16 %v1353, %v1352
        %v1372 = vpack.c.b16 %v1355, %v1354
        %v1373 = vpack.c.b16 %v1357, %v1356
        %1390 = vmatprep.subr.bf16.mxu0 0
        %1391 = vmatpush1.bf16.msra.mxu0 %v1365
        %1392 = vmatprep.subr.bf16.mxu0 0
        %1393 = vmatpush1.bf16.msra.mxu0 %v1364
        %1394 = vmatprep.subr.bf16.mxu0 0
        %1395 = vmatpush1.bf16.msra.mxu0 %v1363
        %1396 = vmatprep.subr.bf16.mxu0 0
        %1397 = vmatpush1.bf16.msra.mxu0 %v1362
        %1398 = vmatprep.subr.bf16.mxu0 0
        %1399 = vmatpush1.bf16.msra.mxu0 %v1361
        %1400 = vmatprep.subr.bf16.mxu0 0
        %1401 = vmatpush1.bf16.msra.mxu0 %v1360
        %1402 = vmatprep.subr.bf16.mxu0 0
        %1403 = vmatpush1.bf16.msra.mxu0 %v1359
        %1404 = vmatprep.subr.bf16.mxu0 0
        %1405 = vmatpush1.bf16.msra.mxu0 %v1358
        %1406 = vmatprep.subr.bf16.mxu0 0
        %1407 = vmatpush2.bf16.msra.mxu0 %v1373
        %1408 = vmatprep.subr.bf16.mxu0 0
        %1409 = vmatpush2.bf16.msra.mxu0 %v1372
        %1410 = vmatprep.subr.bf16.mxu0 0
        %1411 = vmatpush2.bf16.msra.mxu0 %v1371
        %1412 = vmatprep.subr.bf16.mxu0 0
        %1413 = vmatpush2.bf16.msra.mxu0 %v1370
        %1414 = vmatprep.subr.bf16.mxu0 0
        %1415 = vmatpush2.bf16.msra.mxu0 %v1369
        %1416 = vmatprep.subr.bf16.mxu0 0
        %1417 = vmatpush2.bf16.msra.mxu0 %v1368
        %1418 = vmatprep.subr.bf16.mxu0 0
        %1419 = vmatpush2.bf16.msra.mxu0 %v1367
        %1420 = vmatprep.subr.bf16.mxu0 0
        %1421 = vmatpush2.bf16.msra.mxu0 %v1366
        %1422 = vmatprep.mubr.bf16.mxu0 %v1261
        %1423 = vmatmul.mubr.bf16.gmra.mxu0 %v1260
        %v1424 = vpop.f32.mrf.mxu0
        %v1425 = vadd.f32 0.0, %v1424
        %v1426 = vpop.f32.mrf.mxu0
        %v1427 = vpop.f32.mrf.mxu0
        %v1428 = vadd.f32 0.0, %v1427
        %v1429 = vpop.f32.mrf.mxu0
        %1430 = vdwg.mxu0
        %v1431 = vadd.f32 %v1258, %v1425
        %v1432 = vadd.f32 %v1259, %v1428
        %v1433 = vld [vmem:[%s8] sm:$0x1]
        %v1435 = vlaneseq
        %v1436 = vshrl.u32 %v1435, 7
        %v1437 = vsub.s32 0, %v1436
        %v1438 = vrot.slane %v1433, %v1437
        %v1440 = vadd.f32 %v1431, %v1438
        %v1441 = vadd.f32 %v1432, %v1438
        %vm1442 = vcmp.gt.f32.partialorder %v1440, 0.0
        %vm1443 = vcmp.gt.f32.partialorder %v1441, 0.0
        %v1444 = vmin.f32 %v1440, 0.0
        %v1445 = vmin.f32 %v1441, 0.0
        %v1446 = vmul.f32 %v1444, 1.442695
        %v1447 = vpow.pop %v1446
        %v1448 = vmul.f32 %v1445, 1.442695
        %v1449 = vpow.pop %v1448
        %v1450 = vsub.f32 %v1447, 1.0
        %v1451 = vsub.f32 %v1449, 1.0
        %v1452 = vsel %vm1442, %v1440, %v1450
        %v1453 = vsel %vm1443, %v1441, %v1451
        %v1454 = vsub.f32 0.0, %v1440
        %v1455 = vsub.f32 0.0, %v1441
        %vm1456 = vcmp.gt.f32.partialorder %v1454, 0.0
        %vm1457 = vcmp.gt.f32.partialorder %v1455, 0.0
        %v1458 = vmin.f32 %v1454, 0.0
        %v1459 = vmin.f32 %v1455, 0.0
        %v1460 = vmul.f32 %v1458, 1.442695
        %v1461 = vpow.pop %v1460
        %v1462 = vmul.f32 %v1459, 1.442695
        %v1463 = vpow.pop %v1462
        %v1464 = vsub.f32 %v1461, 1.0
        %v1465 = vsub.f32 %v1463, 1.0
        %v1466 = vsel %vm1456, %v1454, %v1464
        %v1467 = vsel %vm1457, %v1455, %v1465
        %v1472 = vrot.slane %v1452, 7
        %v1473 = vrot.slane %v1466, 7
        %v1474 = vrot.slane %v1453, 7
        %v1475 = vsel %vm895, %v1472, %v1474
        %v1476 = vrot.slane %v1467, 7
        %v1477 = vsel %vm895, %v1473, %v1476
        %v1482 = vsel %vm895, 0.0, %v1472
        %v1483 = vsel %vm895, 0.0, %v1473
        %v1484 = vpack.c.bf16 %v1475, %v1482
        %v1485 = vpack.c.bf16 %v1477, %v1483
        %v1486 = vld [vmem:[#allocation13] sm:$0xff]
        %v1487 = vld [vmem:[#allocation13 + $0x8] sm:$0xff]
        %v1488 = vld [vmem:[#allocation13 + $0x10] sm:$0xff]
        %v1489 = vld [vmem:[#allocation13 + $0x18] sm:$0xff]
        %v1490 = vld [vmem:[#allocation13 + $0x20] sm:$0xff]
        %v1491 = vld [vmem:[#allocation13 + $0x28] sm:$0xff]
        %v1492 = vld [vmem:[#allocation13 + $0x30] sm:$0xff]
        %v1493 = vld [vmem:[#allocation13 + $0x38] sm:$0xff]
        %v1494 = vld [vmem:[#allocation13 + $0x40] sm:$0xff]
        %v1495 = vld [vmem:[#allocation13 + $0x48] sm:$0xff]
        %v1496 = vld [vmem:[#allocation13 + $0x50] sm:$0xff]
        %v1497 = vld [vmem:[#allocation13 + $0x58] sm:$0xff]
        %v1498 = vld [vmem:[#allocation13 + $0x60] sm:$0xff]
        %v1499 = vld [vmem:[#allocation13 + $0x68] sm:$0xff]
        %v1500 = vld [vmem:[#allocation13 + $0x70] sm:$0xff]
        %v1501 = vld [vmem:[#allocation13 + $0x78] sm:$0xff]
        %v1502 = vld [vmem:[#allocation13 + $0x80] sm:$0xff]
        %v1503 = vld [vmem:[#allocation13 + $0x88] sm:$0xff]
        %v1504 = vld [vmem:[#allocation13 + $0x90] sm:$0xff]
        %v1505 = vld [vmem:[#allocation13 + $0x98] sm:$0xff]
        %v1506 = vld [vmem:[#allocation13 + $0xa0] sm:$0xff]
        %v1507 = vld [vmem:[#allocation13 + $0xa8] sm:$0xff]
        %v1508 = vld [vmem:[#allocation13 + $0xb0] sm:$0xff]
        %v1509 = vld [vmem:[#allocation13 + $0xb8] sm:$0xff]
        %v1510 = vld [vmem:[#allocation13 + $0xc0] sm:$0xff]
        %v1511 = vld [vmem:[#allocation13 + $0xc8] sm:$0xff]
        %v1512 = vld [vmem:[#allocation13 + $0xd0] sm:$0xff]
        %v1513 = vld [vmem:[#allocation13 + $0xd8] sm:$0xff]
        %v1514 = vld [vmem:[#allocation13 + $0xe0] sm:$0xff]
        %v1515 = vld [vmem:[#allocation13 + $0xe8] sm:$0xff]
        %v1516 = vld [vmem:[#allocation13 + $0xf0] sm:$0xff]
        %v1517 = vld [vmem:[#allocation13 + $0xf8] sm:$0xff]
        %v1518 = vpack.c.bf16 %v1453, %v1452
        %v1519 = vpack.c.bf16 %v1467, %v1466
        %s1520 = scalar_lea.vmem [#allocation13], 256
        %v1521 = vld [vmem:[%s1520] sm:$0xff]
        %v1522 = vld [vmem:[%s1520 + $0x8] sm:$0xff]
        %v1523 = vld [vmem:[%s1520 + $0x10] sm:$0xff]
        %v1524 = vld [vmem:[%s1520 + $0x18] sm:$0xff]
        %v1525 = vld [vmem:[%s1520 + $0x20] sm:$0xff]
        %v1526 = vld [vmem:[%s1520 + $0x28] sm:$0xff]
        %v1527 = vld [vmem:[%s1520 + $0x30] sm:$0xff]
        %v1528 = vld [vmem:[%s1520 + $0x38] sm:$0xff]
        %v1529 = vld [vmem:[%s1520 + $0x40] sm:$0xff]
        %v1530 = vld [vmem:[%s1520 + $0x48] sm:$0xff]
        %v1531 = vld [vmem:[%s1520 + $0x50] sm:$0xff]
        %v1532 = vld [vmem:[%s1520 + $0x58] sm:$0xff]
        %v1533 = vld [vmem:[%s1520 + $0x60] sm:$0xff]
        %v1534 = vld [vmem:[%s1520 + $0x68] sm:$0xff]
        %v1535 = vld [vmem:[%s1520 + $0x70] sm:$0xff]
        %v1536 = vld [vmem:[%s1520 + $0x78] sm:$0xff]
        %v1537 = vld [vmem:[%s1520 + $0x80] sm:$0xff]
        %v1538 = vld [vmem:[%s1520 + $0x88] sm:$0xff]
        %v1539 = vld [vmem:[%s1520 + $0x90] sm:$0xff]
        %v1540 = vld [vmem:[%s1520 + $0x98] sm:$0xff]
        %v1541 = vld [vmem:[%s1520 + $0xa0] sm:$0xff]
        %v1542 = vld [vmem:[%s1520 + $0xa8] sm:$0xff]
        %v1543 = vld [vmem:[%s1520 + $0xb0] sm:$0xff]
        %v1544 = vld [vmem:[%s1520 + $0xb8] sm:$0xff]
        %v1545 = vld [vmem:[%s1520 + $0xc0] sm:$0xff]
        %v1546 = vld [vmem:[%s1520 + $0xc8] sm:$0xff]
        %v1547 = vld [vmem:[%s1520 + $0xd0] sm:$0xff]
        %v1548 = vld [vmem:[%s1520 + $0xd8] sm:$0xff]
        %v1549 = vld [vmem:[%s1520 + $0xe0] sm:$0xff]
        %v1550 = vld [vmem:[%s1520 + $0xe8] sm:$0xff]
        %v1551 = vld [vmem:[%s1520 + $0xf0] sm:$0xff]
        %v1552 = vld [vmem:[%s1520 + $0xf8] sm:$0xff]
        %v1585 = vunpack.c.l.b16 %v1521
        %v1586 = vunpack.c.h.b16 %v1521
        %v1587 = vunpack.c.l.b16 %v1522
        %v1588 = vunpack.c.h.b16 %v1522
        %v1589 = vunpack.c.l.b16 %v1523
        %v1590 = vunpack.c.h.b16 %v1523
        %v1591 = vunpack.c.l.b16 %v1524
        %v1592 = vunpack.c.h.b16 %v1524
        %v1593 = vunpack.c.l.b16 %v1525
        %v1594 = vunpack.c.h.b16 %v1525
        %v1595 = vunpack.c.l.b16 %v1526
        %v1596 = vunpack.c.h.b16 %v1526
        %v1597 = vunpack.c.l.b16 %v1527
        %v1598 = vunpack.c.h.b16 %v1527
        %v1599 = vunpack.c.l.b16 %v1528
        %v1600 = vunpack.c.h.b16 %v1528
        %v1601 = vunpack.c.l.b16 %v1529
        %v1602 = vunpack.c.h.b16 %v1529
        %v1603 = vunpack.c.l.b16 %v1530
        %v1604 = vunpack.c.h.b16 %v1530
        %v1605 = vunpack.c.l.b16 %v1531
        %v1606 = vunpack.c.h.b16 %v1531
        %v1607 = vunpack.c.l.b16 %v1532
        %v1608 = vunpack.c.h.b16 %v1532
        %v1609 = vunpack.c.l.b16 %v1533
        %v1610 = vunpack.c.h.b16 %v1533
        %v1611 = vunpack.c.l.b16 %v1534
        %v1612 = vunpack.c.h.b16 %v1534
        %v1613 = vunpack.c.l.b16 %v1535
        %v1614 = vunpack.c.h.b16 %v1535
        %v1615 = vunpack.c.l.b16 %v1536
        %v1616 = vunpack.c.h.b16 %v1536
        %v1617 = vunpack.c.l.b16 %v1537
        %v1618 = vunpack.c.h.b16 %v1537
        %v1619 = vunpack.c.l.b16 %v1538
        %v1620 = vunpack.c.h.b16 %v1538
        %v1621 = vunpack.c.l.b16 %v1539
        %v1622 = vunpack.c.h.b16 %v1539
        %v1623 = vunpack.c.l.b16 %v1540
        %v1624 = vunpack.c.h.b16 %v1540
        %v1625 = vunpack.c.l.b16 %v1541
        %v1626 = vunpack.c.h.b16 %v1541
        %v1627 = vunpack.c.l.b16 %v1542
        %v1628 = vunpack.c.h.b16 %v1542
        %v1629 = vunpack.c.l.b16 %v1543
        %v1630 = vunpack.c.h.b16 %v1543
        %v1631 = vunpack.c.l.b16 %v1544
        %v1632 = vunpack.c.h.b16 %v1544
        %v1633 = vunpack.c.l.b16 %v1545
        %v1634 = vunpack.c.h.b16 %v1545
        %v1635 = vunpack.c.l.b16 %v1546
        %v1636 = vunpack.c.h.b16 %v1546
        %v1637 = vunpack.c.l.b16 %v1547
        %v1638 = vunpack.c.h.b16 %v1547
        %v1639 = vunpack.c.l.b16 %v1548
        %v1640 = vunpack.c.h.b16 %v1548
        %v1641 = vunpack.c.l.b16 %v1549
        %v1642 = vunpack.c.h.b16 %v1549
        %v1643 = vunpack.c.l.b16 %v1550
        %v1644 = vunpack.c.h.b16 %v1550
        %v1645 = vunpack.c.l.b16 %v1551
        %v1646 = vunpack.c.h.b16 %v1551
        %v1647 = vunpack.c.l.b16 %v1552
        %v1648 = vunpack.c.h.b16 %v1552
        %v1649 = vpack.c.b16 %v1587, %v1585
        %v1650 = vpack.c.b16 %v1588, %v1586
        %v1651 = vpack.c.b16 %v1591, %v1589
        %v1652 = vpack.c.b16 %v1592, %v1590
        %v1653 = vpack.c.b16 %v1595, %v1593
        %v1654 = vpack.c.b16 %v1596, %v1594
        %v1655 = vpack.c.b16 %v1599, %v1597
        %v1656 = vpack.c.b16 %v1600, %v1598
        %v1657 = vpack.c.b16 %v1603, %v1601
        %v1658 = vpack.c.b16 %v1604, %v1602
        %v1659 = vpack.c.b16 %v1607, %v1605
        %v1660 = vpack.c.b16 %v1608, %v1606
        %v1661 = vpack.c.b16 %v1611, %v1609
        %v1662 = vpack.c.b16 %v1612, %v1610
        %v1663 = vpack.c.b16 %v1615, %v1613
        %v1664 = vpack.c.b16 %v1616, %v1614
        %v1665 = vpack.c.b16 %v1619, %v1617
        %v1666 = vpack.c.b16 %v1620, %v1618
        %v1667 = vpack.c.b16 %v1623, %v1621
        %v1668 = vpack.c.b16 %v1624, %v1622
        %v1669 = vpack.c.b16 %v1627, %v1625
        %v1670 = vpack.c.b16 %v1628, %v1626
        %v1671 = vpack.c.b16 %v1631, %v1629
        %v1672 = vpack.c.b16 %v1632, %v1630
        %v1673 = vpack.c.b16 %v1635, %v1633
        %v1674 = vpack.c.b16 %v1636, %v1634
        %v1675 = vpack.c.b16 %v1639, %v1637
        %v1676 = vpack.c.b16 %v1640, %v1638
        %v1677 = vpack.c.b16 %v1643, %v1641
        %v1678 = vpack.c.b16 %v1644, %v1642
        %v1679 = vpack.c.b16 %v1647, %v1645
        %v1680 = vpack.c.b16 %v1648, %v1646
        %1713 = vmatprep.subr.bf16.mxu0 %v1664
        %1714 = vmatpush1.bf16.msra.mxu0 %v1663
        %1715 = vmatprep.subr.bf16.mxu0 %v1662
        %1716 = vmatpush1.bf16.msra.mxu0 %v1661
        %1717 = vmatprep.subr.bf16.mxu0 %v1660
        %1718 = vmatpush1.bf16.msra.mxu0 %v1659
        %1719 = vmatprep.subr.bf16.mxu0 %v1658
        %1720 = vmatpush1.bf16.msra.mxu0 %v1657
        %1721 = vmatprep.subr.bf16.mxu0 %v1656
        %1722 = vmatpush1.bf16.msra.mxu0 %v1655
        %1723 = vmatprep.subr.bf16.mxu0 %v1654
        %1724 = vmatpush1.bf16.msra.mxu0 %v1653
        %1725 = vmatprep.subr.bf16.mxu0 %v1652
        %1726 = vmatpush1.bf16.msra.mxu0 %v1651
        %1727 = vmatprep.subr.bf16.mxu0 %v1650
        %1728 = vmatpush1.bf16.msra.mxu0 %v1649
        %1729 = vmatprep.subr.bf16.mxu0 %v1680
        %1730 = vmatpush2.bf16.msra.mxu0 %v1679
        %1731 = vmatprep.subr.bf16.mxu0 %v1678
        %1732 = vmatpush2.bf16.msra.mxu0 %v1677
        %1733 = vmatprep.subr.bf16.mxu0 %v1676
        %1734 = vmatpush2.bf16.msra.mxu0 %v1675
        %1735 = vmatprep.subr.bf16.mxu0 %v1674
        %1736 = vmatpush2.bf16.msra.mxu0 %v1673
        %1737 = vmatprep.subr.bf16.mxu0 %v1672
        %1738 = vmatpush2.bf16.msra.mxu0 %v1671
        %1739 = vmatprep.subr.bf16.mxu0 %v1670
        %1740 = vmatpush2.bf16.msra.mxu0 %v1669
        %1741 = vmatprep.subr.bf16.mxu0 %v1668
        %1742 = vmatpush2.bf16.msra.mxu0 %v1667
        %1743 = vmatprep.subr.bf16.mxu0 %v1666
        %1744 = vmatpush2.bf16.msra.mxu0 %v1665
        %1745 = vmatprep.mubr.bf16.mxu0 %v1519
        %1746 = vmatmul.mubr.bf16.gmra.mxu0 %v1518
        %v1747 = vpop.f32.mrf.mxu0
        %v1748 = vadd.f32 0.0, %v1747
        %v1749 = vpop.f32.mrf.mxu0
        %v1750 = vadd.f32 0.0, %v1749
        %v1751 = vpop.f32.mrf.mxu0
        %v1752 = vadd.f32 0.0, %v1751
        %v1753 = vpop.f32.mrf.mxu0
        %v1754 = vadd.f32 0.0, %v1753
        %1755 = vdwg.mxu0
        %v1788 = vunpack.c.l.b16 %v1486
        %v1789 = vunpack.c.h.b16 %v1486
        %v1790 = vunpack.c.l.b16 %v1487
        %v1791 = vunpack.c.h.b16 %v1487
        %v1792 = vunpack.c.l.b16 %v1488
        %v1793 = vunpack.c.h.b16 %v1488
        %v1794 = vunpack.c.l.b16 %v1489
        %v1795 = vunpack.c.h.b16 %v1489
        %v1796 = vunpack.c.l.b16 %v1490
        %v1797 = vunpack.c.h.b16 %v1490
        %v1798 = vunpack.c.l.b16 %v1491
        %v1799 = vunpack.c.h.b16 %v1491
        %v1800 = vunpack.c.l.b16 %v1492
        %v1801 = vunpack.c.h.b16 %v1492
        %v1802 = vunpack.c.l.b16 %v1493
        %v1803 = vunpack.c.h.b16 %v1493
        %v1804 = vunpack.c.l.b16 %v1494
        %v1805 = vunpack.c.h.b16 %v1494
        %v1806 = vunpack.c.l.b16 %v1495
        %v1807 = vunpack.c.h.b16 %v1495
        %v1808 = vunpack.c.l.b16 %v1496
        %v1809 = vunpack.c.h.b16 %v1496
        %v1810 = vunpack.c.l.b16 %v1497
        %v1811 = vunpack.c.h.b16 %v1497
        %v1812 = vunpack.c.l.b16 %v1498
        %v1813 = vunpack.c.h.b16 %v1498
        %v1814 = vunpack.c.l.b16 %v1499
        %v1815 = vunpack.c.h.b16 %v1499
        %v1816 = vunpack.c.l.b16 %v1500
        %v1817 = vunpack.c.h.b16 %v1500
        %v1818 = vunpack.c.l.b16 %v1501
        %v1819 = vunpack.c.h.b16 %v1501
        %v1820 = vunpack.c.l.b16 %v1502
        %v1821 = vunpack.c.h.b16 %v1502
        %v1822 = vunpack.c.l.b16 %v1503
        %v1823 = vunpack.c.h.b16 %v1503
        %v1824 = vunpack.c.l.b16 %v1504
        %v1825 = vunpack.c.h.b16 %v1504
        %v1826 = vunpack.c.l.b16 %v1505
        %v1827 = vunpack.c.h.b16 %v1505
        %v1828 = vunpack.c.l.b16 %v1506
        %v1829 = vunpack.c.h.b16 %v1506
        %v1830 = vunpack.c.l.b16 %v1507
        %v1831 = vunpack.c.h.b16 %v1507
        %v1832 = vunpack.c.l.b16 %v1508
        %v1833 = vunpack.c.h.b16 %v1508
        %v1834 = vunpack.c.l.b16 %v1509
        %v1835 = vunpack.c.h.b16 %v1509
        %v1836 = vunpack.c.l.b16 %v1510
        %v1837 = vunpack.c.h.b16 %v1510
        %v1838 = vunpack.c.l.b16 %v1511
        %v1839 = vunpack.c.h.b16 %v1511
        %v1840 = vunpack.c.l.b16 %v1512
        %v1841 = vunpack.c.h.b16 %v1512
        %v1842 = vunpack.c.l.b16 %v1513
        %v1843 = vunpack.c.h.b16 %v1513
        %v1844 = vunpack.c.l.b16 %v1514
        %v1845 = vunpack.c.h.b16 %v1514
        %v1846 = vunpack.c.l.b16 %v1515
        %v1847 = vunpack.c.h.b16 %v1515
        %v1848 = vunpack.c.l.b16 %v1516
        %v1849 = vunpack.c.h.b16 %v1516
        %v1850 = vunpack.c.l.b16 %v1517
        %v1851 = vunpack.c.h.b16 %v1517
        %v1852 = vpack.c.b16 %v1790, %v1788
        %v1853 = vpack.c.b16 %v1791, %v1789
        %v1854 = vpack.c.b16 %v1794, %v1792
        %v1855 = vpack.c.b16 %v1795, %v1793
        %v1856 = vpack.c.b16 %v1798, %v1796
        %v1857 = vpack.c.b16 %v1799, %v1797
        %v1858 = vpack.c.b16 %v1802, %v1800
        %v1859 = vpack.c.b16 %v1803, %v1801
        %v1860 = vpack.c.b16 %v1806, %v1804
        %v1861 = vpack.c.b16 %v1807, %v1805
        %v1862 = vpack.c.b16 %v1810, %v1808
        %v1863 = vpack.c.b16 %v1811, %v1809
        %v1864 = vpack.c.b16 %v1814, %v1812
        %v1865 = vpack.c.b16 %v1815, %v1813
        %v1866 = vpack.c.b16 %v1818, %v1816
        %v1867 = vpack.c.b16 %v1819, %v1817
        %v1868 = vpack.c.b16 %v1822, %v1820
        %v1869 = vpack.c.b16 %v1823, %v1821
        %v1870 = vpack.c.b16 %v1826, %v1824
        %v1871 = vpack.c.b16 %v1827, %v1825
        %v1872 = vpack.c.b16 %v1830, %v1828
        %v1873 = vpack.c.b16 %v1831, %v1829
        %v1874 = vpack.c.b16 %v1834, %v1832
        %v1875 = vpack.c.b16 %v1835, %v1833
        %v1876 = vpack.c.b16 %v1838, %v1836
        %v1877 = vpack.c.b16 %v1839, %v1837
        %v1878 = vpack.c.b16 %v1842, %v1840
        %v1879 = vpack.c.b16 %v1843, %v1841
        %v1880 = vpack.c.b16 %v1846, %v1844
        %v1881 = vpack.c.b16 %v1847, %v1845
        %v1882 = vpack.c.b16 %v1850, %v1848
        %v1883 = vpack.c.b16 %v1851, %v1849
        %1916 = vmatprep.subr.bf16.mxu0 %v1867
        %1917 = vmatpush1.bf16.msra.mxu0 %v1866
        %1918 = vmatprep.subr.bf16.mxu0 %v1865
        %1919 = vmatpush1.bf16.msra.mxu0 %v1864
        %1920 = vmatprep.subr.bf16.mxu0 %v1863
        %1921 = vmatpush1.bf16.msra.mxu0 %v1862
        %1922 = vmatprep.subr.bf16.mxu0 %v1861
        %1923 = vmatpush1.bf16.msra.mxu0 %v1860
        %1924 = vmatprep.subr.bf16.mxu0 %v1859
        %1925 = vmatpush1.bf16.msra.mxu0 %v1858
        %1926 = vmatprep.subr.bf16.mxu0 %v1857
        %1927 = vmatpush1.bf16.msra.mxu0 %v1856
        %1928 = vmatprep.subr.bf16.mxu0 %v1855
        %1929 = vmatpush1.bf16.msra.mxu0 %v1854
        %1930 = vmatprep.subr.bf16.mxu0 %v1853
        %1931 = vmatpush1.bf16.msra.mxu0 %v1852
        %1932 = vmatprep.subr.bf16.mxu0 %v1883
        %1933 = vmatpush2.bf16.msra.mxu0 %v1882
        %1934 = vmatprep.subr.bf16.mxu0 %v1881
        %1935 = vmatpush2.bf16.msra.mxu0 %v1880
        %1936 = vmatprep.subr.bf16.mxu0 %v1879
        %1937 = vmatpush2.bf16.msra.mxu0 %v1878
        %1938 = vmatprep.subr.bf16.mxu0 %v1877
        %1939 = vmatpush2.bf16.msra.mxu0 %v1876
        %1940 = vmatprep.subr.bf16.mxu0 %v1875
        %1941 = vmatpush2.bf16.msra.mxu0 %v1874
        %1942 = vmatprep.subr.bf16.mxu0 %v1873
        %1943 = vmatpush2.bf16.msra.mxu0 %v1872
        %1944 = vmatprep.subr.bf16.mxu0 %v1871
        %1945 = vmatpush2.bf16.msra.mxu0 %v1870
        %1946 = vmatprep.subr.bf16.mxu0 %v1869
        %1947 = vmatpush2.bf16.msra.mxu0 %v1868
        %1948 = vmatprep.mubr.bf16.mxu0 %v1485
        %1949 = vmatmul.mubr.bf16.gmra.mxu0 %v1484
        %v1950 = vpop.f32.mrf.mxu0
        %v1951 = vadd.f32 %v1748, %v1950
        %v1952 = vpop.f32.mrf.mxu0
        %v1953 = vadd.f32 %v1750, %v1952
        %v1954 = vpop.f32.mrf.mxu0
        %v1955 = vadd.f32 %v1752, %v1954
        %v1956 = vpop.f32.mrf.mxu0
        %v1957 = vadd.f32 %v1754, %v1956
        %1958 = vdwg.mxu0
        %v1959 = vld [vmem:[%s9] sm:$0x3]
        %v1961 = vlaneseq
        %v1962 = vshrl.u32 %v1961, 7
        %v1963 = vsub.s32 0, %v1962
        %v1964 = vrot.slane %v1959, %v1963
        %v1965 = vlaneseq
        %v1966 = vshrl.u32 %v1965, 7
        %v1967 = vsub.s32 1, %v1966
        %v1968 = vrot.slane %v1959, %v1967
        %v1971 = vadd.f32 %v1951, %v1964
        %v1972 = vadd.f32 %v1953, %v1968
        %v1973 = vadd.f32 %v1955, %v1964
        %v1974 = vadd.f32 %v1957, %v1968
        %v1975 = vxor.u32 %v1972, 2147483648
        %v1976 = vxor.u32 %v1974, 2147483648
        %v1977 = vmul.f32 %v1975, 1.442695
        %v1978 = vpow.pop %v1977
        %v1979 = vmul.f32 %v1976, 1.442695
        %v1980 = vpow.pop %v1979
        %v1981 = vadd.f32 %v1978, 1.0
        %v1982 = vadd.f32 %v1980, 1.0
        %v1983 = vrcp.pop %v1981
        %v1984 = vmul.f32 1.0, %v1983
        %v1985 = vrcp.pop %v1982
        %v1986 = vmul.f32 1.0, %v1985
        %v1987 = vmul.f32 %v1971, %v1984
        %v1988 = vmul.f32 %v1973, %v1986
        %v1989 = vadd.f32 %v833, %v1987
        %v1990 = vadd.f32 %v834, %v1988
        %v1991 = vld [vmem:[%s737] sm:$0xff]
        %v1992 = vld [vmem:[%s737 + $0x8] sm:$0xff]
        %vm1993 = vcmp.gt.f32.partialorder %v1989, 0.0
        %vm1994 = vcmp.gt.f32.partialorder %v1990, 0.0
        %v1995 = vmin.f32 %v1989, 0.0
        %v1996 = vmin.f32 %v1990, 0.0
        %v1997 = vmul.f32 %v1995, 1.442695
        %v1998 = vpow.pop %v1997
        %v1999 = vmul.f32 %v1996, 1.442695
        %v2000 = vpow.pop %v1999
        %v2001 = vsub.f32 %v1998, 1.0
        %v2002 = vsub.f32 %v2000, 1.0
        %v2003 = vsel %vm1993, %v1989, %v2001
        %v2004 = vsel %vm1994, %v1990, %v2002
        %vm2005 = vcmp.gt.f32.partialorder %v1991, 0.0
        %vm2006 = vcmp.gt.f32.partialorder %v1992, 0.0
        %v2007 = vmin.f32 %v1991, 0.0
        %v2008 = vmin.f32 %v1992, 0.0
        %v2009 = vmul.f32 %v2007, 1.442695
        %v2010 = vpow.pop %v2009
        %v2011 = vmul.f32 %v2008, 1.442695
        %v2012 = vpow.pop %v2011
        %v2013 = vsub.f32 %v2010, 1.0
        %v2014 = vsub.f32 %v2012, 1.0
        %v2015 = vsel %vm2005, %v1991, %v2013
        %v2016 = vsel %vm2006, %v1992, %v2014
        %v2017 = vsub.f32 0.0, %v1989
        %v2018 = vsub.f32 0.0, %v1990
        %vm2019 = vcmp.gt.f32.partialorder %v2017, 0.0
        %vm2020 = vcmp.gt.f32.partialorder %v2018, 0.0
        %v2021 = vmin.f32 %v2017, 0.0
        %v2022 = vmin.f32 %v2018, 0.0
        %v2023 = vmul.f32 %v2021, 1.442695
        %v2024 = vpow.pop %v2023
        %v2025 = vmul.f32 %v2022, 1.442695
        %v2026 = vpow.pop %v2025
        %v2027 = vsub.f32 %v2024, 1.0
        %v2028 = vsub.f32 %v2026, 1.0
        %v2029 = vsel %vm2019, %v2017, %v2027
        %v2030 = vsel %vm2020, %v2018, %v2028
        %v2031 = vsub.f32 0.0, %v1991
        %v2032 = vsub.f32 0.0, %v1992
        %vm2033 = vcmp.gt.f32.partialorder %v2031, 0.0
        %vm2034 = vcmp.gt.f32.partialorder %v2032, 0.0
        %v2035 = vmin.f32 %v2031, 0.0
        %v2036 = vmin.f32 %v2032, 0.0
        %v2037 = vmul.f32 %v2035, 1.442695
        %v2038 = vpow.pop %v2037
        %v2039 = vmul.f32 %v2036, 1.442695
        %v2040 = vpow.pop %v2039
        %v2041 = vsub.f32 %v2038, 1.0
        %v2042 = vsub.f32 %v2040, 1.0
        %v2043 = vsel %vm2033, %v2031, %v2041
        %v2044 = vsel %vm2034, %v2032, %v2042
        %vm2045 = vcmp.gt.f32.partialorder %v835, 0.0
        %vm2046 = vcmp.gt.f32.partialorder %v836, 0.0
        %v2047 = vmin.f32 %v835, 0.0
        %v2048 = vmin.f32 %v836, 0.0
        %v2049 = vmul.f32 %v2047, 1.442695
        %v2050 = vpow.pop %v2049
        %v2051 = vmul.f32 %v2048, 1.442695
        %v2052 = vpow.pop %v2051
        %v2053 = vsub.f32 %v2050, 1.0
        %v2054 = vsub.f32 %v2052, 1.0
        %v2055 = vsel %vm2045, %v835, %v2053
        %v2056 = vsel %vm2046, %v836, %v2054
        %v2057 = vsub.f32 0.0, %v835
        %v2058 = vsub.f32 0.0, %v836
        %vm2059 = vcmp.gt.f32.partialorder %v2057, 0.0
        %vm2060 = vcmp.gt.f32.partialorder %v2058, 0.0
        %v2061 = vmin.f32 %v2057, 0.0
        %v2062 = vmin.f32 %v2058, 0.0
        %v2063 = vmul.f32 %v2061, 1.442695
        %v2064 = vpow.pop %v2063
        %v2065 = vmul.f32 %v2062, 1.442695
        %v2066 = vpow.pop %v2065
        %v2067 = vsub.f32 %v2064, 1.0
        %v2068 = vsub.f32 %v2066, 1.0
        %v2069 = vsel %vm2059, %v2057, %v2067
        %v2070 = vsel %vm2060, %v2058, %v2068
        %v2075 = vrot.slane %v2055, 7
        %v2076 = vrot.slane %v2069, 7
        %v2077 = vrot.slane %v2056, 7
        %v2078 = vsel %vm895, %v2075, %v2077
        %v2079 = vrot.slane %v2070, 7
        %v2080 = vsel %vm895, %v2076, %v2079
        %v2085 = vsel %vm895, 0.0, %v2075
        %v2086 = vsel %vm895, 0.0, %v2076
        %v2087 = vpack.c.bf16 %v2078, %v2085
        %v2088 = vpack.c.bf16 %v2080, %v2086
        %v2089 = vld [vmem:[#allocation14] sm:$0xf]
        %v2090 = vld [vmem:[#allocation14 + $0x4] sm:$0xf]
        %v2091 = vld [vmem:[#allocation14 + $0x8] sm:$0xf]
        %v2092 = vld [vmem:[#allocation14 + $0xc] sm:$0xf]
        %v2093 = vld [vmem:[#allocation14 + $0x10] sm:$0xf]
        %v2094 = vld [vmem:[#allocation14 + $0x14] sm:$0xf]
        %v2095 = vld [vmem:[#allocation14 + $0x18] sm:$0xf]
        %v2096 = vld [vmem:[#allocation14 + $0x1c] sm:$0xf]
        %v2097 = vld [vmem:[#allocation14 + $0x20] sm:$0xf]
        %v2098 = vld [vmem:[#allocation14 + $0x24] sm:$0xf]
        %v2099 = vld [vmem:[#allocation14 + $0x28] sm:$0xf]
        %v2100 = vld [vmem:[#allocation14 + $0x2c] sm:$0xf]
        %v2101 = vld [vmem:[#allocation14 + $0x30] sm:$0xf]
        %v2102 = vld [vmem:[#allocation14 + $0x34] sm:$0xf]
        %v2103 = vld [vmem:[#allocation14 + $0x38] sm:$0xf]
        %v2104 = vld [vmem:[#allocation14 + $0x3c] sm:$0xf]
        %v2105 = vld [vmem:[#allocation14 + $0x40] sm:$0xf]
        %v2106 = vld [vmem:[#allocation14 + $0x44] sm:$0xf]
        %v2107 = vld [vmem:[#allocation14 + $0x48] sm:$0xf]
        %v2108 = vld [vmem:[#allocation14 + $0x4c] sm:$0xf]
        %v2109 = vld [vmem:[#allocation14 + $0x50] sm:$0xf]
        %v2110 = vld [vmem:[#allocation14 + $0x54] sm:$0xf]
        %v2111 = vld [vmem:[#allocation14 + $0x58] sm:$0xf]
        %v2112 = vld [vmem:[#allocation14 + $0x5c] sm:$0xf]
        %v2113 = vld [vmem:[#allocation14 + $0x60] sm:$0xf]
        %v2114 = vld [vmem:[#allocation14 + $0x64] sm:$0xf]
        %v2115 = vld [vmem:[#allocation14 + $0x68] sm:$0xf]
        %v2116 = vld [vmem:[#allocation14 + $0x6c] sm:$0xf]
        %v2117 = vld [vmem:[#allocation14 + $0x70] sm:$0xf]
        %v2118 = vld [vmem:[#allocation14 + $0x74] sm:$0xf]
        %v2119 = vld [vmem:[#allocation14 + $0x78] sm:$0xf]
        %v2120 = vld [vmem:[#allocation14 + $0x7c] sm:$0xf]
        %v2121 = vpack.c.bf16 %v2056, %v2055
        %v2122 = vpack.c.bf16 %v2070, %v2069
        %s2123 = scalar_lea.vmem [#allocation14], 128
        %v2124 = vld [vmem:[%s2123] sm:$0xf]
        %v2125 = vld [vmem:[%s2123 + $0x4] sm:$0xf]
        %v2126 = vld [vmem:[%s2123 + $0x8] sm:$0xf]
        %v2127 = vld [vmem:[%s2123 + $0xc] sm:$0xf]
        %v2128 = vld [vmem:[%s2123 + $0x10] sm:$0xf]
        %v2129 = vld [vmem:[%s2123 + $0x14] sm:$0xf]
        %v2130 = vld [vmem:[%s2123 + $0x18] sm:$0xf]
        %v2131 = vld [vmem:[%s2123 + $0x1c] sm:$0xf]
        %v2132 = vld [vmem:[%s2123 + $0x20] sm:$0xf]
        %v2133 = vld [vmem:[%s2123 + $0x24] sm:$0xf]
        %v2134 = vld [vmem:[%s2123 + $0x28] sm:$0xf]
        %v2135 = vld [vmem:[%s2123 + $0x2c] sm:$0xf]
        %v2136 = vld [vmem:[%s2123 + $0x30] sm:$0xf]
        %v2137 = vld [vmem:[%s2123 + $0x34] sm:$0xf]
        %v2138 = vld [vmem:[%s2123 + $0x38] sm:$0xf]
        %v2139 = vld [vmem:[%s2123 + $0x3c] sm:$0xf]
        %v2140 = vld [vmem:[%s2123 + $0x40] sm:$0xf]
        %v2141 = vld [vmem:[%s2123 + $0x44] sm:$0xf]
        %v2142 = vld [vmem:[%s2123 + $0x48] sm:$0xf]
        %v2143 = vld [vmem:[%s2123 + $0x4c] sm:$0xf]
        %v2144 = vld [vmem:[%s2123 + $0x50] sm:$0xf]
        %v2145 = vld [vmem:[%s2123 + $0x54] sm:$0xf]
        %v2146 = vld [vmem:[%s2123 + $0x58] sm:$0xf]
        %v2147 = vld [vmem:[%s2123 + $0x5c] sm:$0xf]
        %v2148 = vld [vmem:[%s2123 + $0x60] sm:$0xf]
        %v2149 = vld [vmem:[%s2123 + $0x64] sm:$0xf]
        %v2150 = vld [vmem:[%s2123 + $0x68] sm:$0xf]
        %v2151 = vld [vmem:[%s2123 + $0x6c] sm:$0xf]
        %v2152 = vld [vmem:[%s2123 + $0x70] sm:$0xf]
        %v2153 = vld [vmem:[%s2123 + $0x74] sm:$0xf]
        %v2154 = vld [vmem:[%s2123 + $0x78] sm:$0xf]
        %v2155 = vld [vmem:[%s2123 + $0x7c] sm:$0xf]
        %v2188 = vunpack.c.l.b16 %v2124
        %v2189 = vunpack.c.l.b16 %v2125
        %v2190 = vunpack.c.l.b16 %v2126
        %v2191 = vunpack.c.l.b16 %v2127
        %v2192 = vunpack.c.l.b16 %v2128
        %v2193 = vunpack.c.l.b16 %v2129
        %v2194 = vunpack.c.l.b16 %v2130
        %v2195 = vunpack.c.l.b16 %v2131
        %v2196 = vunpack.c.l.b16 %v2132
        %v2197 = vunpack.c.l.b16 %v2133
        %v2198 = vunpack.c.l.b16 %v2134
        %v2199 = vunpack.c.l.b16 %v2135
        %v2200 = vunpack.c.l.b16 %v2136
        %v2201 = vunpack.c.l.b16 %v2137
        %v2202 = vunpack.c.l.b16 %v2138
        %v2203 = vunpack.c.l.b16 %v2139
        %v2204 = vunpack.c.l.b16 %v2140
        %v2205 = vunpack.c.l.b16 %v2141
        %v2206 = vunpack.c.l.b16 %v2142
        %v2207 = vunpack.c.l.b16 %v2143
        %v2208 = vunpack.c.l.b16 %v2144
        %v2209 = vunpack.c.l.b16 %v2145
        %v2210 = vunpack.c.l.b16 %v2146
        %v2211 = vunpack.c.l.b16 %v2147
        %v2212 = vunpack.c.l.b16 %v2148
        %v2213 = vunpack.c.l.b16 %v2149
        %v2214 = vunpack.c.l.b16 %v2150
        %v2215 = vunpack.c.l.b16 %v2151
        %v2216 = vunpack.c.l.b16 %v2152
        %v2217 = vunpack.c.l.b16 %v2153
        %v2218 = vunpack.c.l.b16 %v2154
        %v2219 = vunpack.c.l.b16 %v2155
        %v2220 = vpack.c.b16 %v2189, %v2188
        %v2221 = vpack.c.b16 %v2191, %v2190
        %v2222 = vpack.c.b16 %v2193, %v2192
        %v2223 = vpack.c.b16 %v2195, %v2194
        %v2224 = vpack.c.b16 %v2197, %v2196
        %v2225 = vpack.c.b16 %v2199, %v2198
        %v2226 = vpack.c.b16 %v2201, %v2200
        %v2227 = vpack.c.b16 %v2203, %v2202
        %v2228 = vpack.c.b16 %v2205, %v2204
        %v2229 = vpack.c.b16 %v2207, %v2206
        %v2230 = vpack.c.b16 %v2209, %v2208
        %v2231 = vpack.c.b16 %v2211, %v2210
        %v2232 = vpack.c.b16 %v2213, %v2212
        %v2233 = vpack.c.b16 %v2215, %v2214
        %v2234 = vpack.c.b16 %v2217, %v2216
        %v2235 = vpack.c.b16 %v2219, %v2218
        %2252 = vmatprep.subr.bf16.mxu0 0
        %2253 = vmatpush1.bf16.msra.mxu0 %v2227
        %2254 = vmatprep.subr.bf16.mxu0 0
        %2255 = vmatpush1.bf16.msra.mxu0 %v2226
        %2256 = vmatprep.subr.bf16.mxu0 0
        %2257 = vmatpush1.bf16.msra.mxu0 %v2225
        %2258 = vmatprep.subr.bf16.mxu0 0
        %2259 = vmatpush1.bf16.msra.mxu0 %v2224
        %2260 = vmatprep.subr.bf16.mxu0 0
        %2261 = vmatpush1.bf16.msra.mxu0 %v2223
        %2262 = vmatprep.subr.bf16.mxu0 0
        %2263 = vmatpush1.bf16.msra.mxu0 %v2222
        %2264 = vmatprep.subr.bf16.mxu0 0
        %2265 = vmatpush1.bf16.msra.mxu0 %v2221
        %2266 = vmatprep.subr.bf16.mxu0 0
        %2267 = vmatpush1.bf16.msra.mxu0 %v2220
        %2268 = vmatprep.subr.bf16.mxu0 0
        %2269 = vmatpush2.bf16.msra.mxu0 %v2235
        %2270 = vmatprep.subr.bf16.mxu0 0
        %2271 = vmatpush2.bf16.msra.mxu0 %v2234
        %2272 = vmatprep.subr.bf16.mxu0 0
        %2273 = vmatpush2.bf16.msra.mxu0 %v2233
        %2274 = vmatprep.subr.bf16.mxu0 0
        %2275 = vmatpush2.bf16.msra.mxu0 %v2232
        %2276 = vmatprep.subr.bf16.mxu0 0
        %2277 = vmatpush2.bf16.msra.mxu0 %v2231
        %2278 = vmatprep.subr.bf16.mxu0 0
        %2279 = vmatpush2.bf16.msra.mxu0 %v2230
        %2280 = vmatprep.subr.bf16.mxu0 0
        %2281 = vmatpush2.bf16.msra.mxu0 %v2229
        %2282 = vmatprep.subr.bf16.mxu0 0
        %2283 = vmatpush2.bf16.msra.mxu0 %v2228
        %2284 = vmatprep.mubr.bf16.mxu0 %v2122
        %2285 = vmatmul.mubr.bf16.gmra.mxu0 %v2121
        %v2286 = vpop.f32.mrf.mxu0
        %v2287 = vadd.f32 0.0, %v2286
        %v2288 = vpop.f32.mrf.mxu0
        %v2289 = vpop.f32.mrf.mxu0
        %v2290 = vadd.f32 0.0, %v2289
        %v2291 = vpop.f32.mrf.mxu0
        %2292 = vdwg.mxu0
        %v2325 = vunpack.c.l.b16 %v2089
        %v2326 = vunpack.c.l.b16 %v2090
        %v2327 = vunpack.c.l.b16 %v2091
        %v2328 = vunpack.c.l.b16 %v2092
        %v2329 = vunpack.c.l.b16 %v2093
        %v2330 = vunpack.c.l.b16 %v2094
        %v2331 = vunpack.c.l.b16 %v2095
        %v2332 = vunpack.c.l.b16 %v2096
        %v2333 = vunpack.c.l.b16 %v2097
        %v2334 = vunpack.c.l.b16 %v2098
        %v2335 = vunpack.c.l.b16 %v2099
        %v2336 = vunpack.c.l.b16 %v2100
        %v2337 = vunpack.c.l.b16 %v2101
        %v2338 = vunpack.c.l.b16 %v2102
        %v2339 = vunpack.c.l.b16 %v2103
        %v2340 = vunpack.c.l.b16 %v2104
        %v2341 = vunpack.c.l.b16 %v2105
        %v2342 = vunpack.c.l.b16 %v2106
        %v2343 = vunpack.c.l.b16 %v2107
        %v2344 = vunpack.c.l.b16 %v2108
        %v2345 = vunpack.c.l.b16 %v2109
        %v2346 = vunpack.c.l.b16 %v2110
        %v2347 = vunpack.c.l.b16 %v2111
        %v2348 = vunpack.c.l.b16 %v2112
        %v2349 = vunpack.c.l.b16 %v2113
        %v2350 = vunpack.c.l.b16 %v2114
        %v2351 = vunpack.c.l.b16 %v2115
        %v2352 = vunpack.c.l.b16 %v2116
        %v2353 = vunpack.c.l.b16 %v2117
        %v2354 = vunpack.c.l.b16 %v2118
        %v2355 = vunpack.c.l.b16 %v2119
        %v2356 = vunpack.c.l.b16 %v2120
        %v2357 = vpack.c.b16 %v2326, %v2325
        %v2358 = vpack.c.b16 %v2328, %v2327
        %v2359 = vpack.c.b16 %v2330, %v2329
        %v2360 = vpack.c.b16 %v2332, %v2331
        %v2361 = vpack.c.b16 %v2334, %v2333
        %v2362 = vpack.c.b16 %v2336, %v2335
        %v2363 = vpack.c.b16 %v2338, %v2337
        %v2364 = vpack.c.b16 %v2340, %v2339
        %v2365 = vpack.c.b16 %v2342, %v2341
        %v2366 = vpack.c.b16 %v2344, %v2343
        %v2367 = vpack.c.b16 %v2346, %v2345
        %v2368 = vpack.c.b16 %v2348, %v2347
        %v2369 = vpack.c.b16 %v2350, %v2349
        %v2370 = vpack.c.b16 %v2352, %v2351
        %v2371 = vpack.c.b16 %v2354, %v2353
        %v2372 = vpack.c.b16 %v2356, %v2355
        %2389 = vmatprep.subr.bf16.mxu0 0
        %2390 = vmatpush1.bf16.msra.mxu0 %v2364
        %2391 = vmatprep.subr.bf16.mxu0 0
        %2392 = vmatpush1.bf16.msra.mxu0 %v2363
        %2393 = vmatprep.subr.bf16.mxu0 0
        %2394 = vmatpush1.bf16.msra.mxu0 %v2362
        %2395 = vmatprep.subr.bf16.mxu0 0
        %2396 = vmatpush1.bf16.msra.mxu0 %v2361
        %2397 = vmatprep.subr.bf16.mxu0 0
        %2398 = vmatpush1.bf16.msra.mxu0 %v2360
        %2399 = vmatprep.subr.bf16.mxu0 0
        %2400 = vmatpush1.bf16.msra.mxu0 %v2359
        %2401 = vmatprep.subr.bf16.mxu0 0
        %2402 = vmatpush1.bf16.msra.mxu0 %v2358
        %2403 = vmatprep.subr.bf16.mxu0 0
        %2404 = vmatpush1.bf16.msra.mxu0 %v2357
        %2405 = vmatprep.subr.bf16.mxu0 0
        %2406 = vmatpush2.bf16.msra.mxu0 %v2372
        %2407 = vmatprep.subr.bf16.mxu0 0
        %2408 = vmatpush2.bf16.msra.mxu0 %v2371
        %2409 = vmatprep.subr.bf16.mxu0 0
        %2410 = vmatpush2.bf16.msra.mxu0 %v2370
        %2411 = vmatprep.subr.bf16.mxu0 0
        %2412 = vmatpush2.bf16.msra.mxu0 %v2369
        %2413 = vmatprep.subr.bf16.mxu0 0
        %2414 = vmatpush2.bf16.msra.mxu0 %v2368
        %2415 = vmatprep.subr.bf16.mxu0 0
        %2416 = vmatpush2.bf16.msra.mxu0 %v2367
        %2417 = vmatprep.subr.bf16.mxu0 0
        %2418 = vmatpush2.bf16.msra.mxu0 %v2366
        %2419 = vmatprep.subr.bf16.mxu0 0
        %2420 = vmatpush2.bf16.msra.mxu0 %v2365
        %2421 = vmatprep.mubr.bf16.mxu0 %v2088
        %2422 = vmatmul.mubr.bf16.gmra.mxu0 %v2087
        %v2423 = vpop.f32.mrf.mxu0
        %v2424 = vadd.f32 %v2287, %v2423
        %v2425 = vpop.f32.mrf.mxu0
        %v2426 = vpop.f32.mrf.mxu0
        %v2427 = vadd.f32 %v2290, %v2426
        %v2428 = vpop.f32.mrf.mxu0
        %2429 = vdwg.mxu0
        %v2430 = vld [vmem:[%s13] sm:$0x1]
        %v2432 = vlaneseq
        %v2433 = vshrl.u32 %v2432, 7
        %v2434 = vsub.s32 0, %v2433
        %v2435 = vrot.slane %v2430, %v2434
        %v2437 = vadd.f32 %v2424, %v2435
        %v2438 = vadd.f32 %v2427, %v2435
        %v2439 = vpack.c.bf16 %v2004, %v2003
        %v2440 = vpack.c.bf16 %v2016, %v2015
        %v2441 = vpack.c.bf16 %v2030, %v2029
        %v2442 = vpack.c.bf16 %v2044, %v2043
        %v2443 = vld [vmem:[#allocation16] sm:$0xf]
        %v2444 = vld [vmem:[#allocation16 + $0x4] sm:$0xf]
        %v2445 = vld [vmem:[#allocation16 + $0x8] sm:$0xf]
        %v2446 = vld [vmem:[#allocation16 + $0xc] sm:$0xf]
        %v2447 = vld [vmem:[#allocation16 + $0x10] sm:$0xf]
        %v2448 = vld [vmem:[#allocation16 + $0x14] sm:$0xf]
        %v2449 = vld [vmem:[#allocation16 + $0x18] sm:$0xf]
        %v2450 = vld [vmem:[#allocation16 + $0x1c] sm:$0xf]
        %v2451 = vld [vmem:[#allocation16 + $0x20] sm:$0xf]
        %v2452 = vld [vmem:[#allocation16 + $0x24] sm:$0xf]
        %v2453 = vld [vmem:[#allocation16 + $0x28] sm:$0xf]
        %v2454 = vld [vmem:[#allocation16 + $0x2c] sm:$0xf]
        %v2455 = vld [vmem:[#allocation16 + $0x30] sm:$0xf]
        %v2456 = vld [vmem:[#allocation16 + $0x34] sm:$0xf]
        %v2457 = vld [vmem:[#allocation16 + $0x38] sm:$0xf]
        %v2458 = vld [vmem:[#allocation16 + $0x3c] sm:$0xf]
        %v2459 = vld [vmem:[#allocation16 + $0x40] sm:$0xf]
        %v2460 = vld [vmem:[#allocation16 + $0x44] sm:$0xf]
        %v2461 = vld [vmem:[#allocation16 + $0x48] sm:$0xf]
        %v2462 = vld [vmem:[#allocation16 + $0x4c] sm:$0xf]
        %v2463 = vld [vmem:[#allocation16 + $0x50] sm:$0xf]
        %v2464 = vld [vmem:[#allocation16 + $0x54] sm:$0xf]
        %v2465 = vld [vmem:[#allocation16 + $0x58] sm:$0xf]
        %v2466 = vld [vmem:[#allocation16 + $0x5c] sm:$0xf]
        %v2467 = vld [vmem:[#allocation16 + $0x60] sm:$0xf]
        %v2468 = vld [vmem:[#allocation16 + $0x64] sm:$0xf]
        %v2469 = vld [vmem:[#allocation16 + $0x68] sm:$0xf]
        %v2470 = vld [vmem:[#allocation16 + $0x6c] sm:$0xf]
        %v2471 = vld [vmem:[#allocation16 + $0x70] sm:$0xf]
        %v2472 = vld [vmem:[#allocation16 + $0x74] sm:$0xf]
        %v2473 = vld [vmem:[#allocation16 + $0x78] sm:$0xf]
        %v2474 = vld [vmem:[#allocation16 + $0x7c] sm:$0xf]
        %v2475 = vld [vmem:[#allocation16 + $0x80] sm:$0xf]
        %v2476 = vld [vmem:[#allocation16 + $0x84] sm:$0xf]
        %v2477 = vld [vmem:[#allocation16 + $0x88] sm:$0xf]
        %v2478 = vld [vmem:[#allocation16 + $0x8c] sm:$0xf]
        %v2479 = vld [vmem:[#allocation16 + $0x90] sm:$0xf]
        %v2480 = vld [vmem:[#allocation16 + $0x94] sm:$0xf]
        %v2481 = vld [vmem:[#allocation16 + $0x98] sm:$0xf]
        %v2482 = vld [vmem:[#allocation16 + $0x9c] sm:$0xf]
        %v2483 = vld [vmem:[#allocation16 + $0xa0] sm:$0xf]
        %v2484 = vld [vmem:[#allocation16 + $0xa4] sm:$0xf]
        %v2485 = vld [vmem:[#allocation16 + $0xa8] sm:$0xf]
        %v2486 = vld [vmem:[#allocation16 + $0xac] sm:$0xf]
        %v2487 = vld [vmem:[#allocation16 + $0xb0] sm:$0xf]
        %v2488 = vld [vmem:[#allocation16 + $0xb4] sm:$0xf]
        %v2489 = vld [vmem:[#allocation16 + $0xb8] sm:$0xf]
        %v2490 = vld [vmem:[#allocation16 + $0xbc] sm:$0xf]
        %v2491 = vld [vmem:[#allocation16 + $0xc0] sm:$0xf]
        %v2492 = vld [vmem:[#allocation16 + $0xc4] sm:$0xf]
        %v2493 = vld [vmem:[#allocation16 + $0xc8] sm:$0xf]
        %v2494 = vld [vmem:[#allocation16 + $0xcc] sm:$0xf]
        %v2495 = vld [vmem:[#allocation16 + $0xd0] sm:$0xf]
        %v2496 = vld [vmem:[#allocation16 + $0xd4] sm:$0xf]
        %v2497 = vld [vmem:[#allocation16 + $0xd8] sm:$0xf]
        %v2498 = vld [vmem:[#allocation16 + $0xdc] sm:$0xf]
        %v2499 = vld [vmem:[#allocation16 + $0xe0] sm:$0xf]
        %v2500 = vld [vmem:[#allocation16 + $0xe4] sm:$0xf]
        %v2501 = vld [vmem:[#allocation16 + $0xe8] sm:$0xf]
        %v2502 = vld [vmem:[#allocation16 + $0xec] sm:$0xf]
        %v2503 = vld [vmem:[#allocation16 + $0xf0] sm:$0xf]
        %v2504 = vld [vmem:[#allocation16 + $0xf4] sm:$0xf]
        %v2505 = vld [vmem:[#allocation16 + $0xf8] sm:$0xf]
        %v2506 = vld [vmem:[#allocation16 + $0xfc] sm:$0xf]
        %v2571 = vunpack.c.l.b16 %v2443
        %v2572 = vunpack.c.l.b16 %v2444
        %v2573 = vunpack.c.l.b16 %v2445
        %v2574 = vunpack.c.l.b16 %v2446
        %v2575 = vunpack.c.l.b16 %v2447
        %v2576 = vunpack.c.l.b16 %v2448
        %v2577 = vunpack.c.l.b16 %v2449
        %v2578 = vunpack.c.l.b16 %v2450
        %v2579 = vunpack.c.l.b16 %v2451
        %v2580 = vunpack.c.l.b16 %v2452
        %v2581 = vunpack.c.l.b16 %v2453
        %v2582 = vunpack.c.l.b16 %v2454
        %v2583 = vunpack.c.l.b16 %v2455
        %v2584 = vunpack.c.l.b16 %v2456
        %v2585 = vunpack.c.l.b16 %v2457
        %v2586 = vunpack.c.l.b16 %v2458
        %v2587 = vunpack.c.l.b16 %v2459
        %v2588 = vunpack.c.l.b16 %v2460
        %v2589 = vunpack.c.l.b16 %v2461
        %v2590 = vunpack.c.l.b16 %v2462
        %v2591 = vunpack.c.l.b16 %v2463
        %v2592 = vunpack.c.l.b16 %v2464
        %v2593 = vunpack.c.l.b16 %v2465
        %v2594 = vunpack.c.l.b16 %v2466
        %v2595 = vunpack.c.l.b16 %v2467
        %v2596 = vunpack.c.l.b16 %v2468
        %v2597 = vunpack.c.l.b16 %v2469
        %v2598 = vunpack.c.l.b16 %v2470
        %v2599 = vunpack.c.l.b16 %v2471
        %v2600 = vunpack.c.l.b16 %v2472
        %v2601 = vunpack.c.l.b16 %v2473
        %v2602 = vunpack.c.l.b16 %v2474
        %v2603 = vunpack.c.l.b16 %v2475
        %v2604 = vunpack.c.l.b16 %v2476
        %v2605 = vunpack.c.l.b16 %v2477
        %v2606 = vunpack.c.l.b16 %v2478
        %v2607 = vunpack.c.l.b16 %v2479
        %v2608 = vunpack.c.l.b16 %v2480
        %v2609 = vunpack.c.l.b16 %v2481
        %v2610 = vunpack.c.l.b16 %v2482
        %v2611 = vunpack.c.l.b16 %v2483
        %v2612 = vunpack.c.l.b16 %v2484
        %v2613 = vunpack.c.l.b16 %v2485
        %v2614 = vunpack.c.l.b16 %v2486
        %v2615 = vunpack.c.l.b16 %v2487
        %v2616 = vunpack.c.l.b16 %v2488
        %v2617 = vunpack.c.l.b16 %v2489
        %v2618 = vunpack.c.l.b16 %v2490
        %v2619 = vunpack.c.l.b16 %v2491
        %v2620 = vunpack.c.l.b16 %v2492
        %v2621 = vunpack.c.l.b16 %v2493
        %v2622 = vunpack.c.l.b16 %v2494
        %v2623 = vunpack.c.l.b16 %v2495
        %v2624 = vunpack.c.l.b16 %v2496
        %v2625 = vunpack.c.l.b16 %v2497
        %v2626 = vunpack.c.l.b16 %v2498
        %v2627 = vunpack.c.l.b16 %v2499
        %v2628 = vunpack.c.l.b16 %v2500
        %v2629 = vunpack.c.l.b16 %v2501
        %v2630 = vunpack.c.l.b16 %v2502
        %v2631 = vunpack.c.l.b16 %v2503
        %v2632 = vunpack.c.l.b16 %v2504
        %v2633 = vunpack.c.l.b16 %v2505
        %v2634 = vunpack.c.l.b16 %v2506
        %v2635 = vpack.c.b16 %v2572, %v2571
        %v2636 = vpack.c.b16 %v2574, %v2573
        %v2637 = vpack.c.b16 %v2576, %v2575
        %v2638 = vpack.c.b16 %v2578, %v2577
        %v2639 = vpack.c.b16 %v2580, %v2579
        %v2640 = vpack.c.b16 %v2582, %v2581
        %v2641 = vpack.c.b16 %v2584, %v2583
        %v2642 = vpack.c.b16 %v2586, %v2585
        %v2643 = vpack.c.b16 %v2588, %v2587
        %v2644 = vpack.c.b16 %v2590, %v2589
        %v2645 = vpack.c.b16 %v2592, %v2591
        %v2646 = vpack.c.b16 %v2594, %v2593
        %v2647 = vpack.c.b16 %v2596, %v2595
        %v2648 = vpack.c.b16 %v2598, %v2597
        %v2649 = vpack.c.b16 %v2600, %v2599
        %v2650 = vpack.c.b16 %v2602, %v2601
        %v2651 = vpack.c.b16 %v2604, %v2603
        %v2652 = vpack.c.b16 %v2606, %v2605
        %v2653 = vpack.c.b16 %v2608, %v2607
        %v2654 = vpack.c.b16 %v2610, %v2609
        %v2655 = vpack.c.b16 %v2612, %v2611
        %v2656 = vpack.c.b16 %v2614, %v2613
        %v2657 = vpack.c.b16 %v2616, %v2615
        %v2658 = vpack.c.b16 %v2618, %v2617
        %v2659 = vpack.c.b16 %v2620, %v2619
        %v2660 = vpack.c.b16 %v2622, %v2621
        %v2661 = vpack.c.b16 %v2624, %v2623
        %v2662 = vpack.c.b16 %v2626, %v2625
        %v2663 = vpack.c.b16 %v2628, %v2627
        %v2664 = vpack.c.b16 %v2630, %v2629
        %v2665 = vpack.c.b16 %v2632, %v2631
        %v2666 = vpack.c.b16 %v2634, %v2633
        %2699 = vmatprep.subr.bf16.mxu0 0
        %2700 = vmatpush1.bf16.msra.mxu0 %v2642
        %2701 = vmatprep.subr.bf16.mxu0 0
        %2702 = vmatpush1.bf16.msra.mxu0 %v2641
        %2703 = vmatprep.subr.bf16.mxu0 0
        %2704 = vmatpush1.bf16.msra.mxu0 %v2640
        %2705 = vmatprep.subr.bf16.mxu0 0
        %2706 = vmatpush1.bf16.msra.mxu0 %v2639
        %2707 = vmatprep.subr.bf16.mxu0 0
        %2708 = vmatpush1.bf16.msra.mxu0 %v2638
        %2709 = vmatprep.subr.bf16.mxu0 0
        %2710 = vmatpush1.bf16.msra.mxu0 %v2637
        %2711 = vmatprep.subr.bf16.mxu0 0
        %2712 = vmatpush1.bf16.msra.mxu0 %v2636
        %2713 = vmatprep.subr.bf16.mxu0 0
        %2714 = vmatpush1.bf16.msra.mxu0 %v2635
        %2715 = vmatprep.subr.bf16.mxu0 0
        %2716 = vmatpush2.bf16.msra.mxu0 %v2650
        %2717 = vmatprep.subr.bf16.mxu0 0
        %2718 = vmatpush2.bf16.msra.mxu0 %v2649
        %2719 = vmatprep.subr.bf16.mxu0 0
        %2720 = vmatpush2.bf16.msra.mxu0 %v2648
        %2721 = vmatprep.subr.bf16.mxu0 0
        %2722 = vmatpush2.bf16.msra.mxu0 %v2647
        %2723 = vmatprep.subr.bf16.mxu0 0
        %2724 = vmatpush2.bf16.msra.mxu0 %v2646
        %2725 = vmatprep.subr.bf16.mxu0 0
        %2726 = vmatpush2.bf16.msra.mxu0 %v2645
        %2727 = vmatprep.subr.bf16.mxu0 0
        %2728 = vmatpush2.bf16.msra.mxu0 %v2644
        %2729 = vmatprep.subr.bf16.mxu0 0
        %2730 = vmatpush2.bf16.msra.mxu0 %v2643
        %2731 = vmatprep.mubr.bf16.mxu0 %v2440
        %2732 = vmatmul.mubr.bf16.gmra.mxu0 %v2439
        %v2733 = vpop.f32.mrf.mxu0
        %v2734 = vadd.f32 0.0, %v2733
        %v2735 = vpop.f32.mrf.mxu0
        %v2736 = vpop.f32.mrf.mxu0
        %v2737 = vadd.f32 0.0, %v2736
        %v2738 = vpop.f32.mrf.mxu0
        %2739 = vdwg.mxu0
        %2740 = vmatprep.subr.bf16.mxu0 0
        %2741 = vmatpush1.bf16.msra.mxu0 %v2658
        %2742 = vmatprep.subr.bf16.mxu0 0
        %2743 = vmatpush1.bf16.msra.mxu0 %v2657
        %2744 = vmatprep.subr.bf16.mxu0 0
        %2745 = vmatpush1.bf16.msra.mxu0 %v2656
        %2746 = vmatprep.subr.bf16.mxu0 0
        %2747 = vmatpush1.bf16.msra.mxu0 %v2655
        %2748 = vmatprep.subr.bf16.mxu0 0
        %2749 = vmatpush1.bf16.msra.mxu0 %v2654
        %2750 = vmatprep.subr.bf16.mxu0 0
        %2751 = vmatpush1.bf16.msra.mxu0 %v2653
        %2752 = vmatprep.subr.bf16.mxu0 0
        %2753 = vmatpush1.bf16.msra.mxu0 %v2652
        %2754 = vmatprep.subr.bf16.mxu0 0
        %2755 = vmatpush1.bf16.msra.mxu0 %v2651
        %2756 = vmatprep.subr.bf16.mxu0 0
        %2757 = vmatpush2.bf16.msra.mxu0 %v2666
        %2758 = vmatprep.subr.bf16.mxu0 0
        %2759 = vmatpush2.bf16.msra.mxu0 %v2665
        %2760 = vmatprep.subr.bf16.mxu0 0
        %2761 = vmatpush2.bf16.msra.mxu0 %v2664
        %2762 = vmatprep.subr.bf16.mxu0 0
        %2763 = vmatpush2.bf16.msra.mxu0 %v2663
        %2764 = vmatprep.subr.bf16.mxu0 0
        %2765 = vmatpush2.bf16.msra.mxu0 %v2662
        %2766 = vmatprep.subr.bf16.mxu0 0
        %2767 = vmatpush2.bf16.msra.mxu0 %v2661
        %2768 = vmatprep.subr.bf16.mxu0 0
        %2769 = vmatpush2.bf16.msra.mxu0 %v2660
        %2770 = vmatprep.subr.bf16.mxu0 0
        %2771 = vmatpush2.bf16.msra.mxu0 %v2659
        %2772 = vmatprep.mubr.bf16.mxu0 %v2442
        %2773 = vmatmul.mubr.bf16.gmra.mxu0 %v2441
        %v2774 = vpop.f32.mrf.mxu0
        %v2775 = vadd.f32 %v2734, %v2774
        %v2776 = vpop.f32.mrf.mxu0
        %v2777 = vpop.f32.mrf.mxu0
        %v2778 = vadd.f32 %v2737, %v2777
        %v2779 = vpop.f32.mrf.mxu0
        %2780 = vdwg.mxu0
        %v2781 = vadd.f32 %v2437, %v2775
        %v2782 = vadd.f32 %v2438, %v2778
        %v2783 = vld [vmem:[%s14] sm:$0x1]
        %v2785 = vlaneseq
        %v2786 = vshrl.u32 %v2785, 7
        %v2787 = vsub.s32 0, %v2786
        %v2788 = vrot.slane %v2783, %v2787
        %v2790 = vadd.f32 %v2781, %v2788
        %v2791 = vadd.f32 %v2782, %v2788
        %vm2792 = vcmp.gt.f32.partialorder %v2790, 0.0
        %vm2793 = vcmp.gt.f32.partialorder %v2791, 0.0
        %v2794 = vmin.f32 %v2790, 0.0
        %v2795 = vmin.f32 %v2791, 0.0
        %v2796 = vmul.f32 %v2794, 1.442695
        %v2797 = vpow.pop %v2796
        %v2798 = vmul.f32 %v2795, 1.442695
        %v2799 = vpow.pop %v2798
        %v2800 = vsub.f32 %v2797, 1.0
        %v2801 = vsub.f32 %v2799, 1.0
        %v2802 = vsel %vm2792, %v2790, %v2800
        %v2803 = vsel %vm2793, %v2791, %v2801
        %v2804 = vsub.f32 0.0, %v2790
        %v2805 = vsub.f32 0.0, %v2791
        %vm2806 = vcmp.gt.f32.partialorder %v2804, 0.0
        %vm2807 = vcmp.gt.f32.partialorder %v2805, 0.0
        %v2808 = vmin.f32 %v2804, 0.0
        %v2809 = vmin.f32 %v2805, 0.0
        %v2810 = vmul.f32 %v2808, 1.442695
        %v2811 = vpow.pop %v2810
        %v2812 = vmul.f32 %v2809, 1.442695
        %v2813 = vpow.pop %v2812
        %v2814 = vsub.f32 %v2811, 1.0
        %v2815 = vsub.f32 %v2813, 1.0
        %v2816 = vsel %vm2806, %v2804, %v2814
        %v2817 = vsel %vm2807, %v2805, %v2815
        %v2822 = vrot.slane %v2802, 7
        %v2823 = vrot.slane %v2816, 7
        %v2824 = vrot.slane %v2803, 7
        %v2825 = vsel %vm895, %v2822, %v2824
        %v2826 = vrot.slane %v2817, 7
        %v2827 = vsel %vm895, %v2823, %v2826
        %v2832 = vsel %vm895, 0.0, %v2822
        %v2833 = vsel %vm895, 0.0, %v2823
        %v2834 = vpack.c.bf16 %v2825, %v2832
        %v2835 = vpack.c.bf16 %v2827, %v2833
        %v2836 = vld [vmem:[#allocation17] sm:$0xff]
        %v2837 = vld [vmem:[#allocation17 + $0x8] sm:$0xff]
        %v2838 = vld [vmem:[#allocation17 + $0x10] sm:$0xff]
        %v2839 = vld [vmem:[#allocation17 + $0x18] sm:$0xff]
        %v2840 = vld [vmem:[#allocation17 + $0x20] sm:$0xff]
        %v2841 = vld [vmem:[#allocation17 + $0x28] sm:$0xff]
        %v2842 = vld [vmem:[#allocation17 + $0x30] sm:$0xff]
        %v2843 = vld [vmem:[#allocation17 + $0x38] sm:$0xff]
        %v2844 = vld [vmem:[#allocation17 + $0x40] sm:$0xff]
        %v2845 = vld [vmem:[#allocation17 + $0x48] sm:$0xff]
        %v2846 = vld [vmem:[#allocation17 + $0x50] sm:$0xff]
        %v2847 = vld [vmem:[#allocation17 + $0x58] sm:$0xff]
        %v2848 = vld [vmem:[#allocation17 + $0x60] sm:$0xff]
        %v2849 = vld [vmem:[#allocation17 + $0x68] sm:$0xff]
        %v2850 = vld [vmem:[#allocation17 + $0x70] sm:$0xff]
        %v2851 = vld [vmem:[#allocation17 + $0x78] sm:$0xff]
        %v2852 = vld [vmem:[#allocation17 + $0x80] sm:$0xff]
        %v2853 = vld [vmem:[#allocation17 + $0x88] sm:$0xff]
        %v2854 = vld [vmem:[#allocation17 + $0x90] sm:$0xff]
        %v2855 = vld [vmem:[#allocation17 + $0x98] sm:$0xff]
        %v2856 = vld [vmem:[#allocation17 + $0xa0] sm:$0xff]
        %v2857 = vld [vmem:[#allocation17 + $0xa8] sm:$0xff]
        %v2858 = vld [vmem:[#allocation17 + $0xb0] sm:$0xff]
        %v2859 = vld [vmem:[#allocation17 + $0xb8] sm:$0xff]
        %v2860 = vld [vmem:[#allocation17 + $0xc0] sm:$0xff]
        %v2861 = vld [vmem:[#allocation17 + $0xc8] sm:$0xff]
        %v2862 = vld [vmem:[#allocation17 + $0xd0] sm:$0xff]
        %v2863 = vld [vmem:[#allocation17 + $0xd8] sm:$0xff]
        %v2864 = vld [vmem:[#allocation17 + $0xe0] sm:$0xff]
        %v2865 = vld [vmem:[#allocation17 + $0xe8] sm:$0xff]
        %v2866 = vld [vmem:[#allocation17 + $0xf0] sm:$0xff]
        %v2867 = vld [vmem:[#allocation17 + $0xf8] sm:$0xff]
        %v2868 = vpack.c.bf16 %v2803, %v2802
        %v2869 = vpack.c.bf16 %v2817, %v2816
        %s2870 = scalar_lea.vmem [#allocation17], 256
        %v2871 = vld [vmem:[%s2870] sm:$0xff]
        %v2872 = vld [vmem:[%s2870 + $0x8] sm:$0xff]
        %v2873 = vld [vmem:[%s2870 + $0x10] sm:$0xff]
        %v2874 = vld [vmem:[%s2870 + $0x18] sm:$0xff]
        %v2875 = vld [vmem:[%s2870 + $0x20] sm:$0xff]
        %v2876 = vld [vmem:[%s2870 + $0x28] sm:$0xff]
        %v2877 = vld [vmem:[%s2870 + $0x30] sm:$0xff]
        %v2878 = vld [vmem:[%s2870 + $0x38] sm:$0xff]
        %v2879 = vld [vmem:[%s2870 + $0x40] sm:$0xff]
        %v2880 = vld [vmem:[%s2870 + $0x48] sm:$0xff]
        %v2881 = vld [vmem:[%s2870 + $0x50] sm:$0xff]
        %v2882 = vld [vmem:[%s2870 + $0x58] sm:$0xff]
        %v2883 = vld [vmem:[%s2870 + $0x60] sm:$0xff]
        %v2884 = vld [vmem:[%s2870 + $0x68] sm:$0xff]
        %v2885 = vld [vmem:[%s2870 + $0x70] sm:$0xff]
        %v2886 = vld [vmem:[%s2870 + $0x78] sm:$0xff]
        %v2887 = vld [vmem:[%s2870 + $0x80] sm:$0xff]
        %v2888 = vld [vmem:[%s2870 + $0x88] sm:$0xff]
        %v2889 = vld [vmem:[%s2870 + $0x90] sm:$0xff]
        %v2890 = vld [vmem:[%s2870 + $0x98] sm:$0xff]
        %v2891 = vld [vmem:[%s2870 + $0xa0] sm:$0xff]
        %v2892 = vld [vmem:[%s2870 + $0xa8] sm:$0xff]
        %v2893 = vld [vmem:[%s2870 + $0xb0] sm:$0xff]
        %v2894 = vld [vmem:[%s2870 + $0xb8] sm:$0xff]
        %v2895 = vld [vmem:[%s2870 + $0xc0] sm:$0xff]
        %v2896 = vld [vmem:[%s2870 + $0xc8] sm:$0xff]
        %v2897 = vld [vmem:[%s2870 + $0xd0] sm:$0xff]
        %v2898 = vld [vmem:[%s2870 + $0xd8] sm:$0xff]
        %v2899 = vld [vmem:[%s2870 + $0xe0] sm:$0xff]
        %v2900 = vld [vmem:[%s2870 + $0xe8] sm:$0xff]
        %v2901 = vld [vmem:[%s2870 + $0xf0] sm:$0xff]
        %v2902 = vld [vmem:[%s2870 + $0xf8] sm:$0xff]
        %v2935 = vunpack.c.l.b16 %v2871
        %v2936 = vunpack.c.h.b16 %v2871
        %v2937 = vunpack.c.l.b16 %v2872
        %v2938 = vunpack.c.h.b16 %v2872
        %v2939 = vunpack.c.l.b16 %v2873
        %v2940 = vunpack.c.h.b16 %v2873
        %v2941 = vunpack.c.l.b16 %v2874
        %v2942 = vunpack.c.h.b16 %v2874
        %v2943 = vunpack.c.l.b16 %v2875
        %v2944 = vunpack.c.h.b16 %v2875
        %v2945 = vunpack.c.l.b16 %v2876
        %v2946 = vunpack.c.h.b16 %v2876
        %v2947 = vunpack.c.l.b16 %v2877
        %v2948 = vunpack.c.h.b16 %v2877
        %v2949 = vunpack.c.l.b16 %v2878
        %v2950 = vunpack.c.h.b16 %v2878
        %v2951 = vunpack.c.l.b16 %v2879
        %v2952 = vunpack.c.h.b16 %v2879
        %v2953 = vunpack.c.l.b16 %v2880
        %v2954 = vunpack.c.h.b16 %v2880
        %v2955 = vunpack.c.l.b16 %v2881
        %v2956 = vunpack.c.h.b16 %v2881
        %v2957 = vunpack.c.l.b16 %v2882
        %v2958 = vunpack.c.h.b16 %v2882
        %v2959 = vunpack.c.l.b16 %v2883
        %v2960 = vunpack.c.h.b16 %v2883
        %v2961 = vunpack.c.l.b16 %v2884
        %v2962 = vunpack.c.h.b16 %v2884
        %v2963 = vunpack.c.l.b16 %v2885
        %v2964 = vunpack.c.h.b16 %v2885
        %v2965 = vunpack.c.l.b16 %v2886
        %v2966 = vunpack.c.h.b16 %v2886
        %v2967 = vunpack.c.l.b16 %v2887
        %v2968 = vunpack.c.h.b16 %v2887
        %v2969 = vunpack.c.l.b16 %v2888
        %v2970 = vunpack.c.h.b16 %v2888
        %v2971 = vunpack.c.l.b16 %v2889
        %v2972 = vunpack.c.h.b16 %v2889
        %v2973 = vunpack.c.l.b16 %v2890
        %v2974 = vunpack.c.h.b16 %v2890
        %v2975 = vunpack.c.l.b16 %v2891
        %v2976 = vunpack.c.h.b16 %v2891
        %v2977 = vunpack.c.l.b16 %v2892
        %v2978 = vunpack.c.h.b16 %v2892
        %v2979 = vunpack.c.l.b16 %v2893
        %v2980 = vunpack.c.h.b16 %v2893
        %v2981 = vunpack.c.l.b16 %v2894
        %v2982 = vunpack.c.h.b16 %v2894
        %v2983 = vunpack.c.l.b16 %v2895
        %v2984 = vunpack.c.h.b16 %v2895
        %v2985 = vunpack.c.l.b16 %v2896
        %v2986 = vunpack.c.h.b16 %v2896
        %v2987 = vunpack.c.l.b16 %v2897
        %v2988 = vunpack.c.h.b16 %v2897
        %v2989 = vunpack.c.l.b16 %v2898
        %v2990 = vunpack.c.h.b16 %v2898
        %v2991 = vunpack.c.l.b16 %v2899
        %v2992 = vunpack.c.h.b16 %v2899
        %v2993 = vunpack.c.l.b16 %v2900
        %v2994 = vunpack.c.h.b16 %v2900
        %v2995 = vunpack.c.l.b16 %v2901
        %v2996 = vunpack.c.h.b16 %v2901
        %v2997 = vunpack.c.l.b16 %v2902
        %v2998 = vunpack.c.h.b16 %v2902
        %v2999 = vpack.c.b16 %v2937, %v2935
        %v3000 = vpack.c.b16 %v2938, %v2936
        %v3001 = vpack.c.b16 %v2941, %v2939
        %v3002 = vpack.c.b16 %v2942, %v2940
        %v3003 = vpack.c.b16 %v2945, %v2943
        %v3004 = vpack.c.b16 %v2946, %v2944
        %v3005 = vpack.c.b16 %v2949, %v2947
        %v3006 = vpack.c.b16 %v2950, %v2948
        %v3007 = vpack.c.b16 %v2953, %v2951
        %v3008 = vpack.c.b16 %v2954, %v2952
        %v3009 = vpack.c.b16 %v2957, %v2955
        %v3010 = vpack.c.b16 %v2958, %v2956
        %v3011 = vpack.c.b16 %v2961, %v2959
        %v3012 = vpack.c.b16 %v2962, %v2960
        %v3013 = vpack.c.b16 %v2965, %v2963
        %v3014 = vpack.c.b16 %v2966, %v2964
        %v3015 = vpack.c.b16 %v2969, %v2967
        %v3016 = vpack.c.b16 %v2970, %v2968
        %v3017 = vpack.c.b16 %v2973, %v2971
        %v3018 = vpack.c.b16 %v2974, %v2972
        %v3019 = vpack.c.b16 %v2977, %v2975
        %v3020 = vpack.c.b16 %v2978, %v2976
        %v3021 = vpack.c.b16 %v2981, %v2979
        %v3022 = vpack.c.b16 %v2982, %v2980
        %v3023 = vpack.c.b16 %v2985, %v2983
        %v3024 = vpack.c.b16 %v2986, %v2984
        %v3025 = vpack.c.b16 %v2989, %v2987
        %v3026 = vpack.c.b16 %v2990, %v2988
        %v3027 = vpack.c.b16 %v2993, %v2991
        %v3028 = vpack.c.b16 %v2994, %v2992
        %v3029 = vpack.c.b16 %v2997, %v2995
        %v3030 = vpack.c.b16 %v2998, %v2996
        %3063 = vmatprep.subr.bf16.mxu0 %v3014
        %3064 = vmatpush1.bf16.msra.mxu0 %v3013
        %3065 = vmatprep.subr.bf16.mxu0 %v3012
        %3066 = vmatpush1.bf16.msra.mxu0 %v3011
        %3067 = vmatprep.subr.bf16.mxu0 %v3010
        %3068 = vmatpush1.bf16.msra.mxu0 %v3009
        %3069 = vmatprep.subr.bf16.mxu0 %v3008
        %3070 = vmatpush1.bf16.msra.mxu0 %v3007
        %3071 = vmatprep.subr.bf16.mxu0 %v3006
        %3072 = vmatpush1.bf16.msra.mxu0 %v3005
        %3073 = vmatprep.subr.bf16.mxu0 %v3004
        %3074 = vmatpush1.bf16.msra.mxu0 %v3003
        %3075 = vmatprep.subr.bf16.mxu0 %v3002
        %3076 = vmatpush1.bf16.msra.mxu0 %v3001
        %3077 = vmatprep.subr.bf16.mxu0 %v3000
        %3078 = vmatpush1.bf16.msra.mxu0 %v2999
        %3079 = vmatprep.subr.bf16.mxu0 %v3030
        %3080 = vmatpush2.bf16.msra.mxu0 %v3029
        %3081 = vmatprep.subr.bf16.mxu0 %v3028
        %3082 = vmatpush2.bf16.msra.mxu0 %v3027
        %3083 = vmatprep.subr.bf16.mxu0 %v3026
        %3084 = vmatpush2.bf16.msra.mxu0 %v3025
        %3085 = vmatprep.subr.bf16.mxu0 %v3024
        %3086 = vmatpush2.bf16.msra.mxu0 %v3023
        %3087 = vmatprep.subr.bf16.mxu0 %v3022
        %3088 = vmatpush2.bf16.msra.mxu0 %v3021
        %3089 = vmatprep.subr.bf16.mxu0 %v3020
        %3090 = vmatpush2.bf16.msra.mxu0 %v3019
        %3091 = vmatprep.subr.bf16.mxu0 %v3018
        %3092 = vmatpush2.bf16.msra.mxu0 %v3017
        %3093 = vmatprep.subr.bf16.mxu0 %v3016
        %3094 = vmatpush2.bf16.msra.mxu0 %v3015
        %3095 = vmatprep.mubr.bf16.mxu0 %v2869
        %3096 = vmatmul.mubr.bf16.gmra.mxu0 %v2868
        %v3097 = vpop.f32.mrf.mxu0
        %v3098 = vadd.f32 0.0, %v3097
        %v3099 = vpop.f32.mrf.mxu0
        %v3100 = vadd.f32 0.0, %v3099
        %v3101 = vpop.f32.mrf.mxu0
        %v3102 = vadd.f32 0.0, %v3101
        %v3103 = vpop.f32.mrf.mxu0
        %v3104 = vadd.f32 0.0, %v3103
        %3105 = vdwg.mxu0
        %v3138 = vunpack.c.l.b16 %v2836
        %v3139 = vunpack.c.h.b16 %v2836
        %v3140 = vunpack.c.l.b16 %v2837
        %v3141 = vunpack.c.h.b16 %v2837
        %v3142 = vunpack.c.l.b16 %v2838
        %v3143 = vunpack.c.h.b16 %v2838
        %v3144 = vunpack.c.l.b16 %v2839
        %v3145 = vunpack.c.h.b16 %v2839
        %v3146 = vunpack.c.l.b16 %v2840
        %v3147 = vunpack.c.h.b16 %v2840
        %v3148 = vunpack.c.l.b16 %v2841
        %v3149 = vunpack.c.h.b16 %v2841
        %v3150 = vunpack.c.l.b16 %v2842
        %v3151 = vunpack.c.h.b16 %v2842
        %v3152 = vunpack.c.l.b16 %v2843
        %v3153 = vunpack.c.h.b16 %v2843
        %v3154 = vunpack.c.l.b16 %v2844
        %v3155 = vunpack.c.h.b16 %v2844
        %v3156 = vunpack.c.l.b16 %v2845
        %v3157 = vunpack.c.h.b16 %v2845
        %v3158 = vunpack.c.l.b16 %v2846
        %v3159 = vunpack.c.h.b16 %v2846
        %v3160 = vunpack.c.l.b16 %v2847
        %v3161 = vunpack.c.h.b16 %v2847
        %v3162 = vunpack.c.l.b16 %v2848
        %v3163 = vunpack.c.h.b16 %v2848
        %v3164 = vunpack.c.l.b16 %v2849
        %v3165 = vunpack.c.h.b16 %v2849
        %v3166 = vunpack.c.l.b16 %v2850
        %v3167 = vunpack.c.h.b16 %v2850
        %v3168 = vunpack.c.l.b16 %v2851
        %v3169 = vunpack.c.h.b16 %v2851
        %v3170 = vunpack.c.l.b16 %v2852
        %v3171 = vunpack.c.h.b16 %v2852
        %v3172 = vunpack.c.l.b16 %v2853
        %v3173 = vunpack.c.h.b16 %v2853
        %v3174 = vunpack.c.l.b16 %v2854
        %v3175 = vunpack.c.h.b16 %v2854
        %v3176 = vunpack.c.l.b16 %v2855
        %v3177 = vunpack.c.h.b16 %v2855
        %v3178 = vunpack.c.l.b16 %v2856
        %v3179 = vunpack.c.h.b16 %v2856
        %v3180 = vunpack.c.l.b16 %v2857
        %v3181 = vunpack.c.h.b16 %v2857
        %v3182 = vunpack.c.l.b16 %v2858
        %v3183 = vunpack.c.h.b16 %v2858
        %v3184 = vunpack.c.l.b16 %v2859
        %v3185 = vunpack.c.h.b16 %v2859
        %v3186 = vunpack.c.l.b16 %v2860
        %v3187 = vunpack.c.h.b16 %v2860
        %v3188 = vunpack.c.l.b16 %v2861
        %v3189 = vunpack.c.h.b16 %v2861
        %v3190 = vunpack.c.l.b16 %v2862
        %v3191 = vunpack.c.h.b16 %v2862
        %v3192 = vunpack.c.l.b16 %v2863
        %v3193 = vunpack.c.h.b16 %v2863
        %v3194 = vunpack.c.l.b16 %v2864
        %v3195 = vunpack.c.h.b16 %v2864
        %v3196 = vunpack.c.l.b16 %v2865
        %v3197 = vunpack.c.h.b16 %v2865
        %v3198 = vunpack.c.l.b16 %v2866
        %v3199 = vunpack.c.h.b16 %v2866
        %v3200 = vunpack.c.l.b16 %v2867
        %v3201 = vunpack.c.h.b16 %v2867
        %v3202 = vpack.c.b16 %v3140, %v3138
        %v3203 = vpack.c.b16 %v3141, %v3139
        %v3204 = vpack.c.b16 %v3144, %v3142
        %v3205 = vpack.c.b16 %v3145, %v3143
        %v3206 = vpack.c.b16 %v3148, %v3146
        %v3207 = vpack.c.b16 %v3149, %v3147
        %v3208 = vpack.c.b16 %v3152, %v3150
        %v3209 = vpack.c.b16 %v3153, %v3151
        %v3210 = vpack.c.b16 %v3156, %v3154
        %v3211 = vpack.c.b16 %v3157, %v3155
        %v3212 = vpack.c.b16 %v3160, %v3158
        %v3213 = vpack.c.b16 %v3161, %v3159
        %v3214 = vpack.c.b16 %v3164, %v3162
        %v3215 = vpack.c.b16 %v3165, %v3163
        %v3216 = vpack.c.b16 %v3168, %v3166
        %v3217 = vpack.c.b16 %v3169, %v3167
        %v3218 = vpack.c.b16 %v3172, %v3170
        %v3219 = vpack.c.b16 %v3173, %v3171
        %v3220 = vpack.c.b16 %v3176, %v3174
        %v3221 = vpack.c.b16 %v3177, %v3175
        %v3222 = vpack.c.b16 %v3180, %v3178
        %v3223 = vpack.c.b16 %v3181, %v3179
        %v3224 = vpack.c.b16 %v3184, %v3182
        %v3225 = vpack.c.b16 %v3185, %v3183
        %v3226 = vpack.c.b16 %v3188, %v3186
        %v3227 = vpack.c.b16 %v3189, %v3187
        %v3228 = vpack.c.b16 %v3192, %v3190
        %v3229 = vpack.c.b16 %v3193, %v3191
        %v3230 = vpack.c.b16 %v3196, %v3194
        %v3231 = vpack.c.b16 %v3197, %v3195
        %v3232 = vpack.c.b16 %v3200, %v3198
        %v3233 = vpack.c.b16 %v3201, %v3199
        %3266 = vmatprep.subr.bf16.mxu0 %v3217
        %3267 = vmatpush1.bf16.msra.mxu0 %v3216
        %3268 = vmatprep.subr.bf16.mxu0 %v3215
        %3269 = vmatpush1.bf16.msra.mxu0 %v3214
        %3270 = vmatprep.subr.bf16.mxu0 %v3213
        %3271 = vmatpush1.bf16.msra.mxu0 %v3212
        %3272 = vmatprep.subr.bf16.mxu0 %v3211
        %3273 = vmatpush1.bf16.msra.mxu0 %v3210
        %3274 = vmatprep.subr.bf16.mxu0 %v3209
        %3275 = vmatpush1.bf16.msra.mxu0 %v3208
        %3276 = vmatprep.subr.bf16.mxu0 %v3207
        %3277 = vmatpush1.bf16.msra.mxu0 %v3206
        %3278 = vmatprep.subr.bf16.mxu0 %v3205
        %3279 = vmatpush1.bf16.msra.mxu0 %v3204
        %3280 = vmatprep.subr.bf16.mxu0 %v3203
        %3281 = vmatpush1.bf16.msra.mxu0 %v3202
        %3282 = vmatprep.subr.bf16.mxu0 %v3233
        %3283 = vmatpush2.bf16.msra.mxu0 %v3232
        %3284 = vmatprep.subr.bf16.mxu0 %v3231
        %3285 = vmatpush2.bf16.msra.mxu0 %v3230
        %3286 = vmatprep.subr.bf16.mxu0 %v3229
        %3287 = vmatpush2.bf16.msra.mxu0 %v3228
        %3288 = vmatprep.subr.bf16.mxu0 %v3227
        %3289 = vmatpush2.bf16.msra.mxu0 %v3226
        %3290 = vmatprep.subr.bf16.mxu0 %v3225
        %3291 = vmatpush2.bf16.msra.mxu0 %v3224
        %3292 = vmatprep.subr.bf16.mxu0 %v3223
        %3293 = vmatpush2.bf16.msra.mxu0 %v3222
        %3294 = vmatprep.subr.bf16.mxu0 %v3221
        %3295 = vmatpush2.bf16.msra.mxu0 %v3220
        %3296 = vmatprep.subr.bf16.mxu0 %v3219
        %3297 = vmatpush2.bf16.msra.mxu0 %v3218
        %3298 = vmatprep.mubr.bf16.mxu0 %v2835
        %3299 = vmatmul.mubr.bf16.gmra.mxu0 %v2834
        %v3300 = vpop.f32.mrf.mxu0
        %v3301 = vadd.f32 %v3098, %v3300
        %v3302 = vpop.f32.mrf.mxu0
        %v3303 = vadd.f32 %v3100, %v3302
        %v3304 = vpop.f32.mrf.mxu0
        %v3305 = vadd.f32 %v3102, %v3304
        %v3306 = vpop.f32.mrf.mxu0
        %v3307 = vadd.f32 %v3104, %v3306
        %3308 = vdwg.mxu0
        %v3309 = vld [vmem:[%s15] sm:$0x3]
        %v3311 = vlaneseq
        %v3312 = vshrl.u32 %v3311, 7
        %v3313 = vsub.s32 0, %v3312
        %v3314 = vrot.slane %v3309, %v3313
        %v3315 = vlaneseq
        %v3316 = vshrl.u32 %v3315, 7
        %v3317 = vsub.s32 1, %v3316
        %v3318 = vrot.slane %v3309, %v3317
        %v3321 = vadd.f32 %v3301, %v3314
        %v3322 = vadd.f32 %v3303, %v3318
        %v3323 = vadd.f32 %v3305, %v3314
        %v3324 = vadd.f32 %v3307, %v3318
        %v3325 = vxor.u32 %v3322, 2147483648
        %v3326 = vxor.u32 %v3324, 2147483648
        %v3327 = vmul.f32 %v3325, 1.442695
        %v3328 = vpow.pop %v3327
        %v3329 = vmul.f32 %v3326, 1.442695
        %v3330 = vpow.pop %v3329
        %v3331 = vadd.f32 %v3328, 1.0
        %v3332 = vadd.f32 %v3330, 1.0
        %v3333 = vrcp.pop %v3331
        %v3334 = vmul.f32 1.0, %v3333
        %v3335 = vrcp.pop %v3332
        %v3336 = vmul.f32 1.0, %v3335
        %v3337 = vmul.f32 %v3321, %v3334
        %v3338 = vmul.f32 %v3323, %v3336
        %v3339 = vadd.f32 %v835, %v3337
        %v3340 = vadd.f32 %v836, %v3338
        %s3341 = scalar_lea.vmem %s728, 16 [#allocation7]
        %v3342 = vld [vmem:[%s3341] sm:$0xff]
        %v3343 = vld [vmem:[%s3341 + $0x8] sm:$0xff]
        %vm3344 = vcmp.gt.f32.partialorder %v3342, 0.0
        %vm3345 = vcmp.gt.f32.partialorder %v3343, 0.0
        %v3346 = vmin.f32 %v3342, 0.0
        %v3347 = vmin.f32 %v3343, 0.0
        %v3348 = vmul.f32 %v3346, 1.442695
        %v3349 = vpow.pop %v3348
        %v3350 = vmul.f32 %v3347, 1.442695
        %v3351 = vpow.pop %v3350
        %v3352 = vsub.f32 %v3349, 1.0
        %v3353 = vsub.f32 %v3351, 1.0
        %v3354 = vsel %vm3344, %v3342, %v3352
        %v3355 = vsel %vm3345, %v3343, %v3353
        %v3356 = vsub.f32 0.0, %v3342
        %v3357 = vsub.f32 0.0, %v3343
        %vm3358 = vcmp.gt.f32.partialorder %v3356, 0.0
        %vm3359 = vcmp.gt.f32.partialorder %v3357, 0.0
        %v3360 = vmin.f32 %v3356, 0.0
        %v3361 = vmin.f32 %v3357, 0.0
        %v3362 = vmul.f32 %v3360, 1.442695
        %v3363 = vpow.pop %v3362
        %v3364 = vmul.f32 %v3361, 1.442695
        %v3365 = vpow.pop %v3364
        %v3366 = vsub.f32 %v3363, 1.0
        %v3367 = vsub.f32 %v3365, 1.0
        %v3368 = vsel %vm3358, %v3356, %v3366
        %v3369 = vsel %vm3359, %v3357, %v3367
        %v3374 = vrot.slane %v2003, 7
        %v3375 = vrot.slane %v2029, 7
        %v3376 = vrot.slane %v2004, 7
        %v3377 = vsel %vm895, %v3374, %v3376
        %v3378 = vrot.slane %v2030, 7
        %v3379 = vsel %vm895, %v3375, %v3378
        %v3384 = vsel %vm895, 0.0, %v3374
        %v3385 = vsel %vm895, 0.0, %v3375
        %v3386 = vpack.c.bf16 %v3377, %v3384
        %v3387 = vpack.c.bf16 %v3379, %v3385
        %s3388 = scalar_lea.vmem [#allocation10], 256
        %v3389 = vld [vmem:[%s3388] sm:$0xf]
        %v3390 = vld [vmem:[%s3388 + $0x4] sm:$0xf]
        %v3391 = vld [vmem:[%s3388 + $0x8] sm:$0xf]
        %v3392 = vld [vmem:[%s3388 + $0xc] sm:$0xf]
        %v3393 = vld [vmem:[%s3388 + $0x10] sm:$0xf]
        %v3394 = vld [vmem:[%s3388 + $0x14] sm:$0xf]
        %v3395 = vld [vmem:[%s3388 + $0x18] sm:$0xf]
        %v3396 = vld [vmem:[%s3388 + $0x1c] sm:$0xf]
        %v3397 = vld [vmem:[%s3388 + $0x20] sm:$0xf]
        %v3398 = vld [vmem:[%s3388 + $0x24] sm:$0xf]
        %v3399 = vld [vmem:[%s3388 + $0x28] sm:$0xf]
        %v3400 = vld [vmem:[%s3388 + $0x2c] sm:$0xf]
        %v3401 = vld [vmem:[%s3388 + $0x30] sm:$0xf]
        %v3402 = vld [vmem:[%s3388 + $0x34] sm:$0xf]
        %v3403 = vld [vmem:[%s3388 + $0x38] sm:$0xf]
        %v3404 = vld [vmem:[%s3388 + $0x3c] sm:$0xf]
        %v3405 = vld [vmem:[%s3388 + $0x40] sm:$0xf]
        %v3406 = vld [vmem:[%s3388 + $0x44] sm:$0xf]
        %v3407 = vld [vmem:[%s3388 + $0x48] sm:$0xf]
        %v3408 = vld [vmem:[%s3388 + $0x4c] sm:$0xf]
        %v3409 = vld [vmem:[%s3388 + $0x50] sm:$0xf]
        %v3410 = vld [vmem:[%s3388 + $0x54] sm:$0xf]
        %v3411 = vld [vmem:[%s3388 + $0x58] sm:$0xf]
        %v3412 = vld [vmem:[%s3388 + $0x5c] sm:$0xf]
        %v3413 = vld [vmem:[%s3388 + $0x60] sm:$0xf]
        %v3414 = vld [vmem:[%s3388 + $0x64] sm:$0xf]
        %v3415 = vld [vmem:[%s3388 + $0x68] sm:$0xf]
        %v3416 = vld [vmem:[%s3388 + $0x6c] sm:$0xf]
        %v3417 = vld [vmem:[%s3388 + $0x70] sm:$0xf]
        %v3418 = vld [vmem:[%s3388 + $0x74] sm:$0xf]
        %v3419 = vld [vmem:[%s3388 + $0x78] sm:$0xf]
        %v3420 = vld [vmem:[%s3388 + $0x7c] sm:$0xf]
        %s3421 = scalar_lea.vmem [#allocation10], 384
        %v3422 = vld [vmem:[%s3421] sm:$0xf]
        %v3423 = vld [vmem:[%s3421 + $0x4] sm:$0xf]
        %v3424 = vld [vmem:[%s3421 + $0x8] sm:$0xf]
        %v3425 = vld [vmem:[%s3421 + $0xc] sm:$0xf]
        %v3426 = vld [vmem:[%s3421 + $0x10] sm:$0xf]
        %v3427 = vld [vmem:[%s3421 + $0x14] sm:$0xf]
        %v3428 = vld [vmem:[%s3421 + $0x18] sm:$0xf]
        %v3429 = vld [vmem:[%s3421 + $0x1c] sm:$0xf]
        %v3430 = vld [vmem:[%s3421 + $0x20] sm:$0xf]
        %v3431 = vld [vmem:[%s3421 + $0x24] sm:$0xf]
        %v3432 = vld [vmem:[%s3421 + $0x28] sm:$0xf]
        %v3433 = vld [vmem:[%s3421 + $0x2c] sm:$0xf]
        %v3434 = vld [vmem:[%s3421 + $0x30] sm:$0xf]
        %v3435 = vld [vmem:[%s3421 + $0x34] sm:$0xf]
        %v3436 = vld [vmem:[%s3421 + $0x38] sm:$0xf]
        %v3437 = vld [vmem:[%s3421 + $0x3c] sm:$0xf]
        %v3438 = vld [vmem:[%s3421 + $0x40] sm:$0xf]
        %v3439 = vld [vmem:[%s3421 + $0x44] sm:$0xf]
        %v3440 = vld [vmem:[%s3421 + $0x48] sm:$0xf]
        %v3441 = vld [vmem:[%s3421 + $0x4c] sm:$0xf]
        %v3442 = vld [vmem:[%s3421 + $0x50] sm:$0xf]
        %v3443 = vld [vmem:[%s3421 + $0x54] sm:$0xf]
        %v3444 = vld [vmem:[%s3421 + $0x58] sm:$0xf]
        %v3445 = vld [vmem:[%s3421 + $0x5c] sm:$0xf]
        %v3446 = vld [vmem:[%s3421 + $0x60] sm:$0xf]
        %v3447 = vld [vmem:[%s3421 + $0x64] sm:$0xf]
        %v3448 = vld [vmem:[%s3421 + $0x68] sm:$0xf]
        %v3449 = vld [vmem:[%s3421 + $0x6c] sm:$0xf]
        %v3450 = vld [vmem:[%s3421 + $0x70] sm:$0xf]
        %v3451 = vld [vmem:[%s3421 + $0x74] sm:$0xf]
        %v3452 = vld [vmem:[%s3421 + $0x78] sm:$0xf]
        %v3453 = vld [vmem:[%s3421 + $0x7c] sm:$0xf]
        %v3486 = vunpack.c.l.b16 %v3422
        %v3487 = vunpack.c.l.b16 %v3423
        %v3488 = vunpack.c.l.b16 %v3424
        %v3489 = vunpack.c.l.b16 %v3425
        %v3490 = vunpack.c.l.b16 %v3426
        %v3491 = vunpack.c.l.b16 %v3427
        %v3492 = vunpack.c.l.b16 %v3428
        %v3493 = vunpack.c.l.b16 %v3429
        %v3494 = vunpack.c.l.b16 %v3430
        %v3495 = vunpack.c.l.b16 %v3431
        %v3496 = vunpack.c.l.b16 %v3432
        %v3497 = vunpack.c.l.b16 %v3433
        %v3498 = vunpack.c.l.b16 %v3434
        %v3499 = vunpack.c.l.b16 %v3435
        %v3500 = vunpack.c.l.b16 %v3436
        %v3501 = vunpack.c.l.b16 %v3437
        %v3502 = vunpack.c.l.b16 %v3438
        %v3503 = vunpack.c.l.b16 %v3439
        %v3504 = vunpack.c.l.b16 %v3440
        %v3505 = vunpack.c.l.b16 %v3441
        %v3506 = vunpack.c.l.b16 %v3442
        %v3507 = vunpack.c.l.b16 %v3443
        %v3508 = vunpack.c.l.b16 %v3444
        %v3509 = vunpack.c.l.b16 %v3445
        %v3510 = vunpack.c.l.b16 %v3446
        %v3511 = vunpack.c.l.b16 %v3447
        %v3512 = vunpack.c.l.b16 %v3448
        %v3513 = vunpack.c.l.b16 %v3449
        %v3514 = vunpack.c.l.b16 %v3450
        %v3515 = vunpack.c.l.b16 %v3451
        %v3516 = vunpack.c.l.b16 %v3452
        %v3517 = vunpack.c.l.b16 %v3453
        %v3518 = vpack.c.b16 %v3487, %v3486
        %v3519 = vpack.c.b16 %v3489, %v3488
        %v3520 = vpack.c.b16 %v3491, %v3490
        %v3521 = vpack.c.b16 %v3493, %v3492
        %v3522 = vpack.c.b16 %v3495, %v3494
        %v3523 = vpack.c.b16 %v3497, %v3496
        %v3524 = vpack.c.b16 %v3499, %v3498
        %v3525 = vpack.c.b16 %v3501, %v3500
        %v3526 = vpack.c.b16 %v3503, %v3502
        %v3527 = vpack.c.b16 %v3505, %v3504
        %v3528 = vpack.c.b16 %v3507, %v3506
        %v3529 = vpack.c.b16 %v3509, %v3508
        %v3530 = vpack.c.b16 %v3511, %v3510
        %v3531 = vpack.c.b16 %v3513, %v3512
        %v3532 = vpack.c.b16 %v3515, %v3514
        %v3533 = vpack.c.b16 %v3517, %v3516
        %3550 = vmatprep.subr.bf16.mxu0 0
        %3551 = vmatpush1.bf16.msra.mxu0 %v3525
        %3552 = vmatprep.subr.bf16.mxu0 0
        %3553 = vmatpush1.bf16.msra.mxu0 %v3524
        %3554 = vmatprep.subr.bf16.mxu0 0
        %3555 = vmatpush1.bf16.msra.mxu0 %v3523
        %3556 = vmatprep.subr.bf16.mxu0 0
        %3557 = vmatpush1.bf16.msra.mxu0 %v3522
        %3558 = vmatprep.subr.bf16.mxu0 0
        %3559 = vmatpush1.bf16.msra.mxu0 %v3521
        %3560 = vmatprep.subr.bf16.mxu0 0
        %3561 = vmatpush1.bf16.msra.mxu0 %v3520
        %3562 = vmatprep.subr.bf16.mxu0 0
        %3563 = vmatpush1.bf16.msra.mxu0 %v3519
        %3564 = vmatprep.subr.bf16.mxu0 0
        %3565 = vmatpush1.bf16.msra.mxu0 %v3518
        %3566 = vmatprep.subr.bf16.mxu0 0
        %3567 = vmatpush2.bf16.msra.mxu0 %v3533
        %3568 = vmatprep.subr.bf16.mxu0 0
        %3569 = vmatpush2.bf16.msra.mxu0 %v3532
        %3570 = vmatprep.subr.bf16.mxu0 0
        %3571 = vmatpush2.bf16.msra.mxu0 %v3531
        %3572 = vmatprep.subr.bf16.mxu0 0
        %3573 = vmatpush2.bf16.msra.mxu0 %v3530
        %3574 = vmatprep.subr.bf16.mxu0 0
        %3575 = vmatpush2.bf16.msra.mxu0 %v3529
        %3576 = vmatprep.subr.bf16.mxu0 0
        %3577 = vmatpush2.bf16.msra.mxu0 %v3528
        %3578 = vmatprep.subr.bf16.mxu0 0
        %3579 = vmatpush2.bf16.msra.mxu0 %v3527
        %3580 = vmatprep.subr.bf16.mxu0 0
        %3581 = vmatpush2.bf16.msra.mxu0 %v3526
        %3582 = vmatprep.mubr.bf16.mxu0 %v2441
        %3583 = vmatmul.mubr.bf16.gmra.mxu0 %v2439
        %v3584 = vpop.f32.mrf.mxu0
        %v3585 = vadd.f32 0.0, %v3584
        %v3586 = vpop.f32.mrf.mxu0
        %v3587 = vpop.f32.mrf.mxu0
        %v3588 = vadd.f32 0.0, %v3587
        %v3589 = vpop.f32.mrf.mxu0
        %3590 = vdwg.mxu0
        %v3623 = vunpack.c.l.b16 %v3389
        %v3624 = vunpack.c.l.b16 %v3390
        %v3625 = vunpack.c.l.b16 %v3391
        %v3626 = vunpack.c.l.b16 %v3392
        %v3627 = vunpack.c.l.b16 %v3393
        %v3628 = vunpack.c.l.b16 %v3394
        %v3629 = vunpack.c.l.b16 %v3395
        %v3630 = vunpack.c.l.b16 %v3396
        %v3631 = vunpack.c.l.b16 %v3397
        %v3632 = vunpack.c.l.b16 %v3398
        %v3633 = vunpack.c.l.b16 %v3399
        %v3634 = vunpack.c.l.b16 %v3400
        %v3635 = vunpack.c.l.b16 %v3401
        %v3636 = vunpack.c.l.b16 %v3402
        %v3637 = vunpack.c.l.b16 %v3403
        %v3638 = vunpack.c.l.b16 %v3404
        %v3639 = vunpack.c.l.b16 %v3405
        %v3640 = vunpack.c.l.b16 %v3406
        %v3641 = vunpack.c.l.b16 %v3407
        %v3642 = vunpack.c.l.b16 %v3408
        %v3643 = vunpack.c.l.b16 %v3409
        %v3644 = vunpack.c.l.b16 %v3410
        %v3645 = vunpack.c.l.b16 %v3411
        %v3646 = vunpack.c.l.b16 %v3412
        %v3647 = vunpack.c.l.b16 %v3413
        %v3648 = vunpack.c.l.b16 %v3414
        %v3649 = vunpack.c.l.b16 %v3415
        %v3650 = vunpack.c.l.b16 %v3416
        %v3651 = vunpack.c.l.b16 %v3417
        %v3652 = vunpack.c.l.b16 %v3418
        %v3653 = vunpack.c.l.b16 %v3419
        %v3654 = vunpack.c.l.b16 %v3420
        %v3655 = vpack.c.b16 %v3624, %v3623
        %v3656 = vpack.c.b16 %v3626, %v3625
        %v3657 = vpack.c.b16 %v3628, %v3627
        %v3658 = vpack.c.b16 %v3630, %v3629
        %v3659 = vpack.c.b16 %v3632, %v3631
        %v3660 = vpack.c.b16 %v3634, %v3633
        %v3661 = vpack.c.b16 %v3636, %v3635
        %v3662 = vpack.c.b16 %v3638, %v3637
        %v3663 = vpack.c.b16 %v3640, %v3639
        %v3664 = vpack.c.b16 %v3642, %v3641
        %v3665 = vpack.c.b16 %v3644, %v3643
        %v3666 = vpack.c.b16 %v3646, %v3645
        %v3667 = vpack.c.b16 %v3648, %v3647
        %v3668 = vpack.c.b16 %v3650, %v3649
        %v3669 = vpack.c.b16 %v3652, %v3651
        %v3670 = vpack.c.b16 %v3654, %v3653
        %3687 = vmatprep.subr.bf16.mxu0 0
        %3688 = vmatpush1.bf16.msra.mxu0 %v3662
        %3689 = vmatprep.subr.bf16.mxu0 0
        %3690 = vmatpush1.bf16.msra.mxu0 %v3661
        %3691 = vmatprep.subr.bf16.mxu0 0
        %3692 = vmatpush1.bf16.msra.mxu0 %v3660
        %3693 = vmatprep.subr.bf16.mxu0 0
        %3694 = vmatpush1.bf16.msra.mxu0 %v3659
        %3695 = vmatprep.subr.bf16.mxu0 0
        %3696 = vmatpush1.bf16.msra.mxu0 %v3658
        %3697 = vmatprep.subr.bf16.mxu0 0
        %3698 = vmatpush1.bf16.msra.mxu0 %v3657
        %3699 = vmatprep.subr.bf16.mxu0 0
        %3700 = vmatpush1.bf16.msra.mxu0 %v3656
        %3701 = vmatprep.subr.bf16.mxu0 0
        %3702 = vmatpush1.bf16.msra.mxu0 %v3655
        %3703 = vmatprep.subr.bf16.mxu0 0
        %3704 = vmatpush2.bf16.msra.mxu0 %v3670
        %3705 = vmatprep.subr.bf16.mxu0 0
        %3706 = vmatpush2.bf16.msra.mxu0 %v3669
        %3707 = vmatprep.subr.bf16.mxu0 0
        %3708 = vmatpush2.bf16.msra.mxu0 %v3668
        %3709 = vmatprep.subr.bf16.mxu0 0
        %3710 = vmatpush2.bf16.msra.mxu0 %v3667
        %3711 = vmatprep.subr.bf16.mxu0 0
        %3712 = vmatpush2.bf16.msra.mxu0 %v3666
        %3713 = vmatprep.subr.bf16.mxu0 0
        %3714 = vmatpush2.bf16.msra.mxu0 %v3665
        %3715 = vmatprep.subr.bf16.mxu0 0
        %3716 = vmatpush2.bf16.msra.mxu0 %v3664
        %3717 = vmatprep.subr.bf16.mxu0 0
        %3718 = vmatpush2.bf16.msra.mxu0 %v3663
        %3719 = vmatprep.mubr.bf16.mxu0 %v3387
        %3720 = vmatmul.mubr.bf16.gmra.mxu0 %v3386
        %v3721 = vpop.f32.mrf.mxu0
        %v3722 = vadd.f32 %v3585, %v3721
        %v3723 = vpop.f32.mrf.mxu0
        %v3724 = vpop.f32.mrf.mxu0
        %v3725 = vadd.f32 %v3588, %v3724
        %v3726 = vpop.f32.mrf.mxu0
        %3727 = vdwg.mxu0
        %s3728 = scalar_lea.vmem %s7, 1
        %v3729 = vld [vmem:[%s3728] sm:$0x1]
        %v3731 = vlaneseq
        %v3732 = vshrl.u32 %v3731, 7
        %v3733 = vsub.s32 0, %v3732
        %v3734 = vrot.slane %v3729, %v3733
        %v3736 = vadd.f32 %v3722, %v3734
        %v3737 = vadd.f32 %v3725, %v3734
        %v3738 = vpack.c.bf16 %v3355, %v3354
        %v3739 = vpack.c.bf16 %v3369, %v3368
        %s3740 = scalar_lea.vmem [#allocation11], 128
        %v3741 = vld [vmem:[%s3740] sm:$0xf]
        %v3742 = vld [vmem:[%s3740 + $0x4] sm:$0xf]
        %v3743 = vld [vmem:[%s3740 + $0x8] sm:$0xf]
        %v3744 = vld [vmem:[%s3740 + $0xc] sm:$0xf]
        %v3745 = vld [vmem:[%s3740 + $0x10] sm:$0xf]
        %v3746 = vld [vmem:[%s3740 + $0x14] sm:$0xf]
        %v3747 = vld [vmem:[%s3740 + $0x18] sm:$0xf]
        %v3748 = vld [vmem:[%s3740 + $0x1c] sm:$0xf]
        %v3749 = vld [vmem:[%s3740 + $0x20] sm:$0xf]
        %v3750 = vld [vmem:[%s3740 + $0x24] sm:$0xf]
        %v3751 = vld [vmem:[%s3740 + $0x28] sm:$0xf]
        %v3752 = vld [vmem:[%s3740 + $0x2c] sm:$0xf]
        %v3753 = vld [vmem:[%s3740 + $0x30] sm:$0xf]
        %v3754 = vld [vmem:[%s3740 + $0x34] sm:$0xf]
        %v3755 = vld [vmem:[%s3740 + $0x38] sm:$0xf]
        %v3756 = vld [vmem:[%s3740 + $0x3c] sm:$0xf]
        %v3757 = vld [vmem:[%s3740 + $0x40] sm:$0xf]
        %v3758 = vld [vmem:[%s3740 + $0x44] sm:$0xf]
        %v3759 = vld [vmem:[%s3740 + $0x48] sm:$0xf]
        %v3760 = vld [vmem:[%s3740 + $0x4c] sm:$0xf]
        %v3761 = vld [vmem:[%s3740 + $0x50] sm:$0xf]
        %v3762 = vld [vmem:[%s3740 + $0x54] sm:$0xf]
        %v3763 = vld [vmem:[%s3740 + $0x58] sm:$0xf]
        %v3764 = vld [vmem:[%s3740 + $0x5c] sm:$0xf]
        %v3765 = vld [vmem:[%s3740 + $0x60] sm:$0xf]
        %v3766 = vld [vmem:[%s3740 + $0x64] sm:$0xf]
        %v3767 = vld [vmem:[%s3740 + $0x68] sm:$0xf]
        %v3768 = vld [vmem:[%s3740 + $0x6c] sm:$0xf]
        %v3769 = vld [vmem:[%s3740 + $0x70] sm:$0xf]
        %v3770 = vld [vmem:[%s3740 + $0x74] sm:$0xf]
        %v3771 = vld [vmem:[%s3740 + $0x78] sm:$0xf]
        %v3772 = vld [vmem:[%s3740 + $0x7c] sm:$0xf]
        %v3805 = vunpack.c.l.b16 %v3741
        %v3806 = vunpack.c.l.b16 %v3742
        %v3807 = vunpack.c.l.b16 %v3743
        %v3808 = vunpack.c.l.b16 %v3744
        %v3809 = vunpack.c.l.b16 %v3745
        %v3810 = vunpack.c.l.b16 %v3746
        %v3811 = vunpack.c.l.b16 %v3747
        %v3812 = vunpack.c.l.b16 %v3748
        %v3813 = vunpack.c.l.b16 %v3749
        %v3814 = vunpack.c.l.b16 %v3750
        %v3815 = vunpack.c.l.b16 %v3751
        %v3816 = vunpack.c.l.b16 %v3752
        %v3817 = vunpack.c.l.b16 %v3753
        %v3818 = vunpack.c.l.b16 %v3754
        %v3819 = vunpack.c.l.b16 %v3755
        %v3820 = vunpack.c.l.b16 %v3756
        %v3821 = vunpack.c.l.b16 %v3757
        %v3822 = vunpack.c.l.b16 %v3758
        %v3823 = vunpack.c.l.b16 %v3759
        %v3824 = vunpack.c.l.b16 %v3760
        %v3825 = vunpack.c.l.b16 %v3761
        %v3826 = vunpack.c.l.b16 %v3762
        %v3827 = vunpack.c.l.b16 %v3763
        %v3828 = vunpack.c.l.b16 %v3764
        %v3829 = vunpack.c.l.b16 %v3765
        %v3830 = vunpack.c.l.b16 %v3766
        %v3831 = vunpack.c.l.b16 %v3767
        %v3832 = vunpack.c.l.b16 %v3768
        %v3833 = vunpack.c.l.b16 %v3769
        %v3834 = vunpack.c.l.b16 %v3770
        %v3835 = vunpack.c.l.b16 %v3771
        %v3836 = vunpack.c.l.b16 %v3772
        %v3837 = vpack.c.b16 %v3806, %v3805
        %v3838 = vpack.c.b16 %v3808, %v3807
        %v3839 = vpack.c.b16 %v3810, %v3809
        %v3840 = vpack.c.b16 %v3812, %v3811
        %v3841 = vpack.c.b16 %v3814, %v3813
        %v3842 = vpack.c.b16 %v3816, %v3815
        %v3843 = vpack.c.b16 %v3818, %v3817
        %v3844 = vpack.c.b16 %v3820, %v3819
        %v3845 = vpack.c.b16 %v3822, %v3821
        %v3846 = vpack.c.b16 %v3824, %v3823
        %v3847 = vpack.c.b16 %v3826, %v3825
        %v3848 = vpack.c.b16 %v3828, %v3827
        %v3849 = vpack.c.b16 %v3830, %v3829
        %v3850 = vpack.c.b16 %v3832, %v3831
        %v3851 = vpack.c.b16 %v3834, %v3833
        %v3852 = vpack.c.b16 %v3836, %v3835
        %3869 = vmatprep.subr.bf16.mxu0 0
        %3870 = vmatpush1.bf16.msra.mxu0 %v3844
        %3871 = vmatprep.subr.bf16.mxu0 0
        %3872 = vmatpush1.bf16.msra.mxu0 %v3843
        %3873 = vmatprep.subr.bf16.mxu0 0
        %3874 = vmatpush1.bf16.msra.mxu0 %v3842
        %3875 = vmatprep.subr.bf16.mxu0 0
        %3876 = vmatpush1.bf16.msra.mxu0 %v3841
        %3877 = vmatprep.subr.bf16.mxu0 0
        %3878 = vmatpush1.bf16.msra.mxu0 %v3840
        %3879 = vmatprep.subr.bf16.mxu0 0
        %3880 = vmatpush1.bf16.msra.mxu0 %v3839
        %3881 = vmatprep.subr.bf16.mxu0 0
        %3882 = vmatpush1.bf16.msra.mxu0 %v3838
        %3883 = vmatprep.subr.bf16.mxu0 0
        %3884 = vmatpush1.bf16.msra.mxu0 %v3837
        %3885 = vmatprep.subr.bf16.mxu0 0
        %3886 = vmatpush2.bf16.msra.mxu0 %v3852
        %3887 = vmatprep.subr.bf16.mxu0 0
        %3888 = vmatpush2.bf16.msra.mxu0 %v3851
        %3889 = vmatprep.subr.bf16.mxu0 0
        %3890 = vmatpush2.bf16.msra.mxu0 %v3850
        %3891 = vmatprep.subr.bf16.mxu0 0
        %3892 = vmatpush2.bf16.msra.mxu0 %v3849
        %3893 = vmatprep.subr.bf16.mxu0 0
        %3894 = vmatpush2.bf16.msra.mxu0 %v3848
        %3895 = vmatprep.subr.bf16.mxu0 0
        %3896 = vmatpush2.bf16.msra.mxu0 %v3847
        %3897 = vmatprep.subr.bf16.mxu0 0
        %3898 = vmatpush2.bf16.msra.mxu0 %v3846
        %3899 = vmatprep.subr.bf16.mxu0 0
        %3900 = vmatpush2.bf16.msra.mxu0 %v3845
        %3901 = vmatprep.mubr.bf16.mxu0 %v3739
        %3902 = vmatmul.mubr.bf16.gmra.mxu0 %v3738
        %v3903 = vpop.f32.mrf.mxu0
        %v3904 = vadd.f32 0.0, %v3903
        %v3905 = vpop.f32.mrf.mxu0
        %v3906 = vpop.f32.mrf.mxu0
        %v3907 = vadd.f32 0.0, %v3906
        %v3908 = vpop.f32.mrf.mxu0
        %3909 = vdwg.mxu0
        %v3910 = vadd.f32 %v3736, %v3904
        %v3911 = vadd.f32 %v3737, %v3907
        %s3912 = scalar_lea.vmem %s8, 1
        %v3913 = vld [vmem:[%s3912] sm:$0x1]
        %v3915 = vlaneseq
        %v3916 = vshrl.u32 %v3915, 7
        %v3917 = vsub.s32 0, %v3916
        %v3918 = vrot.slane %v3913, %v3917
        %v3920 = vadd.f32 %v3910, %v3918
        %v3921 = vadd.f32 %v3911, %v3918
        %vm3922 = vcmp.gt.f32.partialorder %v3920, 0.0
        %vm3923 = vcmp.gt.f32.partialorder %v3921, 0.0
        %v3924 = vmin.f32 %v3920, 0.0
        %v3925 = vmin.f32 %v3921, 0.0
        %v3926 = vmul.f32 %v3924, 1.442695
        %v3927 = vpow.pop %v3926
        %v3928 = vmul.f32 %v3925, 1.442695
        %v3929 = vpow.pop %v3928
        %v3930 = vsub.f32 %v3927, 1.0
        %v3931 = vsub.f32 %v3929, 1.0
        %v3932 = vsel %vm3922, %v3920, %v3930
        %v3933 = vsel %vm3923, %v3921, %v3931
        %v3934 = vsub.f32 0.0, %v3920
        %v3935 = vsub.f32 0.0, %v3921
        %vm3936 = vcmp.gt.f32.partialorder %v3934, 0.0
        %vm3937 = vcmp.gt.f32.partialorder %v3935, 0.0
        %v3938 = vmin.f32 %v3934, 0.0
        %v3939 = vmin.f32 %v3935, 0.0
        %v3940 = vmul.f32 %v3938, 1.442695
        %v3941 = vpow.pop %v3940
        %v3942 = vmul.f32 %v3939, 1.442695
        %v3943 = vpow.pop %v3942
        %v3944 = vsub.f32 %v3941, 1.0
        %v3945 = vsub.f32 %v3943, 1.0
        %v3946 = vsel %vm3936, %v3934, %v3944
        %v3947 = vsel %vm3937, %v3935, %v3945
        %v3952 = vrot.slane %v3932, 7
        %v3953 = vrot.slane %v3946, 7
        %v3954 = vrot.slane %v3933, 7
        %v3955 = vsel %vm895, %v3952, %v3954
        %v3956 = vrot.slane %v3947, 7
        %v3957 = vsel %vm895, %v3953, %v3956
        %v3962 = vsel %vm895, 0.0, %v3952
        %v3963 = vsel %vm895, 0.0, %v3953
        %v3964 = vpack.c.bf16 %v3955, %v3962
        %v3965 = vpack.c.bf16 %v3957, %v3963
        %s3966 = scalar_lea.vmem [#allocation13], 512
        %v3967 = vld [vmem:[%s3966] sm:$0xff]
        %v3968 = vld [vmem:[%s3966 + $0x8] sm:$0xff]
        %v3969 = vld [vmem:[%s3966 + $0x10] sm:$0xff]
        %v3970 = vld [vmem:[%s3966 + $0x18] sm:$0xff]
        %v3971 = vld [vmem:[%s3966 + $0x20] sm:$0xff]
        %v3972 = vld [vmem:[%s3966 + $0x28] sm:$0xff]
        %v3973 = vld [vmem:[%s3966 + $0x30] sm:$0xff]
        %v3974 = vld [vmem:[%s3966 + $0x38] sm:$0xff]
        %v3975 = vld [vmem:[%s3966 + $0x40] sm:$0xff]
        %v3976 = vld [vmem:[%s3966 + $0x48] sm:$0xff]
        %v3977 = vld [vmem:[%s3966 + $0x50] sm:$0xff]
        %v3978 = vld [vmem:[%s3966 + $0x58] sm:$0xff]
        %v3979 = vld [vmem:[%s3966 + $0x60] sm:$0xff]
        %v3980 = vld [vmem:[%s3966 + $0x68] sm:$0xff]
        %v3981 = vld [vmem:[%s3966 + $0x70] sm:$0xff]
        %v3982 = vld [vmem:[%s3966 + $0x78] sm:$0xff]
        %v3983 = vld [vmem:[%s3966 + $0x80] sm:$0xff]
        %v3984 = vld [vmem:[%s3966 + $0x88] sm:$0xff]
        %v3985 = vld [vmem:[%s3966 + $0x90] sm:$0xff]
        %v3986 = vld [vmem:[%s3966 + $0x98] sm:$0xff]
        %v3987 = vld [vmem:[%s3966 + $0xa0] sm:$0xff]
        %v3988 = vld [vmem:[%s3966 + $0xa8] sm:$0xff]
        %v3989 = vld [vmem:[%s3966 + $0xb0] sm:$0xff]
        %v3990 = vld [vmem:[%s3966 + $0xb8] sm:$0xff]
        %v3991 = vld [vmem:[%s3966 + $0xc0] sm:$0xff]
        %v3992 = vld [vmem:[%s3966 + $0xc8] sm:$0xff]
        %v3993 = vld [vmem:[%s3966 + $0xd0] sm:$0xff]
        %v3994 = vld [vmem:[%s3966 + $0xd8] sm:$0xff]
        %v3995 = vld [vmem:[%s3966 + $0xe0] sm:$0xff]
        %v3996 = vld [vmem:[%s3966 + $0xe8] sm:$0xff]
        %v3997 = vld [vmem:[%s3966 + $0xf0] sm:$0xff]
        %v3998 = vld [vmem:[%s3966 + $0xf8] sm:$0xff]
        %v3999 = vpack.c.bf16 %v3933, %v3932
        %v4000 = vpack.c.bf16 %v3947, %v3946
        %s4001 = scalar_lea.vmem [#allocation13], 768
        %v4002 = vld [vmem:[%s4001] sm:$0xff]
        %v4003 = vld [vmem:[%s4001 + $0x8] sm:$0xff]
        %v4004 = vld [vmem:[%s4001 + $0x10] sm:$0xff]
        %v4005 = vld [vmem:[%s4001 + $0x18] sm:$0xff]
        %v4006 = vld [vmem:[%s4001 + $0x20] sm:$0xff]
        %v4007 = vld [vmem:[%s4001 + $0x28] sm:$0xff]
        %v4008 = vld [vmem:[%s4001 + $0x30] sm:$0xff]
        %v4009 = vld [vmem:[%s4001 + $0x38] sm:$0xff]
        %v4010 = vld [vmem:[%s4001 + $0x40] sm:$0xff]
        %v4011 = vld [vmem:[%s4001 + $0x48] sm:$0xff]
        %v4012 = vld [vmem:[%s4001 + $0x50] sm:$0xff]
        %v4013 = vld [vmem:[%s4001 + $0x58] sm:$0xff]
        %v4014 = vld [vmem:[%s4001 + $0x60] sm:$0xff]
        %v4015 = vld [vmem:[%s4001 + $0x68] sm:$0xff]
        %v4016 = vld [vmem:[%s4001 + $0x70] sm:$0xff]
        %v4017 = vld [vmem:[%s4001 + $0x78] sm:$0xff]
        %v4018 = vld [vmem:[%s4001 + $0x80] sm:$0xff]
        %v4019 = vld [vmem:[%s4001 + $0x88] sm:$0xff]
        %v4020 = vld [vmem:[%s4001 + $0x90] sm:$0xff]
        %v4021 = vld [vmem:[%s4001 + $0x98] sm:$0xff]
        %v4022 = vld [vmem:[%s4001 + $0xa0] sm:$0xff]
        %v4023 = vld [vmem:[%s4001 + $0xa8] sm:$0xff]
        %v4024 = vld [vmem:[%s4001 + $0xb0] sm:$0xff]
        %v4025 = vld [vmem:[%s4001 + $0xb8] sm:$0xff]
        %v4026 = vld [vmem:[%s4001 + $0xc0] sm:$0xff]
        %v4027 = vld [vmem:[%s4001 + $0xc8] sm:$0xff]
        %v4028 = vld [vmem:[%s4001 + $0xd0] sm:$0xff]
        %v4029 = vld [vmem:[%s4001 + $0xd8] sm:$0xff]
        %v4030 = vld [vmem:[%s4001 + $0xe0] sm:$0xff]
        %v4031 = vld [vmem:[%s4001 + $0xe8] sm:$0xff]
        %v4032 = vld [vmem:[%s4001 + $0xf0] sm:$0xff]
        %v4033 = vld [vmem:[%s4001 + $0xf8] sm:$0xff]
        %v4066 = vunpack.c.l.b16 %v4002
        %v4067 = vunpack.c.h.b16 %v4002
        %v4068 = vunpack.c.l.b16 %v4003
        %v4069 = vunpack.c.h.b16 %v4003
        %v4070 = vunpack.c.l.b16 %v4004
        %v4071 = vunpack.c.h.b16 %v4004
        %v4072 = vunpack.c.l.b16 %v4005
        %v4073 = vunpack.c.h.b16 %v4005
        %v4074 = vunpack.c.l.b16 %v4006
        %v4075 = vunpack.c.h.b16 %v4006
        %v4076 = vunpack.c.l.b16 %v4007
        %v4077 = vunpack.c.h.b16 %v4007
        %v4078 = vunpack.c.l.b16 %v4008
        %v4079 = vunpack.c.h.b16 %v4008
        %v4080 = vunpack.c.l.b16 %v4009
        %v4081 = vunpack.c.h.b16 %v4009
        %v4082 = vunpack.c.l.b16 %v4010
        %v4083 = vunpack.c.h.b16 %v4010
        %v4084 = vunpack.c.l.b16 %v4011
        %v4085 = vunpack.c.h.b16 %v4011
        %v4086 = vunpack.c.l.b16 %v4012
        %v4087 = vunpack.c.h.b16 %v4012
        %v4088 = vunpack.c.l.b16 %v4013
        %v4089 = vunpack.c.h.b16 %v4013
        %v4090 = vunpack.c.l.b16 %v4014
        %v4091 = vunpack.c.h.b16 %v4014
        %v4092 = vunpack.c.l.b16 %v4015
        %v4093 = vunpack.c.h.b16 %v4015
        %v4094 = vunpack.c.l.b16 %v4016
        %v4095 = vunpack.c.h.b16 %v4016
        %v4096 = vunpack.c.l.b16 %v4017
        %v4097 = vunpack.c.h.b16 %v4017
        %v4098 = vunpack.c.l.b16 %v4018
        %v4099 = vunpack.c.h.b16 %v4018
        %v4100 = vunpack.c.l.b16 %v4019
        %v4101 = vunpack.c.h.b16 %v4019
        %v4102 = vunpack.c.l.b16 %v4020
        %v4103 = vunpack.c.h.b16 %v4020
        %v4104 = vunpack.c.l.b16 %v4021
        %v4105 = vunpack.c.h.b16 %v4021
        %v4106 = vunpack.c.l.b16 %v4022
        %v4107 = vunpack.c.h.b16 %v4022
        %v4108 = vunpack.c.l.b16 %v4023
        %v4109 = vunpack.c.h.b16 %v4023
        %v4110 = vunpack.c.l.b16 %v4024
        %v4111 = vunpack.c.h.b16 %v4024
        %v4112 = vunpack.c.l.b16 %v4025
        %v4113 = vunpack.c.h.b16 %v4025
        %v4114 = vunpack.c.l.b16 %v4026
        %v4115 = vunpack.c.h.b16 %v4026
        %v4116 = vunpack.c.l.b16 %v4027
        %v4117 = vunpack.c.h.b16 %v4027
        %v4118 = vunpack.c.l.b16 %v4028
        %v4119 = vunpack.c.h.b16 %v4028
        %v4120 = vunpack.c.l.b16 %v4029
        %v4121 = vunpack.c.h.b16 %v4029
        %v4122 = vunpack.c.l.b16 %v4030
        %v4123 = vunpack.c.h.b16 %v4030
        %v4124 = vunpack.c.l.b16 %v4031
        %v4125 = vunpack.c.h.b16 %v4031
        %v4126 = vunpack.c.l.b16 %v4032
        %v4127 = vunpack.c.h.b16 %v4032
        %v4128 = vunpack.c.l.b16 %v4033
        %v4129 = vunpack.c.h.b16 %v4033
        %v4130 = vpack.c.b16 %v4068, %v4066
        %v4131 = vpack.c.b16 %v4069, %v4067
        %v4132 = vpack.c.b16 %v4072, %v4070
        %v4133 = vpack.c.b16 %v4073, %v4071
        %v4134 = vpack.c.b16 %v4076, %v4074
        %v4135 = vpack.c.b16 %v4077, %v4075
        %v4136 = vpack.c.b16 %v4080, %v4078
        %v4137 = vpack.c.b16 %v4081, %v4079
        %v4138 = vpack.c.b16 %v4084, %v4082
        %v4139 = vpack.c.b16 %v4085, %v4083
        %v4140 = vpack.c.b16 %v4088, %v4086
        %v4141 = vpack.c.b16 %v4089, %v4087
        %v4142 = vpack.c.b16 %v4092, %v4090
        %v4143 = vpack.c.b16 %v4093, %v4091
        %v4144 = vpack.c.b16 %v4096, %v4094
        %v4145 = vpack.c.b16 %v4097, %v4095
        %v4146 = vpack.c.b16 %v4100, %v4098
        %v4147 = vpack.c.b16 %v4101, %v4099
        %v4148 = vpack.c.b16 %v4104, %v4102
        %v4149 = vpack.c.b16 %v4105, %v4103
        %v4150 = vpack.c.b16 %v4108, %v4106
        %v4151 = vpack.c.b16 %v4109, %v4107
        %v4152 = vpack.c.b16 %v4112, %v4110
        %v4153 = vpack.c.b16 %v4113, %v4111
        %v4154 = vpack.c.b16 %v4116, %v4114
        %v4155 = vpack.c.b16 %v4117, %v4115
        %v4156 = vpack.c.b16 %v4120, %v4118
        %v4157 = vpack.c.b16 %v4121, %v4119
        %v4158 = vpack.c.b16 %v4124, %v4122
        %v4159 = vpack.c.b16 %v4125, %v4123
        %v4160 = vpack.c.b16 %v4128, %v4126
        %v4161 = vpack.c.b16 %v4129, %v4127
        %4194 = vmatprep.subr.bf16.mxu0 %v4145
        %4195 = vmatpush1.bf16.msra.mxu0 %v4144
        %4196 = vmatprep.subr.bf16.mxu0 %v4143
        %4197 = vmatpush1.bf16.msra.mxu0 %v4142
        %4198 = vmatprep.subr.bf16.mxu0 %v4141
        %4199 = vmatpush1.bf16.msra.mxu0 %v4140
        %4200 = vmatprep.subr.bf16.mxu0 %v4139
        %4201 = vmatpush1.bf16.msra.mxu0 %v4138
        %4202 = vmatprep.subr.bf16.mxu0 %v4137
        %4203 = vmatpush1.bf16.msra.mxu0 %v4136
        %4204 = vmatprep.subr.bf16.mxu0 %v4135
        %4205 = vmatpush1.bf16.msra.mxu0 %v4134
        %4206 = vmatprep.subr.bf16.mxu0 %v4133
        %4207 = vmatpush1.bf16.msra.mxu0 %v4132
        %4208 = vmatprep.subr.bf16.mxu0 %v4131
        %4209 = vmatpush1.bf16.msra.mxu0 %v4130
        %4210 = vmatprep.subr.bf16.mxu0 %v4161
        %4211 = vmatpush2.bf16.msra.mxu0 %v4160
        %4212 = vmatprep.subr.bf16.mxu0 %v4159
        %4213 = vmatpush2.bf16.msra.mxu0 %v4158
        %4214 = vmatprep.subr.bf16.mxu0 %v4157
        %4215 = vmatpush2.bf16.msra.mxu0 %v4156
        %4216 = vmatprep.subr.bf16.mxu0 %v4155
        %4217 = vmatpush2.bf16.msra.mxu0 %v4154
        %4218 = vmatprep.subr.bf16.mxu0 %v4153
        %4219 = vmatpush2.bf16.msra.mxu0 %v4152
        %4220 = vmatprep.subr.bf16.mxu0 %v4151
        %4221 = vmatpush2.bf16.msra.mxu0 %v4150
        %4222 = vmatprep.subr.bf16.mxu0 %v4149
        %4223 = vmatpush2.bf16.msra.mxu0 %v4148
        %4224 = vmatprep.subr.bf16.mxu0 %v4147
        %4225 = vmatpush2.bf16.msra.mxu0 %v4146
        %4226 = vmatprep.mubr.bf16.mxu0 %v4000
        %4227 = vmatmul.mubr.bf16.gmra.mxu0 %v3999
        %v4228 = vpop.f32.mrf.mxu0
        %v4229 = vadd.f32 0.0, %v4228
        %v4230 = vpop.f32.mrf.mxu0
        %v4231 = vadd.f32 0.0, %v4230
        %v4232 = vpop.f32.mrf.mxu0
        %v4233 = vadd.f32 0.0, %v4232
        %v4234 = vpop.f32.mrf.mxu0
        %v4235 = vadd.f32 0.0, %v4234
        %4236 = vdwg.mxu0
        %v4269 = vunpack.c.l.b16 %v3967
        %v4270 = vunpack.c.h.b16 %v3967
        %v4271 = vunpack.c.l.b16 %v3968
        %v4272 = vunpack.c.h.b16 %v3968
        %v4273 = vunpack.c.l.b16 %v3969
        %v4274 = vunpack.c.h.b16 %v3969
        %v4275 = vunpack.c.l.b16 %v3970
        %v4276 = vunpack.c.h.b16 %v3970
        %v4277 = vunpack.c.l.b16 %v3971
        %v4278 = vunpack.c.h.b16 %v3971
        %v4279 = vunpack.c.l.b16 %v3972
        %v4280 = vunpack.c.h.b16 %v3972
        %v4281 = vunpack.c.l.b16 %v3973
        %v4282 = vunpack.c.h.b16 %v3973
        %v4283 = vunpack.c.l.b16 %v3974
        %v4284 = vunpack.c.h.b16 %v3974
        %v4285 = vunpack.c.l.b16 %v3975
        %v4286 = vunpack.c.h.b16 %v3975
        %v4287 = vunpack.c.l.b16 %v3976
        %v4288 = vunpack.c.h.b16 %v3976
        %v4289 = vunpack.c.l.b16 %v3977
        %v4290 = vunpack.c.h.b16 %v3977
        %v4291 = vunpack.c.l.b16 %v3978
        %v4292 = vunpack.c.h.b16 %v3978
        %v4293 = vunpack.c.l.b16 %v3979
        %v4294 = vunpack.c.h.b16 %v3979
        %v4295 = vunpack.c.l.b16 %v3980
        %v4296 = vunpack.c.h.b16 %v3980
        %v4297 = vunpack.c.l.b16 %v3981
        %v4298 = vunpack.c.h.b16 %v3981
        %v4299 = vunpack.c.l.b16 %v3982
        %v4300 = vunpack.c.h.b16 %v3982
        %v4301 = vunpack.c.l.b16 %v3983
        %v4302 = vunpack.c.h.b16 %v3983
        %v4303 = vunpack.c.l.b16 %v3984
        %v4304 = vunpack.c.h.b16 %v3984
        %v4305 = vunpack.c.l.b16 %v3985
        %v4306 = vunpack.c.h.b16 %v3985
        %v4307 = vunpack.c.l.b16 %v3986
        %v4308 = vunpack.c.h.b16 %v3986
        %v4309 = vunpack.c.l.b16 %v3987
        %v4310 = vunpack.c.h.b16 %v3987
        %v4311 = vunpack.c.l.b16 %v3988
        %v4312 = vunpack.c.h.b16 %v3988
        %v4313 = vunpack.c.l.b16 %v3989
        %v4314 = vunpack.c.h.b16 %v3989
        %v4315 = vunpack.c.l.b16 %v3990
        %v4316 = vunpack.c.h.b16 %v3990
        %v4317 = vunpack.c.l.b16 %v3991
        %v4318 = vunpack.c.h.b16 %v3991
        %v4319 = vunpack.c.l.b16 %v3992
        %v4320 = vunpack.c.h.b16 %v3992
        %v4321 = vunpack.c.l.b16 %v3993
        %v4322 = vunpack.c.h.b16 %v3993
        %v4323 = vunpack.c.l.b16 %v3994
        %v4324 = vunpack.c.h.b16 %v3994
        %v4325 = vunpack.c.l.b16 %v3995
        %v4326 = vunpack.c.h.b16 %v3995
        %v4327 = vunpack.c.l.b16 %v3996
        %v4328 = vunpack.c.h.b16 %v3996
        %v4329 = vunpack.c.l.b16 %v3997
        %v4330 = vunpack.c.h.b16 %v3997
        %v4331 = vunpack.c.l.b16 %v3998
        %v4332 = vunpack.c.h.b16 %v3998
        %v4333 = vpack.c.b16 %v4271, %v4269
        %v4334 = vpack.c.b16 %v4272, %v4270
        %v4335 = vpack.c.b16 %v4275, %v4273
        %v4336 = vpack.c.b16 %v4276, %v4274
        %v4337 = vpack.c.b16 %v4279, %v4277
        %v4338 = vpack.c.b16 %v4280, %v4278
        %v4339 = vpack.c.b16 %v4283, %v4281
        %v4340 = vpack.c.b16 %v4284, %v4282
        %v4341 = vpack.c.b16 %v4287, %v4285
        %v4342 = vpack.c.b16 %v4288, %v4286
        %v4343 = vpack.c.b16 %v4291, %v4289
        %v4344 = vpack.c.b16 %v4292, %v4290
        %v4345 = vpack.c.b16 %v4295, %v4293
        %v4346 = vpack.c.b16 %v4296, %v4294
        %v4347 = vpack.c.b16 %v4299, %v4297
        %v4348 = vpack.c.b16 %v4300, %v4298
        %v4349 = vpack.c.b16 %v4303, %v4301
        %v4350 = vpack.c.b16 %v4304, %v4302
        %v4351 = vpack.c.b16 %v4307, %v4305
        %v4352 = vpack.c.b16 %v4308, %v4306
        %v4353 = vpack.c.b16 %v4311, %v4309
        %v4354 = vpack.c.b16 %v4312, %v4310
        %v4355 = vpack.c.b16 %v4315, %v4313
        %v4356 = vpack.c.b16 %v4316, %v4314
        %v4357 = vpack.c.b16 %v4319, %v4317
        %v4358 = vpack.c.b16 %v4320, %v4318
        %v4359 = vpack.c.b16 %v4323, %v4321
        %v4360 = vpack.c.b16 %v4324, %v4322
        %v4361 = vpack.c.b16 %v4327, %v4325
        %v4362 = vpack.c.b16 %v4328, %v4326
        %v4363 = vpack.c.b16 %v4331, %v4329
        %v4364 = vpack.c.b16 %v4332, %v4330
        %4397 = vmatprep.subr.bf16.mxu0 %v4348
        %4398 = vmatpush1.bf16.msra.mxu0 %v4347
        %4399 = vmatprep.subr.bf16.mxu0 %v4346
        %4400 = vmatpush1.bf16.msra.mxu0 %v4345
        %4401 = vmatprep.subr.bf16.mxu0 %v4344
        %4402 = vmatpush1.bf16.msra.mxu0 %v4343
        %4403 = vmatprep.subr.bf16.mxu0 %v4342
        %4404 = vmatpush1.bf16.msra.mxu0 %v4341
        %4405 = vmatprep.subr.bf16.mxu0 %v4340
        %4406 = vmatpush1.bf16.msra.mxu0 %v4339
        %4407 = vmatprep.subr.bf16.mxu0 %v4338
        %4408 = vmatpush1.bf16.msra.mxu0 %v4337
        %4409 = vmatprep.subr.bf16.mxu0 %v4336
        %4410 = vmatpush1.bf16.msra.mxu0 %v4335
        %4411 = vmatprep.subr.bf16.mxu0 %v4334
        %4412 = vmatpush1.bf16.msra.mxu0 %v4333
        %4413 = vmatprep.subr.bf16.mxu0 %v4364
        %4414 = vmatpush2.bf16.msra.mxu0 %v4363
        %4415 = vmatprep.subr.bf16.mxu0 %v4362
        %4416 = vmatpush2.bf16.msra.mxu0 %v4361
        %4417 = vmatprep.subr.bf16.mxu0 %v4360
        %4418 = vmatpush2.bf16.msra.mxu0 %v4359
        %4419 = vmatprep.subr.bf16.mxu0 %v4358
        %4420 = vmatpush2.bf16.msra.mxu0 %v4357
        %4421 = vmatprep.subr.bf16.mxu0 %v4356
        %4422 = vmatpush2.bf16.msra.mxu0 %v4355
        %4423 = vmatprep.subr.bf16.mxu0 %v4354
        %4424 = vmatpush2.bf16.msra.mxu0 %v4353
        %4425 = vmatprep.subr.bf16.mxu0 %v4352
        %4426 = vmatpush2.bf16.msra.mxu0 %v4351
        %4427 = vmatprep.subr.bf16.mxu0 %v4350
        %4428 = vmatpush2.bf16.msra.mxu0 %v4349
        %4429 = vmatprep.mubr.bf16.mxu0 %v3965
        %4430 = vmatmul.mubr.bf16.gmra.mxu0 %v3964
        %v4431 = vpop.f32.mrf.mxu0
        %v4432 = vadd.f32 %v4229, %v4431
        %v4433 = vpop.f32.mrf.mxu0
        %v4434 = vadd.f32 %v4231, %v4433
        %v4435 = vpop.f32.mrf.mxu0
        %v4436 = vadd.f32 %v4233, %v4435
        %v4437 = vpop.f32.mrf.mxu0
        %v4438 = vadd.f32 %v4235, %v4437
        %4439 = vdwg.mxu0
        %s4440 = scalar_lea.vmem %s9, 2
        %v4441 = vld [vmem:[%s4440] sm:$0x3]
        %v4443 = vlaneseq
        %v4444 = vshrl.u32 %v4443, 7
        %v4445 = vsub.s32 0, %v4444
        %v4446 = vrot.slane %v4441, %v4445
        %v4447 = vlaneseq
        %v4448 = vshrl.u32 %v4447, 7
        %v4449 = vsub.s32 1, %v4448
        %v4450 = vrot.slane %v4441, %v4449
        %v4453 = vadd.f32 %v4432, %v4446
        %v4454 = vadd.f32 %v4434, %v4450
        %v4455 = vadd.f32 %v4436, %v4446
        %v4456 = vadd.f32 %v4438, %v4450
        %v4457 = vxor.u32 %v4454, 2147483648
        %v4458 = vxor.u32 %v4456, 2147483648
        %v4459 = vmul.f32 %v4457, 1.442695
        %v4460 = vpow.pop %v4459
        %v4461 = vmul.f32 %v4458, 1.442695
        %v4462 = vpow.pop %v4461
        %v4463 = vadd.f32 %v4460, 1.0
        %v4464 = vadd.f32 %v4462, 1.0
        %v4465 = vrcp.pop %v4463
        %v4466 = vmul.f32 1.0, %v4465
        %v4467 = vrcp.pop %v4464
        %v4468 = vmul.f32 1.0, %v4467
        %v4469 = vmul.f32 %v4453, %v4466
        %v4470 = vmul.f32 %v4455, %v4468
        %v4471 = vadd.f32 %v1989, %v4469
        %v4472 = vadd.f32 %v1990, %v4470
        %s4473 = scalar_lea.vmem %s737, 16 [#allocation8]
        %v4474 = vld [vmem:[%s4473] sm:$0xff]
        %v4475 = vld [vmem:[%s4473 + $0x8] sm:$0xff]
        %vm4476 = vcmp.gt.f32.partialorder %v4471, 0.0
        %vm4477 = vcmp.gt.f32.partialorder %v4472, 0.0
        %v4478 = vmin.f32 %v4471, 0.0
        %v4479 = vmin.f32 %v4472, 0.0
        %v4480 = vmul.f32 %v4478, 1.442695
        %v4481 = vpow.pop %v4480
        %v4482 = vmul.f32 %v4479, 1.442695
        %v4483 = vpow.pop %v4482
        %v4484 = vsub.f32 %v4481, 1.0
        %v4485 = vsub.f32 %v4483, 1.0
        %v4486 = vsel %vm4476, %v4471, %v4484
        %v4487 = vsel %vm4477, %v4472, %v4485
        %vm4488 = vcmp.gt.f32.partialorder %v4474, 0.0
        %vm4489 = vcmp.gt.f32.partialorder %v4475, 0.0
        %v4490 = vmin.f32 %v4474, 0.0
        %v4491 = vmin.f32 %v4475, 0.0
        %v4492 = vmul.f32 %v4490, 1.442695
        %v4493 = vpow.pop %v4492
        %v4494 = vmul.f32 %v4491, 1.442695
        %v4495 = vpow.pop %v4494
        %v4496 = vsub.f32 %v4493, 1.0
        %v4497 = vsub.f32 %v4495, 1.0
        %v4498 = vsel %vm4488, %v4474, %v4496
        %v4499 = vsel %vm4489, %v4475, %v4497
        %v4500 = vsub.f32 0.0, %v4471
        %v4501 = vsub.f32 0.0, %v4472
        %vm4502 = vcmp.gt.f32.partialorder %v4500, 0.0
        %vm4503 = vcmp.gt.f32.partialorder %v4501, 0.0
        %v4504 = vmin.f32 %v4500, 0.0
        %v4505 = vmin.f32 %v4501, 0.0
        %v4506 = vmul.f32 %v4504, 1.442695
        %v4507 = vpow.pop %v4506
        %v4508 = vmul.f32 %v4505, 1.442695
        %v4509 = vpow.pop %v4508
        %v4510 = vsub.f32 %v4507, 1.0
        %v4511 = vsub.f32 %v4509, 1.0
        %v4512 = vsel %vm4502, %v4500, %v4510
        %v4513 = vsel %vm4503, %v4501, %v4511
        %v4514 = vsub.f32 0.0, %v4474
        %v4515 = vsub.f32 0.0, %v4475
        %vm4516 = vcmp.gt.f32.partialorder %v4514, 0.0
        %vm4517 = vcmp.gt.f32.partialorder %v4515, 0.0
        %v4518 = vmin.f32 %v4514, 0.0
        %v4519 = vmin.f32 %v4515, 0.0
        %v4520 = vmul.f32 %v4518, 1.442695
        %v4521 = vpow.pop %v4520
        %v4522 = vmul.f32 %v4519, 1.442695
        %v4523 = vpow.pop %v4522
        %v4524 = vsub.f32 %v4521, 1.0
        %v4525 = vsub.f32 %v4523, 1.0
        %v4526 = vsel %vm4516, %v4514, %v4524
        %v4527 = vsel %vm4517, %v4515, %v4525
        %vm4528 = vcmp.gt.f32.partialorder %v3339, 0.0
        %vm4529 = vcmp.gt.f32.partialorder %v3340, 0.0
        %v4530 = vmin.f32 %v3339, 0.0
        %v4531 = vmin.f32 %v3340, 0.0
        %v4532 = vmul.f32 %v4530, 1.442695
        %v4533 = vpow.pop %v4532
        %v4534 = vmul.f32 %v4531, 1.442695
        %v4535 = vpow.pop %v4534
        %v4536 = vsub.f32 %v4533, 1.0
        %v4537 = vsub.f32 %v4535, 1.0
        %v4538 = vsel %vm4528, %v3339, %v4536
        %v4539 = vsel %vm4529, %v3340, %v4537
        %v4540 = vsub.f32 0.0, %v3339
        %v4541 = vsub.f32 0.0, %v3340
        %vm4542 = vcmp.gt.f32.partialorder %v4540, 0.0
        %vm4543 = vcmp.gt.f32.partialorder %v4541, 0.0
        %v4544 = vmin.f32 %v4540, 0.0
        %v4545 = vmin.f32 %v4541, 0.0
        %v4546 = vmul.f32 %v4544, 1.442695
        %v4547 = vpow.pop %v4546
        %v4548 = vmul.f32 %v4545, 1.442695
        %v4549 = vpow.pop %v4548
        %v4550 = vsub.f32 %v4547, 1.0
        %v4551 = vsub.f32 %v4549, 1.0
        %v4552 = vsel %vm4542, %v4540, %v4550
        %v4553 = vsel %vm4543, %v4541, %v4551
        %v4558 = vrot.slane %v4538, 7
        %v4559 = vrot.slane %v4552, 7
        %v4560 = vrot.slane %v4539, 7
        %v4561 = vsel %vm895, %v4558, %v4560
        %v4562 = vrot.slane %v4553, 7
        %v4563 = vsel %vm895, %v4559, %v4562
        %v4568 = vsel %vm895, 0.0, %v4558
        %v4569 = vsel %vm895, 0.0, %v4559
        %v4570 = vpack.c.bf16 %v4561, %v4568
        %v4571 = vpack.c.bf16 %v4563, %v4569
        %s4572 = scalar_lea.vmem [#allocation14], 256
        %v4573 = vld [vmem:[%s4572] sm:$0xf]
        %v4574 = vld [vmem:[%s4572 + $0x4] sm:$0xf]
        %v4575 = vld [vmem:[%s4572 + $0x8] sm:$0xf]
        %v4576 = vld [vmem:[%s4572 + $0xc] sm:$0xf]
        %v4577 = vld [vmem:[%s4572 + $0x10] sm:$0xf]
        %v4578 = vld [vmem:[%s4572 + $0x14] sm:$0xf]
        %v4579 = vld [vmem:[%s4572 + $0x18] sm:$0xf]
        %v4580 = vld [vmem:[%s4572 + $0x1c] sm:$0xf]
        %v4581 = vld [vmem:[%s4572 + $0x20] sm:$0xf]
        %v4582 = vld [vmem:[%s4572 + $0x24] sm:$0xf]
        %v4583 = vld [vmem:[%s4572 + $0x28] sm:$0xf]
        %v4584 = vld [vmem:[%s4572 + $0x2c] sm:$0xf]
        %v4585 = vld [vmem:[%s4572 + $0x30] sm:$0xf]
        %v4586 = vld [vmem:[%s4572 + $0x34] sm:$0xf]
        %v4587 = vld [vmem:[%s4572 + $0x38] sm:$0xf]
        %v4588 = vld [vmem:[%s4572 + $0x3c] sm:$0xf]
        %v4589 = vld [vmem:[%s4572 + $0x40] sm:$0xf]
        %v4590 = vld [vmem:[%s4572 + $0x44] sm:$0xf]
        %v4591 = vld [vmem:[%s4572 + $0x48] sm:$0xf]
        %v4592 = vld [vmem:[%s4572 + $0x4c] sm:$0xf]
        %v4593 = vld [vmem:[%s4572 + $0x50] sm:$0xf]
        %v4594 = vld [vmem:[%s4572 + $0x54] sm:$0xf]
        %v4595 = vld [vmem:[%s4572 + $0x58] sm:$0xf]
        %v4596 = vld [vmem:[%s4572 + $0x5c] sm:$0xf]
        %v4597 = vld [vmem:[%s4572 + $0x60] sm:$0xf]
        %v4598 = vld [vmem:[%s4572 + $0x64] sm:$0xf]
        %v4599 = vld [vmem:[%s4572 + $0x68] sm:$0xf]
        %v4600 = vld [vmem:[%s4572 + $0x6c] sm:$0xf]
        %v4601 = vld [vmem:[%s4572 + $0x70] sm:$0xf]
        %v4602 = vld [vmem:[%s4572 + $0x74] sm:$0xf]
        %v4603 = vld [vmem:[%s4572 + $0x78] sm:$0xf]
        %v4604 = vld [vmem:[%s4572 + $0x7c] sm:$0xf]
        %v4605 = vpack.c.bf16 %v4539, %v4538
        %v4606 = vpack.c.bf16 %v4553, %v4552
        %s4607 = scalar_lea.vmem [#allocation14], 384
        %v4608 = vld [vmem:[%s4607] sm:$0xf]
        %v4609 = vld [vmem:[%s4607 + $0x4] sm:$0xf]
        %v4610 = vld [vmem:[%s4607 + $0x8] sm:$0xf]
        %v4611 = vld [vmem:[%s4607 + $0xc] sm:$0xf]
        %v4612 = vld [vmem:[%s4607 + $0x10] sm:$0xf]
        %v4613 = vld [vmem:[%s4607 + $0x14] sm:$0xf]
        %v4614 = vld [vmem:[%s4607 + $0x18] sm:$0xf]
        %v4615 = vld [vmem:[%s4607 + $0x1c] sm:$0xf]
        %v4616 = vld [vmem:[%s4607 + $0x20] sm:$0xf]
        %v4617 = vld [vmem:[%s4607 + $0x24] sm:$0xf]
        %v4618 = vld [vmem:[%s4607 + $0x28] sm:$0xf]
        %v4619 = vld [vmem:[%s4607 + $0x2c] sm:$0xf]
        %v4620 = vld [vmem:[%s4607 + $0x30] sm:$0xf]
        %v4621 = vld [vmem:[%s4607 + $0x34] sm:$0xf]
        %v4622 = vld [vmem:[%s4607 + $0x38] sm:$0xf]
        %v4623 = vld [vmem:[%s4607 + $0x3c] sm:$0xf]
        %v4624 = vld [vmem:[%s4607 + $0x40] sm:$0xf]
        %v4625 = vld [vmem:[%s4607 + $0x44] sm:$0xf]
        %v4626 = vld [vmem:[%s4607 + $0x48] sm:$0xf]
        %v4627 = vld [vmem:[%s4607 + $0x4c] sm:$0xf]
        %v4628 = vld [vmem:[%s4607 + $0x50] sm:$0xf]
        %v4629 = vld [vmem:[%s4607 + $0x54] sm:$0xf]
        %v4630 = vld [vmem:[%s4607 + $0x58] sm:$0xf]
        %v4631 = vld [vmem:[%s4607 + $0x5c] sm:$0xf]
        %v4632 = vld [vmem:[%s4607 + $0x60] sm:$0xf]
        %v4633 = vld [vmem:[%s4607 + $0x64] sm:$0xf]
        %v4634 = vld [vmem:[%s4607 + $0x68] sm:$0xf]
        %v4635 = vld [vmem:[%s4607 + $0x6c] sm:$0xf]
        %v4636 = vld [vmem:[%s4607 + $0x70] sm:$0xf]
        %v4637 = vld [vmem:[%s4607 + $0x74] sm:$0xf]
        %v4638 = vld [vmem:[%s4607 + $0x78] sm:$0xf]
        %v4639 = vld [vmem:[%s4607 + $0x7c] sm:$0xf]
        %v4672 = vunpack.c.l.b16 %v4608
        %v4673 = vunpack.c.l.b16 %v4609
        %v4674 = vunpack.c.l.b16 %v4610
        %v4675 = vunpack.c.l.b16 %v4611
        %v4676 = vunpack.c.l.b16 %v4612
        %v4677 = vunpack.c.l.b16 %v4613
        %v4678 = vunpack.c.l.b16 %v4614
        %v4679 = vunpack.c.l.b16 %v4615
        %v4680 = vunpack.c.l.b16 %v4616
        %v4681 = vunpack.c.l.b16 %v4617
        %v4682 = vunpack.c.l.b16 %v4618
        %v4683 = vunpack.c.l.b16 %v4619
        %v4684 = vunpack.c.l.b16 %v4620
        %v4685 = vunpack.c.l.b16 %v4621
        %v4686 = vunpack.c.l.b16 %v4622
        %v4687 = vunpack.c.l.b16 %v4623
        %v4688 = vunpack.c.l.b16 %v4624
        %v4689 = vunpack.c.l.b16 %v4625
        %v4690 = vunpack.c.l.b16 %v4626
        %v4691 = vunpack.c.l.b16 %v4627
        %v4692 = vunpack.c.l.b16 %v4628
        %v4693 = vunpack.c.l.b16 %v4629
        %v4694 = vunpack.c.l.b16 %v4630
        %v4695 = vunpack.c.l.b16 %v4631
        %v4696 = vunpack.c.l.b16 %v4632
        %v4697 = vunpack.c.l.b16 %v4633
        %v4698 = vunpack.c.l.b16 %v4634
        %v4699 = vunpack.c.l.b16 %v4635
        %v4700 = vunpack.c.l.b16 %v4636
        %v4701 = vunpack.c.l.b16 %v4637
        %v4702 = vunpack.c.l.b16 %v4638
        %v4703 = vunpack.c.l.b16 %v4639
        %v4704 = vpack.c.b16 %v4673, %v4672
        %v4705 = vpack.c.b16 %v4675, %v4674
        %v4706 = vpack.c.b16 %v4677, %v4676
        %v4707 = vpack.c.b16 %v4679, %v4678
        %v4708 = vpack.c.b16 %v4681, %v4680
        %v4709 = vpack.c.b16 %v4683, %v4682
        %v4710 = vpack.c.b16 %v4685, %v4684
        %v4711 = vpack.c.b16 %v4687, %v4686
        %v4712 = vpack.c.b16 %v4689, %v4688
        %v4713 = vpack.c.b16 %v4691, %v4690
        %v4714 = vpack.c.b16 %v4693, %v4692
        %v4715 = vpack.c.b16 %v4695, %v4694
        %v4716 = vpack.c.b16 %v4697, %v4696
        %v4717 = vpack.c.b16 %v4699, %v4698
        %v4718 = vpack.c.b16 %v4701, %v4700
        %v4719 = vpack.c.b16 %v4703, %v4702
        %4736 = vmatprep.subr.bf16.mxu0 0
        %4737 = vmatpush1.bf16.msra.mxu0 %v4711
        %4738 = vmatprep.subr.bf16.mxu0 0
        %4739 = vmatpush1.bf16.msra.mxu0 %v4710
        %4740 = vmatprep.subr.bf16.mxu0 0
        %4741 = vmatpush1.bf16.msra.mxu0 %v4709
        %4742 = vmatprep.subr.bf16.mxu0 0
        %4743 = vmatpush1.bf16.msra.mxu0 %v4708
        %4744 = vmatprep.subr.bf16.mxu0 0
        %4745 = vmatpush1.bf16.msra.mxu0 %v4707
        %4746 = vmatprep.subr.bf16.mxu0 0
        %4747 = vmatpush1.bf16.msra.mxu0 %v4706
        %4748 = vmatprep.subr.bf16.mxu0 0
        %4749 = vmatpush1.bf16.msra.mxu0 %v4705
        %4750 = vmatprep.subr.bf16.mxu0 0
        %4751 = vmatpush1.bf16.msra.mxu0 %v4704
        %4752 = vmatprep.subr.bf16.mxu0 0
        %4753 = vmatpush2.bf16.msra.mxu0 %v4719
        %4754 = vmatprep.subr.bf16.mxu0 0
        %4755 = vmatpush2.bf16.msra.mxu0 %v4718
        %4756 = vmatprep.subr.bf16.mxu0 0
        %4757 = vmatpush2.bf16.msra.mxu0 %v4717
        %4758 = vmatprep.subr.bf16.mxu0 0
        %4759 = vmatpush2.bf16.msra.mxu0 %v4716
        %4760 = vmatprep.subr.bf16.mxu0 0
        %4761 = vmatpush2.bf16.msra.mxu0 %v4715
        %4762 = vmatprep.subr.bf16.mxu0 0
        %4763 = vmatpush2.bf16.msra.mxu0 %v4714
        %4764 = vmatprep.subr.bf16.mxu0 0
        %4765 = vmatpush2.bf16.msra.mxu0 %v4713
        %4766 = vmatprep.subr.bf16.mxu0 0
        %4767 = vmatpush2.bf16.msra.mxu0 %v4712
        %4768 = vmatprep.mubr.bf16.mxu0 %v4606
        %4769 = vmatmul.mubr.bf16.gmra.mxu0 %v4605
        %v4770 = vpop.f32.mrf.mxu0
        %v4771 = vadd.f32 0.0, %v4770
        %v4772 = vpop.f32.mrf.mxu0
        %v4773 = vpop.f32.mrf.mxu0
        %v4774 = vadd.f32 0.0, %v4773
        %v4775 = vpop.f32.mrf.mxu0
        %4776 = vdwg.mxu0
        %v4809 = vunpack.c.l.b16 %v4573
        %v4810 = vunpack.c.l.b16 %v4574
        %v4811 = vunpack.c.l.b16 %v4575
        %v4812 = vunpack.c.l.b16 %v4576
        %v4813 = vunpack.c.l.b16 %v4577
        %v4814 = vunpack.c.l.b16 %v4578
        %v4815 = vunpack.c.l.b16 %v4579
        %v4816 = vunpack.c.l.b16 %v4580
        %v4817 = vunpack.c.l.b16 %v4581
        %v4818 = vunpack.c.l.b16 %v4582
        %v4819 = vunpack.c.l.b16 %v4583
        %v4820 = vunpack.c.l.b16 %v4584
        %v4821 = vunpack.c.l.b16 %v4585
        %v4822 = vunpack.c.l.b16 %v4586
        %v4823 = vunpack.c.l.b16 %v4587
        %v4824 = vunpack.c.l.b16 %v4588
        %v4825 = vunpack.c.l.b16 %v4589
        %v4826 = vunpack.c.l.b16 %v4590
        %v4827 = vunpack.c.l.b16 %v4591
        %v4828 = vunpack.c.l.b16 %v4592
        %v4829 = vunpack.c.l.b16 %v4593
        %v4830 = vunpack.c.l.b16 %v4594
        %v4831 = vunpack.c.l.b16 %v4595
        %v4832 = vunpack.c.l.b16 %v4596
        %v4833 = vunpack.c.l.b16 %v4597
        %v4834 = vunpack.c.l.b16 %v4598
        %v4835 = vunpack.c.l.b16 %v4599
        %v4836 = vunpack.c.l.b16 %v4600
        %v4837 = vunpack.c.l.b16 %v4601
        %v4838 = vunpack.c.l.b16 %v4602
        %v4839 = vunpack.c.l.b16 %v4603
        %v4840 = vunpack.c.l.b16 %v4604
        %v4841 = vpack.c.b16 %v4810, %v4809
        %v4842 = vpack.c.b16 %v4812, %v4811
        %v4843 = vpack.c.b16 %v4814, %v4813
        %v4844 = vpack.c.b16 %v4816, %v4815
        %v4845 = vpack.c.b16 %v4818, %v4817
        %v4846 = vpack.c.b16 %v4820, %v4819
        %v4847 = vpack.c.b16 %v4822, %v4821
        %v4848 = vpack.c.b16 %v4824, %v4823
        %v4849 = vpack.c.b16 %v4826, %v4825
        %v4850 = vpack.c.b16 %v4828, %v4827
        %v4851 = vpack.c.b16 %v4830, %v4829
        %v4852 = vpack.c.b16 %v4832, %v4831
        %v4853 = vpack.c.b16 %v4834, %v4833
        %v4854 = vpack.c.b16 %v4836, %v4835
        %v4855 = vpack.c.b16 %v4838, %v4837
        %v4856 = vpack.c.b16 %v4840, %v4839
        %4873 = vmatprep.subr.bf16.mxu0 0
        %4874 = vmatpush1.bf16.msra.mxu0 %v4848
        %4875 = vmatprep.subr.bf16.mxu0 0
        %4876 = vmatpush1.bf16.msra.mxu0 %v4847
        %4877 = vmatprep.subr.bf16.mxu0 0
        %4878 = vmatpush1.bf16.msra.mxu0 %v4846
        %4879 = vmatprep.subr.bf16.mxu0 0
        %4880 = vmatpush1.bf16.msra.mxu0 %v4845
        %4881 = vmatprep.subr.bf16.mxu0 0
        %4882 = vmatpush1.bf16.msra.mxu0 %v4844
        %4883 = vmatprep.subr.bf16.mxu0 0
        %4884 = vmatpush1.bf16.msra.mxu0 %v4843
        %4885 = vmatprep.subr.bf16.mxu0 0
        %4886 = vmatpush1.bf16.msra.mxu0 %v4842
        %4887 = vmatprep.subr.bf16.mxu0 0
        %4888 = vmatpush1.bf16.msra.mxu0 %v4841
        %4889 = vmatprep.subr.bf16.mxu0 0
        %4890 = vmatpush2.bf16.msra.mxu0 %v4856
        %4891 = vmatprep.subr.bf16.mxu0 0
        %4892 = vmatpush2.bf16.msra.mxu0 %v4855
        %4893 = vmatprep.subr.bf16.mxu0 0
        %4894 = vmatpush2.bf16.msra.mxu0 %v4854
        %4895 = vmatprep.subr.bf16.mxu0 0
        %4896 = vmatpush2.bf16.msra.mxu0 %v4853
        %4897 = vmatprep.subr.bf16.mxu0 0
        %4898 = vmatpush2.bf16.msra.mxu0 %v4852
        %4899 = vmatprep.subr.bf16.mxu0 0
        %4900 = vmatpush2.bf16.msra.mxu0 %v4851
        %4901 = vmatprep.subr.bf16.mxu0 0
        %4902 = vmatpush2.bf16.msra.mxu0 %v4850
        %4903 = vmatprep.subr.bf16.mxu0 0
        %4904 = vmatpush2.bf16.msra.mxu0 %v4849
        %4905 = vmatprep.mubr.bf16.mxu0 %v4571
        %4906 = vmatmul.mubr.bf16.gmra.mxu0 %v4570
        %v4907 = vpop.f32.mrf.mxu0
        %v4908 = vadd.f32 %v4771, %v4907
        %v4909 = vpop.f32.mrf.mxu0
        %v4910 = vpop.f32.mrf.mxu0
        %v4911 = vadd.f32 %v4774, %v4910
        %v4912 = vpop.f32.mrf.mxu0
        %4913 = vdwg.mxu0
        %s4914 = scalar_lea.vmem %s13, 1
        %v4915 = vld [vmem:[%s4914] sm:$0x1]
        %v4917 = vlaneseq
        %v4918 = vshrl.u32 %v4917, 7
        %v4919 = vsub.s32 0, %v4918
        %v4920 = vrot.slane %v4915, %v4919
        %v4922 = vadd.f32 %v4908, %v4920
        %v4923 = vadd.f32 %v4911, %v4920
        %v4924 = vpack.c.bf16 %v4487, %v4486
        %v4925 = vpack.c.bf16 %v4499, %v4498
        %v4926 = vpack.c.bf16 %v4513, %v4512
        %v4927 = vpack.c.bf16 %v4527, %v4526
        %s4928 = scalar_lea.vmem [#allocation16], 256
        %v4929 = vld [vmem:[%s4928] sm:$0xf]
        %v4930 = vld [vmem:[%s4928 + $0x4] sm:$0xf]
        %v4931 = vld [vmem:[%s4928 + $0x8] sm:$0xf]
        %v4932 = vld [vmem:[%s4928 + $0xc] sm:$0xf]
        %v4933 = vld [vmem:[%s4928 + $0x10] sm:$0xf]
        %v4934 = vld [vmem:[%s4928 + $0x14] sm:$0xf]
        %v4935 = vld [vmem:[%s4928 + $0x18] sm:$0xf]
        %v4936 = vld [vmem:[%s4928 + $0x1c] sm:$0xf]
        %v4937 = vld [vmem:[%s4928 + $0x20] sm:$0xf]
        %v4938 = vld [vmem:[%s4928 + $0x24] sm:$0xf]
        %v4939 = vld [vmem:[%s4928 + $0x28] sm:$0xf]
        %v4940 = vld [vmem:[%s4928 + $0x2c] sm:$0xf]
        %v4941 = vld [vmem:[%s4928 + $0x30] sm:$0xf]
        %v4942 = vld [vmem:[%s4928 + $0x34] sm:$0xf]
        %v4943 = vld [vmem:[%s4928 + $0x38] sm:$0xf]
        %v4944 = vld [vmem:[%s4928 + $0x3c] sm:$0xf]
        %v4945 = vld [vmem:[%s4928 + $0x40] sm:$0xf]
        %v4946 = vld [vmem:[%s4928 + $0x44] sm:$0xf]
        %v4947 = vld [vmem:[%s4928 + $0x48] sm:$0xf]
        %v4948 = vld [vmem:[%s4928 + $0x4c] sm:$0xf]
        %v4949 = vld [vmem:[%s4928 + $0x50] sm:$0xf]
        %v4950 = vld [vmem:[%s4928 + $0x54] sm:$0xf]
        %v4951 = vld [vmem:[%s4928 + $0x58] sm:$0xf]
        %v4952 = vld [vmem:[%s4928 + $0x5c] sm:$0xf]
        %v4953 = vld [vmem:[%s4928 + $0x60] sm:$0xf]
        %v4954 = vld [vmem:[%s4928 + $0x64] sm:$0xf]
        %v4955 = vld [vmem:[%s4928 + $0x68] sm:$0xf]
        %v4956 = vld [vmem:[%s4928 + $0x6c] sm:$0xf]
        %v4957 = vld [vmem:[%s4928 + $0x70] sm:$0xf]
        %v4958 = vld [vmem:[%s4928 + $0x74] sm:$0xf]
        %v4959 = vld [vmem:[%s4928 + $0x78] sm:$0xf]
        %v4960 = vld [vmem:[%s4928 + $0x7c] sm:$0xf]
        %v4961 = vld [vmem:[%s4928 + $0x80] sm:$0xf]
        %v4962 = vld [vmem:[%s4928 + $0x84] sm:$0xf]
        %v4963 = vld [vmem:[%s4928 + $0x88] sm:$0xf]
        %v4964 = vld [vmem:[%s4928 + $0x8c] sm:$0xf]
        %v4965 = vld [vmem:[%s4928 + $0x90] sm:$0xf]
        %v4966 = vld [vmem:[%s4928 + $0x94] sm:$0xf]
        %v4967 = vld [vmem:[%s4928 + $0x98] sm:$0xf]
        %v4968 = vld [vmem:[%s4928 + $0x9c] sm:$0xf]
        %v4969 = vld [vmem:[%s4928 + $0xa0] sm:$0xf]
        %v4970 = vld [vmem:[%s4928 + $0xa4] sm:$0xf]
        %v4971 = vld [vmem:[%s4928 + $0xa8] sm:$0xf]
        %v4972 = vld [vmem:[%s4928 + $0xac] sm:$0xf]
        %v4973 = vld [vmem:[%s4928 + $0xb0] sm:$0xf]
        %v4974 = vld [vmem:[%s4928 + $0xb4] sm:$0xf]
        %v4975 = vld [vmem:[%s4928 + $0xb8] sm:$0xf]
        %v4976 = vld [vmem:[%s4928 + $0xbc] sm:$0xf]
        %v4977 = vld [vmem:[%s4928 + $0xc0] sm:$0xf]
        %v4978 = vld [vmem:[%s4928 + $0xc4] sm:$0xf]
        %v4979 = vld [vmem:[%s4928 + $0xc8] sm:$0xf]
        %v4980 = vld [vmem:[%s4928 + $0xcc] sm:$0xf]
        %v4981 = vld [vmem:[%s4928 + $0xd0] sm:$0xf]
        %v4982 = vld [vmem:[%s4928 + $0xd4] sm:$0xf]
        %v4983 = vld [vmem:[%s4928 + $0xd8] sm:$0xf]
        %v4984 = vld [vmem:[%s4928 + $0xdc] sm:$0xf]
        %v4985 = vld [vmem:[%s4928 + $0xe0] sm:$0xf]
        %v4986 = vld [vmem:[%s4928 + $0xe4] sm:$0xf]
        %v4987 = vld [vmem:[%s4928 + $0xe8] sm:$0xf]
        %v4988 = vld [vmem:[%s4928 + $0xec] sm:$0xf]
        %v4989 = vld [vmem:[%s4928 + $0xf0] sm:$0xf]
        %v4990 = vld [vmem:[%s4928 + $0xf4] sm:$0xf]
        %v4991 = vld [vmem:[%s4928 + $0xf8] sm:$0xf]
        %v4992 = vld [vmem:[%s4928 + $0xfc] sm:$0xf]
        %v5057 = vunpack.c.l.b16 %v4929
        %v5058 = vunpack.c.l.b16 %v4930
        %v5059 = vunpack.c.l.b16 %v4931
        %v5060 = vunpack.c.l.b16 %v4932
        %v5061 = vunpack.c.l.b16 %v4933
        %v5062 = vunpack.c.l.b16 %v4934
        %v5063 = vunpack.c.l.b16 %v4935
        %v5064 = vunpack.c.l.b16 %v4936
        %v5065 = vunpack.c.l.b16 %v4937
        %v5066 = vunpack.c.l.b16 %v4938
        %v5067 = vunpack.c.l.b16 %v4939
        %v5068 = vunpack.c.l.b16 %v4940
        %v5069 = vunpack.c.l.b16 %v4941
        %v5070 = vunpack.c.l.b16 %v4942
        %v5071 = vunpack.c.l.b16 %v4943
        %v5072 = vunpack.c.l.b16 %v4944
        %v5073 = vunpack.c.l.b16 %v4945
        %v5074 = vunpack.c.l.b16 %v4946
        %v5075 = vunpack.c.l.b16 %v4947
        %v5076 = vunpack.c.l.b16 %v4948
        %v5077 = vunpack.c.l.b16 %v4949
        %v5078 = vunpack.c.l.b16 %v4950
        %v5079 = vunpack.c.l.b16 %v4951
        %v5080 = vunpack.c.l.b16 %v4952
        %v5081 = vunpack.c.l.b16 %v4953
        %v5082 = vunpack.c.l.b16 %v4954
        %v5083 = vunpack.c.l.b16 %v4955
        %v5084 = vunpack.c.l.b16 %v4956
        %v5085 = vunpack.c.l.b16 %v4957
        %v5086 = vunpack.c.l.b16 %v4958
        %v5087 = vunpack.c.l.b16 %v4959
        %v5088 = vunpack.c.l.b16 %v4960
        %v5089 = vunpack.c.l.b16 %v4961
        %v5090 = vunpack.c.l.b16 %v4962
        %v5091 = vunpack.c.l.b16 %v4963
        %v5092 = vunpack.c.l.b16 %v4964
        %v5093 = vunpack.c.l.b16 %v4965
        %v5094 = vunpack.c.l.b16 %v4966
        %v5095 = vunpack.c.l.b16 %v4967
        %v5096 = vunpack.c.l.b16 %v4968
        %v5097 = vunpack.c.l.b16 %v4969
        %v5098 = vunpack.c.l.b16 %v4970
        %v5099 = vunpack.c.l.b16 %v4971
        %v5100 = vunpack.c.l.b16 %v4972
        %v5101 = vunpack.c.l.b16 %v4973
        %v5102 = vunpack.c.l.b16 %v4974
        %v5103 = vunpack.c.l.b16 %v4975
        %v5104 = vunpack.c.l.b16 %v4976
        %v5105 = vunpack.c.l.b16 %v4977
        %v5106 = vunpack.c.l.b16 %v4978
        %v5107 = vunpack.c.l.b16 %v4979
        %v5108 = vunpack.c.l.b16 %v4980
        %v5109 = vunpack.c.l.b16 %v4981
        %v5110 = vunpack.c.l.b16 %v4982
        %v5111 = vunpack.c.l.b16 %v4983
        %v5112 = vunpack.c.l.b16 %v4984
        %v5113 = vunpack.c.l.b16 %v4985
        %v5114 = vunpack.c.l.b16 %v4986
        %v5115 = vunpack.c.l.b16 %v4987
        %v5116 = vunpack.c.l.b16 %v4988
        %v5117 = vunpack.c.l.b16 %v4989
        %v5118 = vunpack.c.l.b16 %v4990
        %v5119 = vunpack.c.l.b16 %v4991
        %v5120 = vunpack.c.l.b16 %v4992
        %v5121 = vpack.c.b16 %v5058, %v5057
        %v5122 = vpack.c.b16 %v5060, %v5059
        %v5123 = vpack.c.b16 %v5062, %v5061
        %v5124 = vpack.c.b16 %v5064, %v5063
        %v5125 = vpack.c.b16 %v5066, %v5065
        %v5126 = vpack.c.b16 %v5068, %v5067
        %v5127 = vpack.c.b16 %v5070, %v5069
        %v5128 = vpack.c.b16 %v5072, %v5071
        %v5129 = vpack.c.b16 %v5074, %v5073
        %v5130 = vpack.c.b16 %v5076, %v5075
        %v5131 = vpack.c.b16 %v5078, %v5077
        %v5132 = vpack.c.b16 %v5080, %v5079
        %v5133 = vpack.c.b16 %v5082, %v5081
        %v5134 = vpack.c.b16 %v5084, %v5083
        %v5135 = vpack.c.b16 %v5086, %v5085
        %v5136 = vpack.c.b16 %v5088, %v5087
        %v5137 = vpack.c.b16 %v5090, %v5089
        %v5138 = vpack.c.b16 %v5092, %v5091
        %v5139 = vpack.c.b16 %v5094, %v5093
        %v5140 = vpack.c.b16 %v5096, %v5095
        %v5141 = vpack.c.b16 %v5098, %v5097
        %v5142 = vpack.c.b16 %v5100, %v5099
        %v5143 = vpack.c.b16 %v5102, %v5101
        %v5144 = vpack.c.b16 %v5104, %v5103
        %v5145 = vpack.c.b16 %v5106, %v5105
        %v5146 = vpack.c.b16 %v5108, %v5107
        %v5147 = vpack.c.b16 %v5110, %v5109
        %v5148 = vpack.c.b16 %v5112, %v5111
        %v5149 = vpack.c.b16 %v5114, %v5113
        %v5150 = vpack.c.b16 %v5116, %v5115
        %v5151 = vpack.c.b16 %v5118, %v5117
        %v5152 = vpack.c.b16 %v5120, %v5119
        %5185 = vmatprep.subr.bf16.mxu0 0
        %5186 = vmatpush1.bf16.msra.mxu0 %v5128
        %5187 = vmatprep.subr.bf16.mxu0 0
        %5188 = vmatpush1.bf16.msra.mxu0 %v5127
        %5189 = vmatprep.subr.bf16.mxu0 0
        %5190 = vmatpush1.bf16.msra.mxu0 %v5126
        %5191 = vmatprep.subr.bf16.mxu0 0
        %5192 = vmatpush1.bf16.msra.mxu0 %v5125
        %5193 = vmatprep.subr.bf16.mxu0 0
        %5194 = vmatpush1.bf16.msra.mxu0 %v5124
        %5195 = vmatprep.subr.bf16.mxu0 0
        %5196 = vmatpush1.bf16.msra.mxu0 %v5123
        %5197 = vmatprep.subr.bf16.mxu0 0
        %5198 = vmatpush1.bf16.msra.mxu0 %v5122
        %5199 = vmatprep.subr.bf16.mxu0 0
        %5200 = vmatpush1.bf16.msra.mxu0 %v5121
        %5201 = vmatprep.subr.bf16.mxu0 0
        %5202 = vmatpush2.bf16.msra.mxu0 %v5136
        %5203 = vmatprep.subr.bf16.mxu0 0
        %5204 = vmatpush2.bf16.msra.mxu0 %v5135
        %5205 = vmatprep.subr.bf16.mxu0 0
        %5206 = vmatpush2.bf16.msra.mxu0 %v5134
        %5207 = vmatprep.subr.bf16.mxu0 0
        %5208 = vmatpush2.bf16.msra.mxu0 %v5133
        %5209 = vmatprep.subr.bf16.mxu0 0
        %5210 = vmatpush2.bf16.msra.mxu0 %v5132
        %5211 = vmatprep.subr.bf16.mxu0 0
        %5212 = vmatpush2.bf16.msra.mxu0 %v5131
        %5213 = vmatprep.subr.bf16.mxu0 0
        %5214 = vmatpush2.bf16.msra.mxu0 %v5130
        %5215 = vmatprep.subr.bf16.mxu0 0
        %5216 = vmatpush2.bf16.msra.mxu0 %v5129
        %5217 = vmatprep.mubr.bf16.mxu0 %v4925
        %5218 = vmatmul.mubr.bf16.gmra.mxu0 %v4924
        %v5219 = vpop.f32.mrf.mxu0
        %v5220 = vadd.f32 0.0, %v5219
        %v5221 = vpop.f32.mrf.mxu0
        %v5222 = vpop.f32.mrf.mxu0
        %v5223 = vadd.f32 0.0, %v5222
        %v5224 = vpop.f32.mrf.mxu0
        %5225 = vdwg.mxu0
        %5226 = vmatprep.subr.bf16.mxu0 0
        %5227 = vmatpush1.bf16.msra.mxu0 %v5144
        %5228 = vmatprep.subr.bf16.mxu0 0
        %5229 = vmatpush1.bf16.msra.mxu0 %v5143
        %5230 = vmatprep.subr.bf16.mxu0 0
        %5231 = vmatpush1.bf16.msra.mxu0 %v5142
        %5232 = vmatprep.subr.bf16.mxu0 0
        %5233 = vmatpush1.bf16.msra.mxu0 %v5141
        %5234 = vmatprep.subr.bf16.mxu0 0
        %5235 = vmatpush1.bf16.msra.mxu0 %v5140
        %5236 = vmatprep.subr.bf16.mxu0 0
        %5237 = vmatpush1.bf16.msra.mxu0 %v5139
        %5238 = vmatprep.subr.bf16.mxu0 0
        %5239 = vmatpush1.bf16.msra.mxu0 %v5138
        %5240 = vmatprep.subr.bf16.mxu0 0
        %5241 = vmatpush1.bf16.msra.mxu0 %v5137
        %5242 = vmatprep.subr.bf16.mxu0 0
        %5243 = vmatpush2.bf16.msra.mxu0 %v5152
        %5244 = vmatprep.subr.bf16.mxu0 0
        %5245 = vmatpush2.bf16.msra.mxu0 %v5151
        %5246 = vmatprep.subr.bf16.mxu0 0
        %5247 = vmatpush2.bf16.msra.mxu0 %v5150
        %5248 = vmatprep.subr.bf16.mxu0 0
        %5249 = vmatpush2.bf16.msra.mxu0 %v5149
        %5250 = vmatprep.subr.bf16.mxu0 0
        %5251 = vmatpush2.bf16.msra.mxu0 %v5148
        %5252 = vmatprep.subr.bf16.mxu0 0
        %5253 = vmatpush2.bf16.msra.mxu0 %v5147
        %5254 = vmatprep.subr.bf16.mxu0 0
        %5255 = vmatpush2.bf16.msra.mxu0 %v5146
        %5256 = vmatprep.subr.bf16.mxu0 0
        %5257 = vmatpush2.bf16.msra.mxu0 %v5145
        %5258 = vmatprep.mubr.bf16.mxu0 %v4927
        %5259 = vmatmul.mubr.bf16.gmra.mxu0 %v4926
        %v5260 = vpop.f32.mrf.mxu0
        %v5261 = vadd.f32 %v5220, %v5260
        %v5262 = vpop.f32.mrf.mxu0
        %v5263 = vpop.f32.mrf.mxu0
        %v5264 = vadd.f32 %v5223, %v5263
        %v5265 = vpop.f32.mrf.mxu0
        %5266 = vdwg.mxu0
        %v5267 = vadd.f32 %v4922, %v5261
        %v5268 = vadd.f32 %v4923, %v5264
        %s5269 = scalar_lea.vmem %s14, 1
        %v5270 = vld [vmem:[%s5269] sm:$0x1]
        %v5272 = vlaneseq
        %v5273 = vshrl.u32 %v5272, 7
        %v5274 = vsub.s32 0, %v5273
        %v5275 = vrot.slane %v5270, %v5274
        %v5277 = vadd.f32 %v5267, %v5275
        %v5278 = vadd.f32 %v5268, %v5275
        %vm5279 = vcmp.gt.f32.partialorder %v5277, 0.0
        %vm5280 = vcmp.gt.f32.partialorder %v5278, 0.0
        %v5281 = vmin.f32 %v5277, 0.0
        %v5282 = vmin.f32 %v5278, 0.0
        %v5283 = vmul.f32 %v5281, 1.442695
        %v5284 = vpow.pop %v5283
        %v5285 = vmul.f32 %v5282, 1.442695
        %v5286 = vpow.pop %v5285
        %v5287 = vsub.f32 %v5284, 1.0
        %v5288 = vsub.f32 %v5286, 1.0
        %v5289 = vsel %vm5279, %v5277, %v5287
        %v5290 = vsel %vm5280, %v5278, %v5288
        %v5291 = vsub.f32 0.0, %v5277
        %v5292 = vsub.f32 0.0, %v5278
        %vm5293 = vcmp.gt.f32.partialorder %v5291, 0.0
        %vm5294 = vcmp.gt.f32.partialorder %v5292, 0.0
        %v5295 = vmin.f32 %v5291, 0.0
        %v5296 = vmin.f32 %v5292, 0.0
        %v5297 = vmul.f32 %v5295, 1.442695
        %v5298 = vpow.pop %v5297
        %v5299 = vmul.f32 %v5296, 1.442695
        %v5300 = vpow.pop %v5299
        %v5301 = vsub.f32 %v5298, 1.0
        %v5302 = vsub.f32 %v5300, 1.0
        %v5303 = vsel %vm5293, %v5291, %v5301
        %v5304 = vsel %vm5294, %v5292, %v5302
        %v5309 = vrot.slane %v5289, 7
        %v5310 = vrot.slane %v5303, 7
        %v5311 = vrot.slane %v5290, 7
        %v5312 = vsel %vm895, %v5309, %v5311
        %v5313 = vrot.slane %v5304, 7
        %v5314 = vsel %vm895, %v5310, %v5313
        %v5319 = vsel %vm895, 0.0, %v5309
        %v5320 = vsel %vm895, 0.0, %v5310
        %v5321 = vpack.c.bf16 %v5312, %v5319
        %v5322 = vpack.c.bf16 %v5314, %v5320
        %s5323 = scalar_lea.vmem [#allocation17], 512
        %v5324 = vld [vmem:[%s5323] sm:$0xff]
        %v5325 = vld [vmem:[%s5323 + $0x8] sm:$0xff]
        %v5326 = vld [vmem:[%s5323 + $0x10] sm:$0xff]
        %v5327 = vld [vmem:[%s5323 + $0x18] sm:$0xff]
        %v5328 = vld [vmem:[%s5323 + $0x20] sm:$0xff]
        %v5329 = vld [vmem:[%s5323 + $0x28] sm:$0xff]
        %v5330 = vld [vmem:[%s5323 + $0x30] sm:$0xff]
        %v5331 = vld [vmem:[%s5323 + $0x38] sm:$0xff]
        %v5332 = vld [vmem:[%s5323 + $0x40] sm:$0xff]
        %v5333 = vld [vmem:[%s5323 + $0x48] sm:$0xff]
        %v5334 = vld [vmem:[%s5323 + $0x50] sm:$0xff]
        %v5335 = vld [vmem:[%s5323 + $0x58] sm:$0xff]
        %v5336 = vld [vmem:[%s5323 + $0x60] sm:$0xff]
        %v5337 = vld [vmem:[%s5323 + $0x68] sm:$0xff]
        %v5338 = vld [vmem:[%s5323 + $0x70] sm:$0xff]
        %v5339 = vld [vmem:[%s5323 + $0x78] sm:$0xff]
        %v5340 = vld [vmem:[%s5323 + $0x80] sm:$0xff]
        %v5341 = vld [vmem:[%s5323 + $0x88] sm:$0xff]
        %v5342 = vld [vmem:[%s5323 + $0x90] sm:$0xff]
        %v5343 = vld [vmem:[%s5323 + $0x98] sm:$0xff]
        %v5344 = vld [vmem:[%s5323 + $0xa0] sm:$0xff]
        %v5345 = vld [vmem:[%s5323 + $0xa8] sm:$0xff]
        %v5346 = vld [vmem:[%s5323 + $0xb0] sm:$0xff]
        %v5347 = vld [vmem:[%s5323 + $0xb8] sm:$0xff]
        %v5348 = vld [vmem:[%s5323 + $0xc0] sm:$0xff]
        %v5349 = vld [vmem:[%s5323 + $0xc8] sm:$0xff]
        %v5350 = vld [vmem:[%s5323 + $0xd0] sm:$0xff]
        %v5351 = vld [vmem:[%s5323 + $0xd8] sm:$0xff]
        %v5352 = vld [vmem:[%s5323 + $0xe0] sm:$0xff]
        %v5353 = vld [vmem:[%s5323 + $0xe8] sm:$0xff]
        %v5354 = vld [vmem:[%s5323 + $0xf0] sm:$0xff]
        %v5355 = vld [vmem:[%s5323 + $0xf8] sm:$0xff]
        %v5356 = vpack.c.bf16 %v5290, %v5289
        %v5357 = vpack.c.bf16 %v5304, %v5303
        %s5358 = scalar_lea.vmem [#allocation17], 768
        %v5359 = vld [vmem:[%s5358] sm:$0xff]
        %v5360 = vld [vmem:[%s5358 + $0x8] sm:$0xff]
        %v5361 = vld [vmem:[%s5358 + $0x10] sm:$0xff]
        %v5362 = vld [vmem:[%s5358 + $0x18] sm:$0xff]
        %v5363 = vld [vmem:[%s5358 + $0x20] sm:$0xff]
        %v5364 = vld [vmem:[%s5358 + $0x28] sm:$0xff]
        %v5365 = vld [vmem:[%s5358 + $0x30] sm:$0xff]
        %v5366 = vld [vmem:[%s5358 + $0x38] sm:$0xff]
        %v5367 = vld [vmem:[%s5358 + $0x40] sm:$0xff]
        %v5368 = vld [vmem:[%s5358 + $0x48] sm:$0xff]
        %v5369 = vld [vmem:[%s5358 + $0x50] sm:$0xff]
        %v5370 = vld [vmem:[%s5358 + $0x58] sm:$0xff]
        %v5371 = vld [vmem:[%s5358 + $0x60] sm:$0xff]
        %v5372 = vld [vmem:[%s5358 + $0x68] sm:$0xff]
        %v5373 = vld [vmem:[%s5358 + $0x70] sm:$0xff]
        %v5374 = vld [vmem:[%s5358 + $0x78] sm:$0xff]
        %v5375 = vld [vmem:[%s5358 + $0x80] sm:$0xff]
        %v5376 = vld [vmem:[%s5358 + $0x88] sm:$0xff]
        %v5377 = vld [vmem:[%s5358 + $0x90] sm:$0xff]
        %v5378 = vld [vmem:[%s5358 + $0x98] sm:$0xff]
        %v5379 = vld [vmem:[%s5358 + $0xa0] sm:$0xff]
        %v5380 = vld [vmem:[%s5358 + $0xa8] sm:$0xff]
        %v5381 = vld [vmem:[%s5358 + $0xb0] sm:$0xff]
        %v5382 = vld [vmem:[%s5358 + $0xb8] sm:$0xff]
        %v5383 = vld [vmem:[%s5358 + $0xc0] sm:$0xff]
        %v5384 = vld [vmem:[%s5358 + $0xc8] sm:$0xff]
        %v5385 = vld [vmem:[%s5358 + $0xd0] sm:$0xff]
        %v5386 = vld [vmem:[%s5358 + $0xd8] sm:$0xff]
        %v5387 = vld [vmem:[%s5358 + $0xe0] sm:$0xff]
        %v5388 = vld [vmem:[%s5358 + $0xe8] sm:$0xff]
        %v5389 = vld [vmem:[%s5358 + $0xf0] sm:$0xff]
        %v5390 = vld [vmem:[%s5358 + $0xf8] sm:$0xff]
        %v5423 = vunpack.c.l.b16 %v5359
        %v5424 = vunpack.c.h.b16 %v5359
        %v5425 = vunpack.c.l.b16 %v5360
        %v5426 = vunpack.c.h.b16 %v5360
        %v5427 = vunpack.c.l.b16 %v5361
        %v5428 = vunpack.c.h.b16 %v5361
        %v5429 = vunpack.c.l.b16 %v5362
        %v5430 = vunpack.c.h.b16 %v5362
        %v5431 = vunpack.c.l.b16 %v5363
        %v5432 = vunpack.c.h.b16 %v5363
        %v5433 = vunpack.c.l.b16 %v5364
        %v5434 = vunpack.c.h.b16 %v5364
        %v5435 = vunpack.c.l.b16 %v5365
        %v5436 = vunpack.c.h.b16 %v5365
        %v5437 = vunpack.c.l.b16 %v5366
        %v5438 = vunpack.c.h.b16 %v5366
        %v5439 = vunpack.c.l.b16 %v5367
        %v5440 = vunpack.c.h.b16 %v5367
        %v5441 = vunpack.c.l.b16 %v5368
        %v5442 = vunpack.c.h.b16 %v5368
        %v5443 = vunpack.c.l.b16 %v5369
        %v5444 = vunpack.c.h.b16 %v5369
        %v5445 = vunpack.c.l.b16 %v5370
        %v5446 = vunpack.c.h.b16 %v5370
        %v5447 = vunpack.c.l.b16 %v5371
        %v5448 = vunpack.c.h.b16 %v5371
        %v5449 = vunpack.c.l.b16 %v5372
        %v5450 = vunpack.c.h.b16 %v5372
        %v5451 = vunpack.c.l.b16 %v5373
        %v5452 = vunpack.c.h.b16 %v5373
        %v5453 = vunpack.c.l.b16 %v5374
        %v5454 = vunpack.c.h.b16 %v5374
        %v5455 = vunpack.c.l.b16 %v5375
        %v5456 = vunpack.c.h.b16 %v5375
        %v5457 = vunpack.c.l.b16 %v5376
        %v5458 = vunpack.c.h.b16 %v5376
        %v5459 = vunpack.c.l.b16 %v5377
        %v5460 = vunpack.c.h.b16 %v5377
        %v5461 = vunpack.c.l.b16 %v5378
        %v5462 = vunpack.c.h.b16 %v5378
        %v5463 = vunpack.c.l.b16 %v5379
        %v5464 = vunpack.c.h.b16 %v5379
        %v5465 = vunpack.c.l.b16 %v5380
        %v5466 = vunpack.c.h.b16 %v5380
        %v5467 = vunpack.c.l.b16 %v5381
        %v5468 = vunpack.c.h.b16 %v5381
        %v5469 = vunpack.c.l.b16 %v5382
        %v5470 = vunpack.c.h.b16 %v5382
        %v5471 = vunpack.c.l.b16 %v5383
        %v5472 = vunpack.c.h.b16 %v5383
        %v5473 = vunpack.c.l.b16 %v5384
        %v5474 = vunpack.c.h.b16 %v5384
        %v5475 = vunpack.c.l.b16 %v5385
        %v5476 = vunpack.c.h.b16 %v5385
        %v5477 = vunpack.c.l.b16 %v5386
        %v5478 = vunpack.c.h.b16 %v5386
        %v5479 = vunpack.c.l.b16 %v5387
        %v5480 = vunpack.c.h.b16 %v5387
        %v5481 = vunpack.c.l.b16 %v5388
        %v5482 = vunpack.c.h.b16 %v5388
        %v5483 = vunpack.c.l.b16 %v5389
        %v5484 = vunpack.c.h.b16 %v5389
        %v5485 = vunpack.c.l.b16 %v5390
        %v5486 = vunpack.c.h.b16 %v5390
        %v5487 = vpack.c.b16 %v5425, %v5423
        %v5488 = vpack.c.b16 %v5426, %v5424
        %v5489 = vpack.c.b16 %v5429, %v5427
        %v5490 = vpack.c.b16 %v5430, %v5428
        %v5491 = vpack.c.b16 %v5433, %v5431
        %v5492 = vpack.c.b16 %v5434, %v5432
        %v5493 = vpack.c.b16 %v5437, %v5435
        %v5494 = vpack.c.b16 %v5438, %v5436
        %v5495 = vpack.c.b16 %v5441, %v5439
        %v5496 = vpack.c.b16 %v5442, %v5440
        %v5497 = vpack.c.b16 %v5445, %v5443
        %v5498 = vpack.c.b16 %v5446, %v5444
        %v5499 = vpack.c.b16 %v5449, %v5447
        %v5500 = vpack.c.b16 %v5450, %v5448
        %v5501 = vpack.c.b16 %v5453, %v5451
        %v5502 = vpack.c.b16 %v5454, %v5452
        %v5503 = vpack.c.b16 %v5457, %v5455
        %v5504 = vpack.c.b16 %v5458, %v5456
        %v5505 = vpack.c.b16 %v5461, %v5459
        %v5506 = vpack.c.b16 %v5462, %v5460
        %v5507 = vpack.c.b16 %v5465, %v5463
        %v5508 = vpack.c.b16 %v5466, %v5464
        %v5509 = vpack.c.b16 %v5469, %v5467
        %v5510 = vpack.c.b16 %v5470, %v5468
        %v5511 = vpack.c.b16 %v5473, %v5471
        %v5512 = vpack.c.b16 %v5474, %v5472
        %v5513 = vpack.c.b16 %v5477, %v5475
        %v5514 = vpack.c.b16 %v5478, %v5476
        %v5515 = vpack.c.b16 %v5481, %v5479
        %v5516 = vpack.c.b16 %v5482, %v5480
        %v5517 = vpack.c.b16 %v5485, %v5483
        %v5518 = vpack.c.b16 %v5486, %v5484
        %5551 = vmatprep.subr.bf16.mxu0 %v5502
        %5552 = vmatpush1.bf16.msra.mxu0 %v5501
        %5553 = vmatprep.subr.bf16.mxu0 %v5500
        %5554 = vmatpush1.bf16.msra.mxu0 %v5499
        %5555 = vmatprep.subr.bf16.mxu0 %v5498
        %5556 = vmatpush1.bf16.msra.mxu0 %v5497
        %5557 = vmatprep.subr.bf16.mxu0 %v5496
        %5558 = vmatpush1.bf16.msra.mxu0 %v5495
        %5559 = vmatprep.subr.bf16.mxu0 %v5494
        %5560 = vmatpush1.bf16.msra.mxu0 %v5493
        %5561 = vmatprep.subr.bf16.mxu0 %v5492
        %5562 = vmatpush1.bf16.msra.mxu0 %v5491
        %5563 = vmatprep.subr.bf16.mxu0 %v5490
        %5564 = vmatpush1.bf16.msra.mxu0 %v5489
        %5565 = vmatprep.subr.bf16.mxu0 %v5488
        %5566 = vmatpush1.bf16.msra.mxu0 %v5487
        %5567 = vmatprep.subr.bf16.mxu0 %v5518
        %5568 = vmatpush2.bf16.msra.mxu0 %v5517
        %5569 = vmatprep.subr.bf16.mxu0 %v5516
        %5570 = vmatpush2.bf16.msra.mxu0 %v5515
        %5571 = vmatprep.subr.bf16.mxu0 %v5514
        %5572 = vmatpush2.bf16.msra.mxu0 %v5513
        %5573 = vmatprep.subr.bf16.mxu0 %v5512
        %5574 = vmatpush2.bf16.msra.mxu0 %v5511
        %5575 = vmatprep.subr.bf16.mxu0 %v5510
        %5576 = vmatpush2.bf16.msra.mxu0 %v5509
        %5577 = vmatprep.subr.bf16.mxu0 %v5508
        %5578 = vmatpush2.bf16.msra.mxu0 %v5507
        %5579 = vmatprep.subr.bf16.mxu0 %v5506
        %5580 = vmatpush2.bf16.msra.mxu0 %v5505
        %5581 = vmatprep.subr.bf16.mxu0 %v5504
        %5582 = vmatpush2.bf16.msra.mxu0 %v5503
        %5583 = vmatprep.mubr.bf16.mxu0 %v5357
        %5584 = vmatmul.mubr.bf16.gmra.mxu0 %v5356
        %v5585 = vpop.f32.mrf.mxu0
        %v5586 = vadd.f32 0.0, %v5585
        %v5587 = vpop.f32.mrf.mxu0
        %v5588 = vadd.f32 0.0, %v5587
        %v5589 = vpop.f32.mrf.mxu0
        %v5590 = vadd.f32 0.0, %v5589
        %v5591 = vpop.f32.mrf.mxu0
        %v5592 = vadd.f32 0.0, %v5591
        %5593 = vdwg.mxu0
        %v5626 = vunpack.c.l.b16 %v5324
        %v5627 = vunpack.c.h.b16 %v5324
        %v5628 = vunpack.c.l.b16 %v5325
        %v5629 = vunpack.c.h.b16 %v5325
        %v5630 = vunpack.c.l.b16 %v5326
        %v5631 = vunpack.c.h.b16 %v5326
        %v5632 = vunpack.c.l.b16 %v5327
        %v5633 = vunpack.c.h.b16 %v5327
        %v5634 = vunpack.c.l.b16 %v5328
        %v5635 = vunpack.c.h.b16 %v5328
        %v5636 = vunpack.c.l.b16 %v5329
        %v5637 = vunpack.c.h.b16 %v5329
        %v5638 = vunpack.c.l.b16 %v5330
        %v5639 = vunpack.c.h.b16 %v5330
        %v5640 = vunpack.c.l.b16 %v5331
        %v5641 = vunpack.c.h.b16 %v5331
        %v5642 = vunpack.c.l.b16 %v5332
        %v5643 = vunpack.c.h.b16 %v5332
        %v5644 = vunpack.c.l.b16 %v5333
        %v5645 = vunpack.c.h.b16 %v5333
        %v5646 = vunpack.c.l.b16 %v5334
        %v5647 = vunpack.c.h.b16 %v5334
        %v5648 = vunpack.c.l.b16 %v5335
        %v5649 = vunpack.c.h.b16 %v5335
        %v5650 = vunpack.c.l.b16 %v5336
        %v5651 = vunpack.c.h.b16 %v5336
        %v5652 = vunpack.c.l.b16 %v5337
        %v5653 = vunpack.c.h.b16 %v5337
        %v5654 = vunpack.c.l.b16 %v5338
        %v5655 = vunpack.c.h.b16 %v5338
        %v5656 = vunpack.c.l.b16 %v5339
        %v5657 = vunpack.c.h.b16 %v5339
        %v5658 = vunpack.c.l.b16 %v5340
        %v5659 = vunpack.c.h.b16 %v5340
        %v5660 = vunpack.c.l.b16 %v5341
        %v5661 = vunpack.c.h.b16 %v5341
        %v5662 = vunpack.c.l.b16 %v5342
        %v5663 = vunpack.c.h.b16 %v5342
        %v5664 = vunpack.c.l.b16 %v5343
        %v5665 = vunpack.c.h.b16 %v5343
        %v5666 = vunpack.c.l.b16 %v5344
        %v5667 = vunpack.c.h.b16 %v5344
        %v5668 = vunpack.c.l.b16 %v5345
        %v5669 = vunpack.c.h.b16 %v5345
        %v5670 = vunpack.c.l.b16 %v5346
        %v5671 = vunpack.c.h.b16 %v5346
        %v5672 = vunpack.c.l.b16 %v5347
        %v5673 = vunpack.c.h.b16 %v5347
        %v5674 = vunpack.c.l.b16 %v5348
        %v5675 = vunpack.c.h.b16 %v5348
        %v5676 = vunpack.c.l.b16 %v5349
        %v5677 = vunpack.c.h.b16 %v5349
        %v5678 = vunpack.c.l.b16 %v5350
        %v5679 = vunpack.c.h.b16 %v5350
        %v5680 = vunpack.c.l.b16 %v5351
        %v5681 = vunpack.c.h.b16 %v5351
        %v5682 = vunpack.c.l.b16 %v5352
        %v5683 = vunpack.c.h.b16 %v5352
        %v5684 = vunpack.c.l.b16 %v5353
        %v5685 = vunpack.c.h.b16 %v5353
        %v5686 = vunpack.c.l.b16 %v5354
        %v5687 = vunpack.c.h.b16 %v5354
        %v5688 = vunpack.c.l.b16 %v5355
        %v5689 = vunpack.c.h.b16 %v5355
        %v5690 = vpack.c.b16 %v5628, %v5626
        %v5691 = vpack.c.b16 %v5629, %v5627
        %v5692 = vpack.c.b16 %v5632, %v5630
        %v5693 = vpack.c.b16 %v5633, %v5631
        %v5694 = vpack.c.b16 %v5636, %v5634
        %v5695 = vpack.c.b16 %v5637, %v5635
        %v5696 = vpack.c.b16 %v5640, %v5638
        %v5697 = vpack.c.b16 %v5641, %v5639
        %v5698 = vpack.c.b16 %v5644, %v5642
        %v5699 = vpack.c.b16 %v5645, %v5643
        %v5700 = vpack.c.b16 %v5648, %v5646
        %v5701 = vpack.c.b16 %v5649, %v5647
        %v5702 = vpack.c.b16 %v5652, %v5650
        %v5703 = vpack.c.b16 %v5653, %v5651
        %v5704 = vpack.c.b16 %v5656, %v5654
        %v5705 = vpack.c.b16 %v5657, %v5655
        %v5706 = vpack.c.b16 %v5660, %v5658
        %v5707 = vpack.c.b16 %v5661, %v5659
        %v5708 = vpack.c.b16 %v5664, %v5662
        %v5709 = vpack.c.b16 %v5665, %v5663
        %v5710 = vpack.c.b16 %v5668, %v5666
        %v5711 = vpack.c.b16 %v5669, %v5667
        %v5712 = vpack.c.b16 %v5672, %v5670
        %v5713 = vpack.c.b16 %v5673, %v5671
        %v5714 = vpack.c.b16 %v5676, %v5674
        %v5715 = vpack.c.b16 %v5677, %v5675
        %v5716 = vpack.c.b16 %v5680, %v5678
        %v5717 = vpack.c.b16 %v5681, %v5679
        %v5718 = vpack.c.b16 %v5684, %v5682
        %v5719 = vpack.c.b16 %v5685, %v5683
        %v5720 = vpack.c.b16 %v5688, %v5686
        %v5721 = vpack.c.b16 %v5689, %v5687
        %5754 = vmatprep.subr.bf16.mxu0 %v5705
        %5755 = vmatpush1.bf16.msra.mxu0 %v5704
        %5756 = vmatprep.subr.bf16.mxu0 %v5703
        %5757 = vmatpush1.bf16.msra.mxu0 %v5702
        %5758 = vmatprep.subr.bf16.mxu0 %v5701
        %5759 = vmatpush1.bf16.msra.mxu0 %v5700
        %5760 = vmatprep.subr.bf16.mxu0 %v5699
        %5761 = vmatpush1.bf16.msra.mxu0 %v5698
        %5762 = vmatprep.subr.bf16.mxu0 %v5697
        %5763 = vmatpush1.bf16.msra.mxu0 %v5696
        %5764 = vmatprep.subr.bf16.mxu0 %v5695
        %5765 = vmatpush1.bf16.msra.mxu0 %v5694
        %5766 = vmatprep.subr.bf16.mxu0 %v5693
        %5767 = vmatpush1.bf16.msra.mxu0 %v5692
        %5768 = vmatprep.subr.bf16.mxu0 %v5691
        %5769 = vmatpush1.bf16.msra.mxu0 %v5690
        %5770 = vmatprep.subr.bf16.mxu0 %v5721
        %5771 = vmatpush2.bf16.msra.mxu0 %v5720
        %5772 = vmatprep.subr.bf16.mxu0 %v5719
        %5773 = vmatpush2.bf16.msra.mxu0 %v5718
        %5774 = vmatprep.subr.bf16.mxu0 %v5717
        %5775 = vmatpush2.bf16.msra.mxu0 %v5716
        %5776 = vmatprep.subr.bf16.mxu0 %v5715
        %5777 = vmatpush2.bf16.msra.mxu0 %v5714
        %5778 = vmatprep.subr.bf16.mxu0 %v5713
        %5779 = vmatpush2.bf16.msra.mxu0 %v5712
        %5780 = vmatprep.subr.bf16.mxu0 %v5711
        %5781 = vmatpush2.bf16.msra.mxu0 %v5710
        %5782 = vmatprep.subr.bf16.mxu0 %v5709
        %5783 = vmatpush2.bf16.msra.mxu0 %v5708
        %5784 = vmatprep.subr.bf16.mxu0 %v5707
        %5785 = vmatpush2.bf16.msra.mxu0 %v5706
        %5786 = vmatprep.mubr.bf16.mxu0 %v5322
        %5787 = vmatmul.mubr.bf16.gmra.mxu0 %v5321
        %v5788 = vpop.f32.mrf.mxu0
        %v5789 = vadd.f32 %v5586, %v5788
        %v5790 = vpop.f32.mrf.mxu0
        %v5791 = vadd.f32 %v5588, %v5790
        %v5792 = vpop.f32.mrf.mxu0
        %v5793 = vadd.f32 %v5590, %v5792
        %v5794 = vpop.f32.mrf.mxu0
        %v5795 = vadd.f32 %v5592, %v5794
        %5796 = vdwg.mxu0
        %s5797 = scalar_lea.vmem %s15, 2
        %v5798 = vld [vmem:[%s5797] sm:$0x3]
        %v5800 = vlaneseq
        %v5801 = vshrl.u32 %v5800, 7
        %v5802 = vsub.s32 0, %v5801
        %v5803 = vrot.slane %v5798, %v5802
        %v5804 = vlaneseq
        %v5805 = vshrl.u32 %v5804, 7
        %v5806 = vsub.s32 1, %v5805
        %v5807 = vrot.slane %v5798, %v5806
        %v5810 = vadd.f32 %v5789, %v5803
        %v5811 = vadd.f32 %v5791, %v5807
        %v5812 = vadd.f32 %v5793, %v5803
        %v5813 = vadd.f32 %v5795, %v5807
        %v5814 = vxor.u32 %v5811, 2147483648
        %v5815 = vxor.u32 %v5813, 2147483648
        %v5816 = vmul.f32 %v5814, 1.442695
        %v5817 = vpow.pop %v5816
        %v5818 = vmul.f32 %v5815, 1.442695
        %v5819 = vpow.pop %v5818
        %v5820 = vadd.f32 %v5817, 1.0
        %v5821 = vadd.f32 %v5819, 1.0
        %v5822 = vrcp.pop %v5820
        %v5823 = vmul.f32 1.0, %v5822
        %v5824 = vrcp.pop %v5821
        %v5825 = vmul.f32 1.0, %v5824
        %v5826 = vmul.f32 %v5810, %v5823
        %v5827 = vmul.f32 %v5812, %v5825
        %v5828 = vadd.f32 %v3339, %v5826
        %v5829 = vadd.f32 %v3340, %v5827
        %5830 = vst [vmem:[%s824] sm:$0xff] %v4471
        %5831 = vst [vmem:[%s824 + $0x8] sm:$0xff] %v4472
        %5832 = vst [vmem:[%s831] sm:$0xff] %v5828
        %5833 = vst [vmem:[%s831 + $0x8] sm:$0xff] %v5829
        %s5834 = sand.u32 %s411, 1
        %s5835 = scalar_lea.sflag [#allocation4], %s5834
        %s5836 = sand.u32 %s411, 1
        %s5837 = smul.addr %s5836, 16
        %s5838 = scalar_lea.vmem [#allocation19], %s5837
        %s5839 = sand.u32 %s437, 1
        %s5840 = scalar_lea.sflag [#allocation21], %s5839
        %s5841 = sand.u32 %s437, 1
        %s5842 = smul.addr %s5841, 16
        %s5843 = scalar_lea.vmem [#allocation20], %s5842
        // Predicated region
        $region125: #{tpu_custom_call.1} parent=83 // pred_check
          %p5844 = pneg %p421
        $region126: #{tpu_custom_call.1} parent=83 // pred_check_branch
          %5846 = sbr.rel (%p5844) target = $region128
        $region127: #{tpu_custom_call.1} parent=83 // pred_region
          %s5848 = ssub.s32 256, 256
          %5849 = vsyncadd %s5835, %s5848
          %s5850 = smul.addr %s47, 2
          %s5851 = smul.addr %s5850, 128
          %s5852 = scalar_lea.hbm %s16, %s5851
          %s5853 = sshll.u32 %s5838, 4
          %s5854 = int_to_ptr.vmem [resolvable:$true] %s5853
          %5859 = dma.vmem_to_hbm [thread:$0]  %s5854, 256, %s5852, %s5835, 128, 128, 8
        $region128: #{tpu_custom_call.1} parent=83 // pred_fallthru
          _
        // Predicated region
        $region129: #{tpu_custom_call.1} parent=83 // pred_check
          %p5860 = pneg %p447
        $region130: #{tpu_custom_call.1} parent=83 // pred_check_branch
          %5862 = sbr.rel (%p5860) target = $region132
        $region131: #{tpu_custom_call.1} parent=83 // pred_region
          %s5864 = ssub.s32 256, 256
          %5865 = vsyncadd %s5840, %s5864
          %s5866 = smul.addr %s47, 2
          %s5867 = smul.addr %s5866, 128
          %s5868 = scalar_lea.hbm %s17, %s5867
          %s5869 = sshll.u32 %s5843, 4
          %s5870 = int_to_ptr.vmem [resolvable:$true] %s5869
          %5875 = dma.vmem_to_hbm [thread:$0]  %s5870, 256, %s5868, %s5840, 128, 128, 8
        $region132: #{tpu_custom_call.1} parent=83 // pred_fallthru
          _
      $region84: #{tpu_custom_call.1} parent=5 // pred_fallthru
        _
      %p5876 = scmp.le.s32.totalorder 2, %s42
      // Predicated region
      $region133: #{tpu_custom_call.1} parent=5 // pred_check
        %p5877 = pneg %p5876
      $region134: #{tpu_custom_call.1} parent=5 // pred_check_branch
        %5879 = sbr.rel (%p5877) target = $region136
      $region135: #{tpu_custom_call.1} parent=5 // pred_region
        %s5880 = ssub.s32 %s42, 2
        // Predicated region
        $region137: #{tpu_custom_call.1} parent=135 // pred_check
          %p5881 = pneg %p427
        $region138: #{tpu_custom_call.1} parent=135 // pred_check_branch
          %5883 = sbr.rel (%p5881) target = $region140
        $region139: #{tpu_custom_call.1} parent=135 // pred_region
          %s5884 = sand.u32 %s412, 1
          %s5885 = scalar_lea.sflag [#allocation4], %s5884
          %s5886 = sand.u32 %s412, 1
          %s5887 = smul.addr %s5886, 16
          %s5888 = scalar_lea.vmem [#allocation19], %s5887
          %5889 = dma.done %s5885, 256
        $region140: #{tpu_custom_call.1} parent=135 // pred_fallthru
          _
        // Predicated region
        $region141: #{tpu_custom_call.1} parent=135 // pred_check
          %p5890 = pneg %p453
        $region142: #{tpu_custom_call.1} parent=135 // pred_check_branch
          %5892 = sbr.rel (%p5890) target = $region144
        $region143: #{tpu_custom_call.1} parent=135 // pred_region
          %s5893 = sand.u32 %s438, 1
          %s5894 = scalar_lea.sflag [#allocation21], %s5893
          %s5895 = sand.u32 %s438, 1
          %s5896 = smul.addr %s5895, 16
          %s5897 = scalar_lea.vmem [#allocation20], %s5896
          %5898 = dma.done %s5894, 256
        $region144: #{tpu_custom_call.1} parent=135 // pred_fallthru
          _
      $region136: #{tpu_custom_call.1} parent=5 // pred_fallthru
        _
    $region6: #{tpu_custom_call.1} parent=1 // loop_footer
      %s46 = sadd.s32 1, %s42
    $region7: #{tpu_custom_call.1} parent=1 // loop_footer_branch
      %41 = sbr.rel target = $region3
    $region8: #{tpu_custom_call.1} parent=1 // loop_exit
      _
    %5899 = vsyncpa [#allocation3], 1
    %s5900 = scalar_lea.sflag [#allocation3], 1
    %5901 = vsyncpa %s5900, 1
    %5902 = vsyncpa [#allocation6], 1
    %s5903 = scalar_lea.sflag [#allocation6], 1
    %5904 = vsyncpa %s5903, 1
    %5905 = vsyncpa [#allocation9], 1
    %s5906 = scalar_lea.sflag [#allocation9], 1
    %5907 = vsyncpa %s5906, 1
    %5908 = vsyncpa [#allocation12], 1
    %5909 = vsyncpa [#allocation15], 1
    %5910 = vsyncpa [#allocation18], 1
    %5911 = vsyncpa [#allocation4], 1
    %s5912 = scalar_lea.sflag [#allocation4], 1
    %5913 = vsyncpa %s5912, 1
    %5914 = vsyncpa [#allocation21], 1
    %s5915 = scalar_lea.sflag [#allocation21], 1
    %5916 = vsyncpa %s5915, 1

</llo_original>
